<compile_context>
chip_gen: v6e
topology: v6e:2x2x1
jax: 0.10.0
libtpu: 0.0.40
codegen_flags: <defaults>
</compile_context>

<pallas_src>
import functools

import jax
import jax.numpy as jnp
from jax import lax
from jax.experimental import pallas as pl
from jax.experimental.pallas import tpu as pltpu


def _deconv_in_kernel(x_ref, w_ref, g_ref, b_ref, o_ref, col_ref, *,
                      K, Ho, Wo, eps):
    # x_ref  : (1, Cin, Hp, Wp)   zero-dilated + padded input (one image, NCHW)
    # w_ref  : (Cout, K*K*Cin)    fused, spatially-flipped ConvTranspose2d weight
    # g_ref  : (Cout, 1)          InstanceNorm gamma
    # b_ref  : (Cout, 1)          InstanceNorm beta
    # o_ref  : (1, Cout, Ho*Wo)   output, flattened spatial on the lane axis
    # col_ref: (K*K*Cin, Ho*Wo)   VMEM im2col scratch
    Cin = x_ref.shape[1]
    HW = Ho * Wo

    # Build the im2col buffer once (spatial flattened onto lanes).
    for kh in range(K):
        for kw in range(K):
            t = kh * K + kw
            col_ref[t * Cin:(t + 1) * Cin, :] = (
                x_ref[0, :, kh:kh + Ho, kw:kw + Wo].reshape(Cin, HW))

    # Single fused MXU matmul, f32 accumulate: (Cout, KKC) @ (KKC, HW).
    acc = jnp.dot(w_ref[...], col_ref[...], preferred_element_type=jnp.float32)

    # (conv bias intentionally omitted: a per-channel constant is cancelled
    #  exactly by the mean subtraction below; variance is unchanged.)

    # Fused single-pass InstanceNorm (biased variance, matching PyTorch).
    inv_hw = 1.0 / HW
    mu = jnp.sum(acc, axis=1, keepdims=True) * inv_hw           # (Cout, 1)
    ex2 = jnp.sum(acc * acc, axis=1, keepdims=True) * inv_hw    # (Cout, 1)
    var = ex2 - mu * mu
    a = g_ref[...] * lax.rsqrt(var + eps)                       # (Cout, 1)
    b = b_ref[...] - mu * a                                     # (Cout, 1)
    o_ref[0] = (acc * a + b).astype(o_ref.dtype)                # lane-dense store


def _src_range(n_src, lo, stride, n_dst):
    """Source indices i whose scattered position lo + stride*i lies in [0, n_dst)."""
    i0 = max(0, -(lo // stride))
    i1 = min(n_src, (n_dst - 1 - lo) // stride + 1)
    return i0, max(i0, i1)


def deconv_layer_pallas(x_nchw, w_pt, bias, gamma, beta, *,
                        stride, padding, out_padding, eps=1e-5):
    """Forward of DeconvLayer. x_nchw: (N, Cin, H, W); w_pt: (Cin, Cout, K, K)."""
    del bias  # exactly cancelled by the InstanceNorm mean subtraction
    N, Cin, H, W = x_nchw.shape
    Cout, K = w_pt.shape[1], w_pt.shape[2]
    s, p, op = stride, padding, out_padding

    Ho = (H - 1) * s - 2 * p + K + op
    Wo = (W - 1) * s - 2 * p + K + op
    Hp, Wp = Ho + K - 1, Wo + K - 1
    lo = K - 1 - p
    HW = Ho * Wo
    KKC = K * K * Cin

    # --- glue (plain JAX, NCHW kept): zero-dilate + pad/crop in one scatter --
    ih0, ih1 = _src_range(H, lo, s, Hp)
    iw0, iw1 = _src_range(W, lo, s, Wp)
    x_pad = jnp.zeros((N, Cin, Hp, Wp), jnp.float32)
    if ih1 > ih0 and iw1 > iw0:
        x_pad = x_pad.at[:, :,
                         lo + s * ih0: lo + s * (ih1 - 1) + 1: s,
                         lo + s * iw0: lo + s * (iw1 - 1) + 1: s].set(
            x_nchw[:, :, ih0:ih1, iw0:iw1].astype(jnp.float32))

    # ConvTranspose weight (Cin, Cout, K, K) -> flipped, fused (Cout, K*K*Cin)
    # with row order (kh*K + kw)*Cin + c to match the im2col buffer.
    w_flip = w_pt[:, :, ::-1, ::-1]
    w_cat = jnp.transpose(w_flip, (2, 3, 0, 1)).reshape(KKC, Cout).T
    w_cat = w_cat.astype(jnp.float32)

    g2 = gamma.reshape(Cout, 1).astype(jnp.float32)
    b2 = beta.reshape(Cout, 1).astype(jnp.float32)

    kernel = functools.partial(_deconv_in_kernel, K=K, Ho=Ho, Wo=Wo, eps=eps)

    cost = pl.CostEstimate(
        flops=2 * N * Cout * KKC * HW + 8 * N * Cout * HW,
        transcendentals=N * Cout,
        bytes_accessed=4 * (N * Cin * Hp * Wp + Cout * KKC + 2 * Cout
                            + N * Cout * HW))

    out_flat = pl.pallas_call(
        kernel,
        out_shape=jax.ShapeDtypeStruct((N, Cout, HW), jnp.float32),
        grid_spec=pltpu.PrefetchScalarGridSpec(
            num_scalar_prefetch=0,
            grid=(N,),
            in_specs=[
                pl.BlockSpec((1, Cin, Hp, Wp), lambda n: (n, 0, 0, 0)),
                pl.BlockSpec((Cout, KKC), lambda n: (0, 0)),
                pl.BlockSpec((Cout, 1), lambda n: (0, 0)),
                pl.BlockSpec((Cout, 1), lambda n: (0, 0)),
            ],
            out_specs=pl.BlockSpec((1, Cout, HW), lambda n: (n, 0, 0)),
            scratch_shapes=[pltpu.VMEM((KKC, HW), jnp.float32)],
        ),
        compiler_params=pltpu.CompilerParams(
            dimension_semantics=("parallel",)),
        cost_estimate=cost,
    )(x_pad, w_cat, g2, b2)

    # Free metadata reshape back to PyTorch's NCHW (no transpose, no HBM pass).
    return out_flat.reshape(N, Cout, Ho, Wo)


def _reference(x, w_pt, bias, gamma, beta, *, stride, padding, out_padding, eps=1e-5):
    Cout, K = w_pt.shape[1], w_pt.shape[2]
    s, p, op = stride, padding, out_padding
    w_oihw = jnp.transpose(w_pt[:, :, ::-1, ::-1], (1, 0, 2, 3))
    y = lax.conv_general_dilated(
        x, w_oihw, window_strides=(1, 1),
        padding=[(K - 1 - p, K - 1 - p + op)] * 2,
        lhs_dilation=(s, s),
        dimension_numbers=("NCHW", "OIHW", "NCHW"))
    y = y + bias.reshape(1, Cout, 1, 1)
    mu = y.mean(axis=(2, 3), keepdims=True)
    var = ((y - mu) ** 2).mean(axis=(2, 3), keepdims=True)
    return (y - mu) / jnp.sqrt(var + eps) * gamma.reshape(1, Cout, 1, 1) \
        + beta.reshape(1, Cout, 1, 1)


if __name__ == "__main__":
    # DeconvLayer(inC=4, outC=8, kernal_size=3, stride=2, out_padding=1, norm='instance')
    N, Cin, H, W = 2, 4, 16, 16
    Cout, K, stride, out_pad = 8, 3, 2, 1
    padding = K // 2

    key = jax.random.PRNGKey(0)
    kx, kw, kb, kg, kbt = jax.random.split(key, 5)
    x = jax.random.normal(kx, (N, Cin, H, W), jnp.float32)
    w_pt = jax.random.normal(kw, (Cin, Cout, K, K), jnp.float32) * 0.1
    bias = jax.random.normal(kb, (Cout,), jnp.float32) * 0.1
    gamma = 1.0 + 0.1 * jax.random.normal(kg, (Cout,), jnp.float32)
    beta = 0.1 * jax.random.normal(kbt, (Cout,), jnp.float32)

    out = deconv_layer_pallas(x, w_pt, bias, gamma, beta,
                              stride=stride, padding=padding, out_padding=out_pad)
    out = jax.block_until_ready(out)

    ref = _reference(x, w_pt, bias, gamma, beta,
                     stride=stride, padding=padding, out_padding=out_pad)
    assert out.shape == (N, Cout, 2 * H, 2 * W), out.shape
    assert jnp.allclose(out, ref, atol=1e-4, rtol=1e-4), \
        float(jnp.max(jnp.abs(out - ref)))
    print("KERNEL_OK")
</pallas_src>

<mosaic_0001>
module attributes {stable_mosaic.version = 11 : i64} {
  func.func @_deconv_in_kernel(%arg0: i32, %arg1: memref<1x4x34x34xf32, #tpu.memory_space<vmem>>, %arg2: memref<8x36xf32, #tpu.memory_space<vmem>>, %arg3: memref<8x1xf32, #tpu.memory_space<vmem>>, %arg4: memref<8x1xf32, #tpu.memory_space<vmem>>, %arg5: memref<1x8x1024xf32, #tpu.memory_space<vmem>>, %arg6: memref<36x1024xf32, #tpu.memory_space<vmem>>) attributes {dimension_semantics = [#tpu.dimension_semantics<parallel>], iteration_bounds = array<i64: 2>, scalar_prefetch = 0 : i64, scratch_operands = 1 : i64, tpu.core_type = #tpu.core_type<tc>, window_params = [{transform_indices = @transform_0, window_bounds = array<i64: 1, 4, 34, 34>}, {pipeline_mode = #tpu.pipeline_mode<synchronous>, transform_indices = @transform_1, window_bounds = array<i64: 8, 36>}, {pipeline_mode = #tpu.pipeline_mode<synchronous>, transform_indices = @transform_2, window_bounds = array<i64: 8, 1>}, {pipeline_mode = #tpu.pipeline_mode<synchronous>, transform_indices = @transform_3, window_bounds = array<i64: 8, 1>}, {transform_indices = @transform_4, window_bounds = array<i64: 1, 8, 1024>}]} {
    %c0 = arith.constant 0 : index
    %c0_0 = arith.constant 0 : index
    %c0_1 = arith.constant 0 : index
    %c0_2 = arith.constant 0 : index
    %0 = vector.load %arg1[%c0, %c0_0, %c0_1, %c0_2] : memref<1x4x34x34xf32, #tpu.memory_space<vmem>>, vector<1x4x32x32xf32>
    %1 = vector.shape_cast %0 : vector<1x4x32x32xf32> to vector<4x32x32xf32>
    %2 = vector.shape_cast %1 : vector<4x32x32xf32> to vector<4x1024xf32>
    %c0_3 = arith.constant 0 : index
    %c0_4 = arith.constant 0 : index
    %3 = vector.load %arg6[%c0_3, %c0_4] : memref<36x1024xf32, #tpu.memory_space<vmem>>, vector<4x1024xf32>
    tpu.vector_store %arg6[%c0_3, %c0_4], %2 {strides = array<i32>} : memref<36x1024xf32, #tpu.memory_space<vmem>>, vector<4x1024xf32>,
    %c0_5 = arith.constant 0 : index
    %c0_6 = arith.constant 0 : index
    %c0_7 = arith.constant 0 : index
    %c1 = arith.constant 1 : index
    %4 = vector.load %arg1[%c0_5, %c0_6, %c0_7, %c1] : memref<1x4x34x34xf32, #tpu.memory_space<vmem>>, vector<1x4x32x32xf32>
    %5 = vector.shape_cast %4 : vector<1x4x32x32xf32> to vector<4x32x32xf32>
    %6 = vector.shape_cast %5 : vector<4x32x32xf32> to vector<4x1024xf32>
    %c4 = arith.constant 4 : index
    %c0_8 = arith.constant 0 : index
    %7 = vector.load %arg6[%c4, %c0_8] : memref<36x1024xf32, #tpu.memory_space<vmem>>, vector<4x1024xf32>
    tpu.vector_store %arg6[%c4, %c0_8], %6 {strides = array<i32>} : memref<36x1024xf32, #tpu.memory_space<vmem>>, vector<4x1024xf32>,
    %c0_9 = arith.constant 0 : index
    %c0_10 = arith.constant 0 : index
    %c0_11 = arith.constant 0 : index
    %c2 = arith.constant 2 : index
    %8 = vector.load %arg1[%c0_9, %c0_10, %c0_11, %c2] : memref<1x4x34x34xf32, #tpu.memory_space<vmem>>, vector<1x4x32x32xf32>
    %9 = vector.shape_cast %8 : vector<1x4x32x32xf32> to vector<4x32x32xf32>
    %10 = vector.shape_cast %9 : vector<4x32x32xf32> to vector<4x1024xf32>
    %c8 = arith.constant 8 : index
    %c0_12 = arith.constant 0 : index
    %11 = vector.load %arg6[%c8, %c0_12] : memref<36x1024xf32, #tpu.memory_space<vmem>>, vector<4x1024xf32>
    tpu.vector_store %arg6[%c8, %c0_12], %10 {strides = array<i32>} : memref<36x1024xf32, #tpu.memory_space<vmem>>, vector<4x1024xf32>,
    %c0_13 = arith.constant 0 : index
    %c0_14 = arith.constant 0 : index
    %c1_15 = arith.constant 1 : index
    %c0_16 = arith.constant 0 : index
    %12 = vector.load %arg1[%c0_13, %c0_14, %c1_15, %c0_16] : memref<1x4x34x34xf32, #tpu.memory_space<vmem>>, vector<1x4x32x32xf32>
    %13 = vector.shape_cast %12 : vector<1x4x32x32xf32> to vector<4x32x32xf32>
    %14 = vector.shape_cast %13 : vector<4x32x32xf32> to vector<4x1024xf32>
    %c12 = arith.constant 12 : index
    %c0_17 = arith.constant 0 : index
    %15 = vector.load %arg6[%c12, %c0_17] : memref<36x1024xf32, #tpu.memory_space<vmem>>, vector<4x1024xf32>
    tpu.vector_store %arg6[%c12, %c0_17], %14 {strides = array<i32>} : memref<36x1024xf32, #tpu.memory_space<vmem>>, vector<4x1024xf32>,
    %c0_18 = arith.constant 0 : index
    %c0_19 = arith.constant 0 : index
    %c1_20 = arith.constant 1 : index
    %c1_21 = arith.constant 1 : index
    %16 = vector.load %arg1[%c0_18, %c0_19, %c1_20, %c1_21] : memref<1x4x34x34xf32, #tpu.memory_space<vmem>>, vector<1x4x32x32xf32>
    %17 = vector.shape_cast %16 : vector<1x4x32x32xf32> to vector<4x32x32xf32>
    %18 = vector.shape_cast %17 : vector<4x32x32xf32> to vector<4x1024xf32>
    %c16 = arith.constant 16 : index
    %c0_22 = arith.constant 0 : index
    %19 = vector.load %arg6[%c16, %c0_22] : memref<36x1024xf32, #tpu.memory_space<vmem>>, vector<4x1024xf32>
    tpu.vector_store %arg6[%c16, %c0_22], %18 {strides = array<i32>} : memref<36x1024xf32, #tpu.memory_space<vmem>>, vector<4x1024xf32>,
    %c0_23 = arith.constant 0 : index
    %c0_24 = arith.constant 0 : index
    %c1_25 = arith.constant 1 : index
    %c2_26 = arith.constant 2 : index
    %20 = vector.load %arg1[%c0_23, %c0_24, %c1_25, %c2_26] : memref<1x4x34x34xf32, #tpu.memory_space<vmem>>, vector<1x4x32x32xf32>
    %21 = vector.shape_cast %20 : vector<1x4x32x32xf32> to vector<4x32x32xf32>
    %22 = vector.shape_cast %21 : vector<4x32x32xf32> to vector<4x1024xf32>
    %c20 = arith.constant 20 : index
    %c0_27 = arith.constant 0 : index
    %23 = vector.load %arg6[%c20, %c0_27] : memref<36x1024xf32, #tpu.memory_space<vmem>>, vector<4x1024xf32>
    tpu.vector_store %arg6[%c20, %c0_27], %22 {strides = array<i32>} : memref<36x1024xf32, #tpu.memory_space<vmem>>, vector<4x1024xf32>,
    %c0_28 = arith.constant 0 : index
    %c0_29 = arith.constant 0 : index
    %c2_30 = arith.constant 2 : index
    %c0_31 = arith.constant 0 : index
    %24 = vector.load %arg1[%c0_28, %c0_29, %c2_30, %c0_31] : memref<1x4x34x34xf32, #tpu.memory_space<vmem>>, vector<1x4x32x32xf32>
    %25 = vector.shape_cast %24 : vector<1x4x32x32xf32> to vector<4x32x32xf32>
    %26 = vector.shape_cast %25 : vector<4x32x32xf32> to vector<4x1024xf32>
    %c24 = arith.constant 24 : index
    %c0_32 = arith.constant 0 : index
    %27 = vector.load %arg6[%c24, %c0_32] : memref<36x1024xf32, #tpu.memory_space<vmem>>, vector<4x1024xf32>
    tpu.vector_store %arg6[%c24, %c0_32], %26 {strides = array<i32>} : memref<36x1024xf32, #tpu.memory_space<vmem>>, vector<4x1024xf32>,
    %c0_33 = arith.constant 0 : index
    %c0_34 = arith.constant 0 : index
    %c2_35 = arith.constant 2 : index
    %c1_36 = arith.constant 1 : index
    %28 = vector.load %arg1[%c0_33, %c0_34, %c2_35, %c1_36] : memref<1x4x34x34xf32, #tpu.memory_space<vmem>>, vector<1x4x32x32xf32>
    %29 = vector.shape_cast %28 : vector<1x4x32x32xf32> to vector<4x32x32xf32>
    %30 = vector.shape_cast %29 : vector<4x32x32xf32> to vector<4x1024xf32>
    %c28 = arith.constant 28 : index
    %c0_37 = arith.constant 0 : index
    %31 = vector.load %arg6[%c28, %c0_37] : memref<36x1024xf32, #tpu.memory_space<vmem>>, vector<4x1024xf32>
    tpu.vector_store %arg6[%c28, %c0_37], %30 {strides = array<i32>} : memref<36x1024xf32, #tpu.memory_space<vmem>>, vector<4x1024xf32>,
    %c0_38 = arith.constant 0 : index
    %c0_39 = arith.constant 0 : index
    %c2_40 = arith.constant 2 : index
    %c2_41 = arith.constant 2 : index
    %32 = vector.load %arg1[%c0_38, %c0_39, %c2_40, %c2_41] : memref<1x4x34x34xf32, #tpu.memory_space<vmem>>, vector<1x4x32x32xf32>
    %33 = vector.shape_cast %32 : vector<1x4x32x32xf32> to vector<4x32x32xf32>
    %34 = vector.shape_cast %33 : vector<4x32x32xf32> to vector<4x1024xf32>
    %c32 = arith.constant 32 : index
    %c0_42 = arith.constant 0 : index
    %35 = vector.load %arg6[%c32, %c0_42] : memref<36x1024xf32, #tpu.memory_space<vmem>>, vector<4x1024xf32>
    tpu.vector_store %arg6[%c32, %c0_42], %34 {strides = array<i32>} : memref<36x1024xf32, #tpu.memory_space<vmem>>, vector<4x1024xf32>,
    %c0_43 = arith.constant 0 : index
    %c0_44 = arith.constant 0 : index
    %36 = vector.load %arg2[%c0_43, %c0_44] : memref<8x36xf32, #tpu.memory_space<vmem>>, vector<8x36xf32>
    %c0_45 = arith.constant 0 : index
    %c0_46 = arith.constant 0 : index
    %37 = vector.load %arg6[%c0_45, %c0_46] : memref<36x1024xf32, #tpu.memory_space<vmem>>, vector<36x1024xf32>
    %cst = arith.constant dense<0.000000e+00> : vector<8x1024xf32>
    %38 = tpu.matmul %36, %37, %cst {dimension_numbers = #tpu.dot_dimension_numbers<[1], [0], [0], [1], [0, 0, 1, 1], [], []>} : vector<8x36xf32>, vector<36x1024xf32>, vector<8x1024xf32> -> vector<8x1024xf32>
    %cst_47 = arith.constant dense<0.000000e+00> : vector<8xf32>
    %39 = vector.multi_reduction <add>, %38, %cst_47 [1] : vector<8x1024xf32> to vector<8xf32>
    %40 = vector.shape_cast %39 : vector<8xf32> to vector<8x1xf32>
    %cst_48 = arith.constant 9.765625E-4 : f32
    %41 = vector.broadcast %cst_48 : f32 to vector<8x1xf32>
    %42 = arith.mulf %40, %41 : vector<8x1xf32>
    %43 = arith.mulf %38, %38 : vector<8x1024xf32>
    %cst_49 = arith.constant dense<0.000000e+00> : vector<8xf32>
    %44 = vector.multi_reduction <add>, %43, %cst_49 [1] : vector<8x1024xf32> to vector<8xf32>
    %45 = vector.shape_cast %44 : vector<8xf32> to vector<8x1xf32>
    %cst_50 = arith.constant 9.765625E-4 : f32
    %46 = vector.broadcast %cst_50 : f32 to vector<8x1xf32>
    %47 = arith.mulf %45, %46 : vector<8x1xf32>
    %48 = arith.mulf %42, %42 : vector<8x1xf32>
    %49 = arith.subf %47, %48 : vector<8x1xf32>
    %c0_51 = arith.constant 0 : index
    %c0_52 = arith.constant 0 : index
    %50 = vector.load %arg3[%c0_51, %c0_52] : memref<8x1xf32, #tpu.memory_space<vmem>>, vector<8x1xf32>
    %cst_53 = arith.constant 9.99999974E-6 : f32
    %51 = vector.broadcast %cst_53 : f32 to vector<8x1xf32>
    %52 = arith.addf %49, %51 : vector<8x1xf32>
    %53 = math.rsqrt %52 : vector<8x1xf32>
    %54 = arith.mulf %50, %53 : vector<8x1xf32>
    %c0_54 = arith.constant 0 : index
    %c0_55 = arith.constant 0 : index
    %55 = vector.load %arg4[%c0_54, %c0_55] : memref<8x1xf32, #tpu.memory_space<vmem>>, vector<8x1xf32>
    %56 = arith.mulf %42, %54 : vector<8x1xf32>
    %57 = arith.subf %55, %56 : vector<8x1xf32>
    %58 = vector.broadcast %54 : vector<8x1xf32> to vector<8x1024xf32>
    %59 = arith.mulf %38, %58 : vector<8x1024xf32>
    %60 = vector.broadcast %57 : vector<8x1xf32> to vector<8x1024xf32>
    %61 = arith.addf %59, %60 : vector<8x1024xf32>
    %c0_56 = arith.constant 0 : index
    %c0_57 = arith.constant 0 : index
    %c0_58 = arith.constant 0 : index
    %62 = vector.load %arg5[%c0_56, %c0_57, %c0_58] : memref<1x8x1024xf32, #tpu.memory_space<vmem>>, vector<1x8x1024xf32>
    %63 = vector.shape_cast %62 : vector<1x8x1024xf32> to vector<8x1024xf32>
    %64 = vector.shape_cast %61 : vector<8x1024xf32> to vector<1x8x1024xf32>
    tpu.vector_store %arg5[%c0_56, %c0_57, %c0_58], %64 {strides = array<i32>} : memref<1x8x1024xf32, #tpu.memory_space<vmem>>, vector<1x8x1024xf32>,
    return
  }
  func.func @transform_0(%arg0: i32) -> (i32, i32, i32, i32) {
    %c0_i32 = arith.constant 0 : i32
    %c0_i32_0 = arith.constant 0 : i32
    %c0_i32_1 = arith.constant 0 : i32
    %c0_i32_2 = arith.constant 0 : i32
    return %arg0, %c0_i32, %c0_i32_0, %c0_i32_1 : i32, i32, i32, i32
  }
  func.func @transform_1(%arg0: i32) -> (i32, i32) {
    %c0_i32 = arith.constant 0 : i32
    %c0_i32_0 = arith.constant 0 : i32
    %c0_i32_1 = arith.constant 0 : i32
    return %c0_i32, %c0_i32_0 : i32, i32
  }
  func.func @transform_2(%arg0: i32) -> (i32, i32) {
    %c0_i32 = arith.constant 0 : i32
    %c0_i32_0 = arith.constant 0 : i32
    %c0_i32_1 = arith.constant 0 : i32
    return %c0_i32, %c0_i32_0 : i32, i32
  }
  func.func @transform_3(%arg0: i32) -> (i32, i32) {
    %c0_i32 = arith.constant 0 : i32
    %c0_i32_0 = arith.constant 0 : i32
    %c0_i32_1 = arith.constant 0 : i32
    return %c0_i32, %c0_i32_0 : i32, i32
  }
  func.func @transform_4(%arg0: i32) -> (i32, i32, i32) {
    %c0_i32 = arith.constant 0 : i32
    %c0_i32_0 = arith.constant 0 : i32
    %c0_i32_1 = arith.constant 0 : i32
    return %arg0, %c0_i32, %c0_i32_0 : i32, i32, i32
  }
}

</mosaic_0001>

<llo_original>
// kernel: tpu_custom_call.1
$region0: #{tpu_custom_call.1}
  #allocation0 [shape = 'u32[]', space=smem, size = 0x4, offset = 0x4, fixed_abs, tag = 'smem constant byte address 0x4 - core index']
  #allocation1 [shape = 'u32[144,128]{1,0:T(1,128)}', space=vmem, size = 0x12000, scoped, tag = 'internal scratch']
  #allocation2 [shape = 'f32[36,1024]{1,0:T(8,128)}', space=vmem, size = 0x28000, scoped, tag = 'scratch operand']
  %s0 = inlined_call_operand.vmem [shape: f32[2,4,34,34], index: 0, kind: input, shape index: {}]
  %s1 = inlined_call_operand.vmem [shape: f32[8,36], index: 1, kind: input, shape index: {}]
  %s2 = inlined_call_operand.vmem [shape: f32[8,1], index: 2, kind: input, shape index: {}]
  %s3 = inlined_call_operand.vmem [shape: f32[8,1], index: 3, kind: input, shape index: {}]
  %s4 = inlined_call_operand.hbm [shape: f32[2,8,1024], index: 4, kind: output, shape index: {}]
  %s5 = sld [smem:[#allocation0]]
  $region49: #{tpu_custom_call.1} parent=0
    _
  %s7 = ssub.s32 1, %s5
  %s8 = scalar_select 0, %s7, %s5
  $region1: #{tpu_custom_call.1} parent=0
    #allocation3 [shape = 'u8[65536]{0}', space=vmem, size = 0x10000, scoped, tag = 'output window, operand 0']
    #allocation4 [shape = 's32[2]{0}', space=sflag, size = 0x8, scoped, tag = 'scoped memory for tpu_custom_call.1']
    %9 = vsyncpa [#allocation4], 0
    %s10 = scalar_lea.sflag [#allocation4], 1
    %11 = vsyncpa %s10, 0
    loop: start=0, step=1, limit=4
    $region2: #{tpu_custom_call.1} parent=1 // loop_pre_header
      _
    $region3: #{tpu_custom_call.1} parent=1 // loop_header
      %s13 = sphi 0, %s17
      %p14 = scmp.ge.s32.totalorder %s13, 4
      %s23 = sphi 0, %s25
      %s26 = sphi 0, %s23
      %s27 = sphi 0, %s26
      %s43 = sphi 0, %s27
      %s47 = sphi 0, %s47
      %s49 = sphi 0, %s47
      %s50 = sphi 0, %s49
      %s64 = sphi 0, %s50
      %s68 = sphi 0, %s68
      %s70 = sphi 0, %s68
      %s71 = sphi 0, %s70
      %s85 = sphi 0, %s71
      %s89 = sphi 0, %s89
      %s91 = sphi 0, %s89
      %s92 = sphi 0, %s91
      %s106 = sphi 0, %s92
      %s112 = sphi 0, %s114
      %s115 = sphi 0, %s112
      %s116 = sphi 0, %s115
      %s132 = sphi 0, %s116
    $region4: #{tpu_custom_call.1} parent=1 // loop_header_branch
      %16 = sbr.rel (%p14) target = $region8
    $region5: #{tpu_custom_call.1} parent=1 // loop_body
      %s18 = ssub.s32 %s13, 1
      %s19 = ssub.s32 %s13, 2
      %s20 = sadd.s32 %s13, 1
      %s21 = ssub.s32 %s13, %s20
      %p22 = scmp.eq.s32.totalorder %s21, 0
      %s24 = sadd.s32 %s23, 1
      %s25 = scalar_select %p22, %s23, %s24
      %p28 = pneg %p22
      %p29 = scmp.eq.s32.totalorder %s13, 1
      %p30 = por %p28, %p29
      %p31 = scmp.ne.s32.totalorder %s23, %s26
      %p32 = scmp.eq.s32.totalorder %s13, 0
      %p33 = por %p31, %p32
      %p34 = scmp.ne.s32.totalorder %s23, %s26
      %p35 = scmp.eq.s32.totalorder %s18, 1
      %p36 = por %p34, %p35
      %p37 = scmp.ne.s32.totalorder %s26, %s27
      %p38 = scmp.eq.s32.totalorder %s18, 0
      %p39 = por %p37, %p38
      %p40 = scmp.ne.s32.totalorder %s26, %s27
      %p41 = scmp.eq.s32.totalorder %s19, 1
      %p42 = por %p40, %p41
      %p44 = scmp.ne.s32.totalorder %s27, %s43
      %p45 = scmp.eq.s32.totalorder %s19, 0
      %p46 = por %p44, %p45
      %s48 = sadd.s32 %s47, 1
      %p51 = scmp.eq.s32.totalorder %s13, 1
      %p52 = scmp.ne.s32.totalorder %s47, %s49
      %p53 = scmp.eq.s32.totalorder %s13, 0
      %p54 = por %p52, %p53
      %p55 = scmp.ne.s32.totalorder %s47, %s49
      %p56 = scmp.eq.s32.totalorder %s18, 1
      %p57 = por %p55, %p56
      %p58 = scmp.ne.s32.totalorder %s49, %s50
      %p59 = scmp.eq.s32.totalorder %s18, 0
      %p60 = por %p58, %p59
      %p61 = scmp.ne.s32.totalorder %s49, %s50
      %p62 = scmp.eq.s32.totalorder %s19, 1
      %p63 = por %p61, %p62
      %p65 = scmp.ne.s32.totalorder %s50, %s64
      %p66 = scmp.eq.s32.totalorder %s19, 0
      %p67 = por %p65, %p66
      %s69 = sadd.s32 %s68, 1
      %p72 = scmp.eq.s32.totalorder %s13, 1
      %p73 = scmp.ne.s32.totalorder %s68, %s70
      %p74 = scmp.eq.s32.totalorder %s13, 0
      %p75 = por %p73, %p74
      %p76 = scmp.ne.s32.totalorder %s68, %s70
      %p77 = scmp.eq.s32.totalorder %s18, 1
      %p78 = por %p76, %p77
      %p79 = scmp.ne.s32.totalorder %s70, %s71
      %p80 = scmp.eq.s32.totalorder %s18, 0
      %p81 = por %p79, %p80
      %p82 = scmp.ne.s32.totalorder %s70, %s71
      %p83 = scmp.eq.s32.totalorder %s19, 1
      %p84 = por %p82, %p83
      %p86 = scmp.ne.s32.totalorder %s71, %s85
      %p87 = scmp.eq.s32.totalorder %s19, 0
      %p88 = por %p86, %p87
      %s90 = sadd.s32 %s89, 1
      %p93 = scmp.eq.s32.totalorder %s13, 1
      %p94 = scmp.ne.s32.totalorder %s89, %s91
      %p95 = scmp.eq.s32.totalorder %s13, 0
      %p96 = por %p94, %p95
      %p97 = scmp.ne.s32.totalorder %s89, %s91
      %p98 = scmp.eq.s32.totalorder %s18, 1
      %p99 = por %p97, %p98
      %p100 = scmp.ne.s32.totalorder %s91, %s92
      %p101 = scmp.eq.s32.totalorder %s18, 0
      %p102 = por %p100, %p101
      %p103 = scmp.ne.s32.totalorder %s91, %s92
      %p104 = scmp.eq.s32.totalorder %s19, 1
      %p105 = por %p103, %p104
      %p107 = scmp.ne.s32.totalorder %s92, %s106
      %p108 = scmp.eq.s32.totalorder %s19, 0
      %p109 = por %p107, %p108
      %s110 = ssub.s32 %s13, %s20
      %p111 = scmp.eq.s32.totalorder %s110, 0
      %s113 = sadd.s32 %s112, 1
      %s114 = scalar_select %p111, %s112, %s113
      %p117 = pneg %p111
      %p118 = scmp.eq.s32.totalorder %s13, 1
      %p119 = por %p117, %p118
      %p120 = scmp.ne.s32.totalorder %s112, %s115
      %p121 = scmp.eq.s32.totalorder %s13, 0
      %p122 = por %p120, %p121
      %p123 = scmp.ne.s32.totalorder %s112, %s115
      %p124 = scmp.eq.s32.totalorder %s18, 1
      %p125 = por %p123, %p124
      %p126 = scmp.ne.s32.totalorder %s115, %s116
      %p127 = scmp.eq.s32.totalorder %s18, 0
      %p128 = por %p126, %p127
      %p129 = scmp.ne.s32.totalorder %s115, %s116
      %p130 = scmp.eq.s32.totalorder %s19, 1
      %p131 = por %p129, %p130
      %p133 = scmp.ne.s32.totalorder %s116, %s132
      %p134 = scmp.eq.s32.totalorder %s19, 0
      %p135 = por %p133, %p134
      %p136 = scmp.le.s32.totalorder 1, %s13
      %p137 = scmp.lt.s32.totalorder %s13, 3
      %p138 = pnand %p136, %p137
      %p139 = pneg %p138
      // Predicated region
      $region9: #{tpu_custom_call.1} parent=5 // pred_check
        _
      $region10: #{tpu_custom_call.1} parent=5 // pred_check_branch
        %141 = sbr.rel (%p138) target = $region12
      $region11: #{tpu_custom_call.1} parent=5 // pred_region
        %s142 = ssub.s32 %s13, 1
        // Predicated region
        $region13: #{tpu_custom_call.1} parent=11 // pred_check
          %p143 = pneg %p60
        $region14: #{tpu_custom_call.1} parent=11 // pred_check_branch
          %145 = sbr.rel (%p143) target = $region16
        $region15: #{tpu_custom_call.1} parent=11 // pred_region
          _
        $region16: #{tpu_custom_call.1} parent=11 // pred_fallthru
          _
        // Predicated region
        $region17: #{tpu_custom_call.1} parent=11 // pred_check
          %p146 = pneg %p81
        $region18: #{tpu_custom_call.1} parent=11 // pred_check_branch
          %148 = sbr.rel (%p146) target = $region20
        $region19: #{tpu_custom_call.1} parent=11 // pred_region
          _
        $region20: #{tpu_custom_call.1} parent=11 // pred_fallthru
          _
        // Predicated region
        $region21: #{tpu_custom_call.1} parent=11 // pred_check
          %p149 = pneg %p102
        $region22: #{tpu_custom_call.1} parent=11 // pred_check_branch
          %151 = sbr.rel (%p149) target = $region24
        $region23: #{tpu_custom_call.1} parent=11 // pred_region
          _
        $region24: #{tpu_custom_call.1} parent=11 // pred_fallthru
          _
      $region12: #{tpu_custom_call.1} parent=5 // pred_fallthru
        _
      %p152 = scmp.lt.s32.totalorder %s13, 2
      // Predicated region
      $region25: #{tpu_custom_call.1} parent=5 // pred_check
        %p153 = pneg %p152
      $region26: #{tpu_custom_call.1} parent=5 // pred_check_branch
        %155 = sbr.rel (%p153) target = $region28
      $region27: #{tpu_custom_call.1} parent=5 // pred_region
        // Predicated region
        $region29: #{tpu_custom_call.1} parent=27 // pred_check
          %p156 = pneg %p33
        $region30: #{tpu_custom_call.1} parent=27 // pred_check_branch
          %158 = sbr.rel (%p156) target = $region32
        $region31: #{tpu_custom_call.1} parent=27 // pred_region
          %p159 = scmp.lt.s32.totalorder %s13, 1
          %s160 = scalar_select %p159, %s13, 1
          %s161 = smul.addr %s160, 20
          %s162 = smul.addr %s161, 8
          %s163 = scalar_lea.vmem %s0, %s162
        $region32: #{tpu_custom_call.1} parent=27 // pred_fallthru
          _
      $region28: #{tpu_custom_call.1} parent=5 // pred_fallthru
        _
      %p164 = scmp.le.s32.totalorder 1, %s13
      %p165 = scmp.lt.s32.totalorder %s13, 3
      %p166 = pnand %p164, %p165
      %p167 = pneg %p166
      // Predicated region
      $region33: #{tpu_custom_call.1} parent=5 // pred_check
        _
      $region34: #{tpu_custom_call.1} parent=5 // pred_check_branch
        %169 = sbr.rel (%p166) target = $region36
      $region35: #{tpu_custom_call.1} parent=5 // pred_region
        %s170 = ssub.s32 %s13, 1
        %p171 = scmp.lt.s32.totalorder %s18, 1
        %s172 = scalar_select %p171, %s18, 1
        %s173 = smul.addr %s172, 20
        %s174 = smul.addr %s173, 8
        %s175 = scalar_lea.vmem %s0, %s174
        %p176 = pneg %p39
        %p177 = pneg %p36
        %p178 = pneg %p60
        %p179 = pneg %p57
        %p180 = pneg %p81
        %p181 = pneg %p78
        %p182 = pneg %p102
        %p183 = pneg %p99
        %p184 = pneg %p128
        %p185 = pneg %p125
        %s186 = sand.u32 %s115, 1
        %s187 = scalar_lea.sflag [#allocation4], %s186
        %s188 = sand.u32 %s115, 1
        %s189 = smul.addr %s188, 64
        %s190 = scalar_lea.vmem [#allocation3], %s189
        %p191 = scmp.lt.s32.totalorder %s18, 1
        %s192 = scalar_select %p191, %s18, 1
        %s193 = smul.addr %s192, 20
        %s194 = smul.addr %s193, 8
        %s195 = scalar_lea.vmem %s0, %s194
        %v196 = vld [vmem:[%s195] sm:$0xff]
        %v197 = vld [vmem:[%s195 + $0x8] sm:$0xff]
        %v198 = vld [vmem:[%s195 + $0x10] sm:$0xff]
        %v199 = vld [vmem:[%s195 + $0x18] sm:$0xff]
        %v200 = vld [vmem:[%s195 + $0x28] sm:$0xff]
        %v201 = vld [vmem:[%s195 + $0x30] sm:$0xff]
        %v202 = vld [vmem:[%s195 + $0x38] sm:$0xff]
        %v203 = vld [vmem:[%s195 + $0x40] sm:$0xff]
        %v204 = vld [vmem:[%s195 + $0x50] sm:$0xff]
        %v205 = vld [vmem:[%s195 + $0x58] sm:$0xff]
        %v206 = vld [vmem:[%s195 + $0x60] sm:$0xff]
        %v207 = vld [vmem:[%s195 + $0x68] sm:$0xff]
        %v208 = vld [vmem:[%s195 + $0x78] sm:$0xff]
        %v209 = vld [vmem:[%s195 + $0x80] sm:$0xff]
        %v210 = vld [vmem:[%s195 + $0x88] sm:$0xff]
        %v211 = vld [vmem:[%s195 + $0x90] sm:$0xff]
        %v212 = vcombine.low %v196, %v204
        %v213 = vcombine.high %v196, %v204
        %v215 = vunpack.c.l.s4 1983009808
        %v216 = vunpack.c.0.s8 %v215
        %v217 = vlaneseq
        %v218 = vshrl.u32 %v217, 7
        %v219 = vsub.s32 %v216, %v218
        %v220 = vrot.slane %v212, %v219
        %v222 = vunpack.c.l.s4 1983009808
        %v223 = vunpack.c.0.s8 %v222
        %v224 = vlaneseq
        %v225 = vshrl.u32 %v224, 7
        %v226 = vsub.s32 %v223, %v225
        %v227 = vrot.slane %v213, %v226
        %v228 = vcombine.low %v200, %v208
        %v229 = vcombine.high %v200, %v208
        %v231 = vunpack.c.l.s4 1983009808
        %v232 = vunpack.c.0.s8 %v231
        %v233 = vlaneseq
        %v234 = vshrl.u32 %v233, 7
        %v235 = vsub.s32 %v232, %v234
        %v236 = vrot.slane %v228, %v235
        %v238 = vunpack.c.l.s4 1983009808
        %v239 = vunpack.c.0.s8 %v238
        %v240 = vlaneseq
        %v241 = vshrl.u32 %v240, 7
        %v242 = vsub.s32 %v239, %v241
        %v243 = vrot.slane %v229, %v242
        %v244 = vcombine.low %v220, %v236
        %v245 = vcombine.high %v220, %v236
        %v247 = vunpack.c.l.s4 1934713408
        %v248 = vunpack.c.0.s8 %v247
        %v249 = vlaneseq
        %v250 = vshrl.u32 %v249, 7
        %v251 = vsub.s32 %v248, %v250
        %v252 = vrot.slane %v244, %v251
        %v254 = vunpack.c.l.s4 1934713408
        %v255 = vunpack.c.0.s8 %v254
        %v256 = vlaneseq
        %v257 = vshrl.u32 %v256, 7
        %v258 = vsub.s32 %v255, %v257
        %v259 = vrot.slane %v245, %v258
        %v260 = vcombine.low %v227, %v243
        %v261 = vcombine.high %v227, %v243
        %v263 = vunpack.c.l.s4 1934713408
        %v264 = vunpack.c.0.s8 %v263
        %v265 = vlaneseq
        %v266 = vshrl.u32 %v265, 7
        %v267 = vsub.s32 %v264, %v266
        %v268 = vrot.slane %v260, %v267
        %v270 = vunpack.c.l.s4 1934713408
        %v271 = vunpack.c.0.s8 %v270
        %v272 = vlaneseq
        %v273 = vshrl.u32 %v272, 7
        %v274 = vsub.s32 %v271, %v273
        %v275 = vrot.slane %v261, %v274
        %v276 = vcombine.high %v252, 0.0
        %v277 = vcombine.high %v259, 0.0
        %v278 = vcombine.high %v268, 0.0
        %v279 = vcombine.high %v275, 0.0
        %v280 = vcombine.low %v197, %v205
        %v281 = vcombine.high %v197, %v205
        %v283 = vunpack.c.l.s4 1983009808
        %v284 = vunpack.c.0.s8 %v283
        %v285 = vlaneseq
        %v286 = vshrl.u32 %v285, 7
        %v287 = vsub.s32 %v284, %v286
        %v288 = vrot.slane %v280, %v287
        %v290 = vunpack.c.l.s4 1983009808
        %v291 = vunpack.c.0.s8 %v290
        %v292 = vlaneseq
        %v293 = vshrl.u32 %v292, 7
        %v294 = vsub.s32 %v291, %v293
        %v295 = vrot.slane %v281, %v294
        %v296 = vcombine.low %v201, %v209
        %v297 = vcombine.high %v201, %v209
        %v299 = vunpack.c.l.s4 1983009808
        %v300 = vunpack.c.0.s8 %v299
        %v301 = vlaneseq
        %v302 = vshrl.u32 %v301, 7
        %v303 = vsub.s32 %v300, %v302
        %v304 = vrot.slane %v296, %v303
        %v306 = vunpack.c.l.s4 1983009808
        %v307 = vunpack.c.0.s8 %v306
        %v308 = vlaneseq
        %v309 = vshrl.u32 %v308, 7
        %v310 = vsub.s32 %v307, %v309
        %v311 = vrot.slane %v297, %v310
        %v312 = vcombine.low %v288, %v304
        %v313 = vcombine.high %v288, %v304
        %v315 = vunpack.c.l.s4 1934713408
        %v316 = vunpack.c.0.s8 %v315
        %v317 = vlaneseq
        %v318 = vshrl.u32 %v317, 7
        %v319 = vsub.s32 %v316, %v318
        %v320 = vrot.slane %v312, %v319
        %v322 = vunpack.c.l.s4 1934713408
        %v323 = vunpack.c.0.s8 %v322
        %v324 = vlaneseq
        %v325 = vshrl.u32 %v324, 7
        %v326 = vsub.s32 %v323, %v325
        %v327 = vrot.slane %v313, %v326
        %v328 = vcombine.low %v295, %v311
        %v329 = vcombine.high %v295, %v311
        %v331 = vunpack.c.l.s4 1934713408
        %v332 = vunpack.c.0.s8 %v331
        %v333 = vlaneseq
        %v334 = vshrl.u32 %v333, 7
        %v335 = vsub.s32 %v332, %v334
        %v336 = vrot.slane %v328, %v335
        %v338 = vunpack.c.l.s4 1934713408
        %v339 = vunpack.c.0.s8 %v338
        %v340 = vlaneseq
        %v341 = vshrl.u32 %v340, 7
        %v342 = vsub.s32 %v339, %v341
        %v343 = vrot.slane %v329, %v342
        %v344 = vcombine.high %v320, 0.0
        %v345 = vcombine.high %v327, 0.0
        %v346 = vcombine.high %v336, 0.0
        %v347 = vcombine.high %v343, 0.0
        %v348 = vcombine.low %v198, %v206
        %v349 = vcombine.high %v198, %v206
        %v351 = vunpack.c.l.s4 1983009808
        %v352 = vunpack.c.0.s8 %v351
        %v353 = vlaneseq
        %v354 = vshrl.u32 %v353, 7
        %v355 = vsub.s32 %v352, %v354
        %v356 = vrot.slane %v348, %v355
        %v358 = vunpack.c.l.s4 1983009808
        %v359 = vunpack.c.0.s8 %v358
        %v360 = vlaneseq
        %v361 = vshrl.u32 %v360, 7
        %v362 = vsub.s32 %v359, %v361
        %v363 = vrot.slane %v349, %v362
        %v364 = vcombine.low %v202, %v210
        %v365 = vcombine.high %v202, %v210
        %v367 = vunpack.c.l.s4 1983009808
        %v368 = vunpack.c.0.s8 %v367
        %v369 = vlaneseq
        %v370 = vshrl.u32 %v369, 7
        %v371 = vsub.s32 %v368, %v370
        %v372 = vrot.slane %v364, %v371
        %v374 = vunpack.c.l.s4 1983009808
        %v375 = vunpack.c.0.s8 %v374
        %v376 = vlaneseq
        %v377 = vshrl.u32 %v376, 7
        %v378 = vsub.s32 %v375, %v377
        %v379 = vrot.slane %v365, %v378
        %v380 = vcombine.low %v356, %v372
        %v381 = vcombine.high %v356, %v372
        %v383 = vunpack.c.l.s4 1934713408
        %v384 = vunpack.c.0.s8 %v383
        %v385 = vlaneseq
        %v386 = vshrl.u32 %v385, 7
        %v387 = vsub.s32 %v384, %v386
        %v388 = vrot.slane %v380, %v387
        %v390 = vunpack.c.l.s4 1934713408
        %v391 = vunpack.c.0.s8 %v390
        %v392 = vlaneseq
        %v393 = vshrl.u32 %v392, 7
        %v394 = vsub.s32 %v391, %v393
        %v395 = vrot.slane %v381, %v394
        %v396 = vcombine.low %v363, %v379
        %v397 = vcombine.high %v363, %v379
        %v399 = vunpack.c.l.s4 1934713408
        %v400 = vunpack.c.0.s8 %v399
        %v401 = vlaneseq
        %v402 = vshrl.u32 %v401, 7
        %v403 = vsub.s32 %v400, %v402
        %v404 = vrot.slane %v396, %v403
        %v406 = vunpack.c.l.s4 1934713408
        %v407 = vunpack.c.0.s8 %v406
        %v408 = vlaneseq
        %v409 = vshrl.u32 %v408, 7
        %v410 = vsub.s32 %v407, %v409
        %v411 = vrot.slane %v397, %v410
        %v412 = vcombine.high %v388, 0.0
        %v413 = vcombine.high %v395, 0.0
        %v414 = vcombine.high %v404, 0.0
        %v415 = vcombine.high %v411, 0.0
        %v416 = vcombine.low %v199, %v207
        %v417 = vcombine.high %v199, %v207
        %v419 = vunpack.c.l.s4 1983009808
        %v420 = vunpack.c.0.s8 %v419
        %v421 = vlaneseq
        %v422 = vshrl.u32 %v421, 7
        %v423 = vsub.s32 %v420, %v422
        %v424 = vrot.slane %v416, %v423
        %v426 = vunpack.c.l.s4 1983009808
        %v427 = vunpack.c.0.s8 %v426
        %v428 = vlaneseq
        %v429 = vshrl.u32 %v428, 7
        %v430 = vsub.s32 %v427, %v429
        %v431 = vrot.slane %v417, %v430
        %v432 = vcombine.low %v203, %v211
        %v433 = vcombine.high %v203, %v211
        %v435 = vunpack.c.l.s4 1983009808
        %v436 = vunpack.c.0.s8 %v435
        %v437 = vlaneseq
        %v438 = vshrl.u32 %v437, 7
        %v439 = vsub.s32 %v436, %v438
        %v440 = vrot.slane %v432, %v439
        %v442 = vunpack.c.l.s4 1983009808
        %v443 = vunpack.c.0.s8 %v442
        %v444 = vlaneseq
        %v445 = vshrl.u32 %v444, 7
        %v446 = vsub.s32 %v443, %v445
        %v447 = vrot.slane %v433, %v446
        %v448 = vcombine.low %v424, %v440
        %v449 = vcombine.high %v424, %v440
        %v451 = vunpack.c.l.s4 1934713408
        %v452 = vunpack.c.0.s8 %v451
        %v453 = vlaneseq
        %v454 = vshrl.u32 %v453, 7
        %v455 = vsub.s32 %v452, %v454
        %v456 = vrot.slane %v448, %v455
        %v458 = vunpack.c.l.s4 1934713408
        %v459 = vunpack.c.0.s8 %v458
        %v460 = vlaneseq
        %v461 = vshrl.u32 %v460, 7
        %v462 = vsub.s32 %v459, %v461
        %v463 = vrot.slane %v449, %v462
        %v464 = vcombine.low %v431, %v447
        %v465 = vcombine.high %v431, %v447
        %v467 = vunpack.c.l.s4 1934713408
        %v468 = vunpack.c.0.s8 %v467
        %v469 = vlaneseq
        %v470 = vshrl.u32 %v469, 7
        %v471 = vsub.s32 %v468, %v470
        %v472 = vrot.slane %v464, %v471
        %v474 = vunpack.c.l.s4 1934713408
        %v475 = vunpack.c.0.s8 %v474
        %v476 = vlaneseq
        %v477 = vshrl.u32 %v476, 7
        %v478 = vsub.s32 %v475, %v477
        %v479 = vrot.slane %v465, %v478
        %v480 = vcombine.high %v456, 0.0
        %v481 = vcombine.high %v463, 0.0
        %v482 = vcombine.high %v472, 0.0
        %v483 = vcombine.high %v479, 0.0
        %485 = vrot.lane.b32.xlu0 %v276, 32
        %v486 = vpop.permute.xlu0 %485
        %489 = vrot.lane.b32.xlu0 %v259, 64
        %v490 = vpop.permute.xlu0 %489
        %493 = vrot.lane.b32.xlu0 %v277, 96
        %v494 = vpop.permute.xlu0 %493
        %497 = vrot.lane.b32.xlu0 %v278, 32
        %v498 = vpop.permute.xlu0 %497
        %501 = vrot.lane.b32.xlu0 %v275, 64
        %v502 = vpop.permute.xlu0 %501
        %505 = vrot.lane.b32.xlu0 %v279, 96
        %v506 = vpop.permute.xlu0 %505
        %509 = vrot.lane.b32.xlu0 %v344, 32
        %v510 = vpop.permute.xlu0 %509
        %513 = vrot.lane.b32.xlu0 %v327, 64
        %v514 = vpop.permute.xlu0 %513
        %517 = vrot.lane.b32.xlu0 %v345, 96
        %v518 = vpop.permute.xlu0 %517
        %521 = vrot.lane.b32.xlu0 %v346, 32
        %v522 = vpop.permute.xlu0 %521
        %525 = vrot.lane.b32.xlu0 %v343, 64
        %v526 = vpop.permute.xlu0 %525
        %529 = vrot.lane.b32.xlu0 %v347, 96
        %v530 = vpop.permute.xlu0 %529
        %533 = vrot.lane.b32.xlu0 %v412, 32
        %v534 = vpop.permute.xlu0 %533
        %537 = vrot.lane.b32.xlu0 %v395, 64
        %v538 = vpop.permute.xlu0 %537
        %541 = vrot.lane.b32.xlu0 %v413, 96
        %v542 = vpop.permute.xlu0 %541
        %545 = vrot.lane.b32.xlu0 %v414, 32
        %v546 = vpop.permute.xlu0 %545
        %549 = vrot.lane.b32.xlu0 %v411, 64
        %v550 = vpop.permute.xlu0 %549
        %553 = vrot.lane.b32.xlu0 %v415, 96
        %v554 = vpop.permute.xlu0 %553
        %557 = vrot.lane.b32.xlu0 %v480, 32
        %v558 = vpop.permute.xlu0 %557
        %561 = vrot.lane.b32.xlu0 %v463, 64
        %v562 = vpop.permute.xlu0 %561
        %565 = vrot.lane.b32.xlu0 %v481, 96
        %v566 = vpop.permute.xlu0 %565
        %569 = vrot.lane.b32.xlu0 %v482, 32
        %v570 = vpop.permute.xlu0 %569
        %573 = vrot.lane.b32.xlu0 %v479, 64
        %v574 = vpop.permute.xlu0 %573
        %577 = vrot.lane.b32.xlu0 %v483, 96
        %v578 = vpop.permute.xlu0 %577
        %vm580 = vcmask 261120
        %v581 = vsel %vm580, %v252, %v486
        %vm582 = vcmask 523264
        %v583 = vsel %vm582, %v581, %v490
        %vm584 = vcmask 785408
        %v585 = vsel %vm584, %v583, %v494
        %v586 = vsel %vm580, %v268, %v498
        %v587 = vsel %vm582, %v586, %v502
        %v588 = vsel %vm584, %v587, %v506
        %v589 = vsel %vm580, %v320, %v510
        %v590 = vsel %vm582, %v589, %v514
        %v591 = vsel %vm584, %v590, %v518
        %v592 = vsel %vm580, %v336, %v522
        %v593 = vsel %vm582, %v592, %v526
        %v594 = vsel %vm584, %v593, %v530
        %v595 = vsel %vm580, %v388, %v534
        %v596 = vsel %vm582, %v595, %v538
        %v597 = vsel %vm584, %v596, %v542
        %v598 = vsel %vm580, %v404, %v546
        %v599 = vsel %vm582, %v598, %v550
        %v600 = vsel %vm584, %v599, %v554
        %v601 = vsel %vm580, %v456, %v558
        %v602 = vsel %vm582, %v601, %v562
        %v603 = vsel %vm584, %v602, %v566
        %v604 = vsel %vm580, %v472, %v570
        %v605 = vsel %vm582, %v604, %v574
        %v606 = vsel %vm584, %v605, %v578
        %607 = vst [vmem:[#allocation2] sm:$0xf] %v585
        %608 = vst [vmem:[#allocation2 + $0x8] sm:$0xf] %v588
        %609 = vst [vmem:[#allocation2 + $0x10] sm:$0xf] %v591
        %610 = vst [vmem:[#allocation2 + $0x18] sm:$0xf] %v594
        %611 = vst [vmem:[#allocation2 + $0x20] sm:$0xf] %v597
        %612 = vst [vmem:[#allocation2 + $0x28] sm:$0xf] %v600
        %613 = vst [vmem:[#allocation2 + $0x30] sm:$0xf] %v603
        %614 = vst [vmem:[#allocation2 + $0x38] sm:$0xf] %v606
        %v615 = vld [vmem:[%s195] sm:$0xff]
        %v616 = vld [vmem:[%s195 + $0x8] sm:$0xff]
        %v617 = vld [vmem:[%s195 + $0x10] sm:$0xff]
        %v618 = vld [vmem:[%s195 + $0x18] sm:$0xff]
        %v619 = vld [vmem:[%s195 + $0x28] sm:$0xff]
        %v620 = vld [vmem:[%s195 + $0x30] sm:$0xff]
        %v621 = vld [vmem:[%s195 + $0x38] sm:$0xff]
        %v622 = vld [vmem:[%s195 + $0x40] sm:$0xff]
        %v623 = vld [vmem:[%s195 + $0x50] sm:$0xff]
        %v624 = vld [vmem:[%s195 + $0x58] sm:$0xff]
        %v625 = vld [vmem:[%s195 + $0x60] sm:$0xff]
        %v626 = vld [vmem:[%s195 + $0x68] sm:$0xff]
        %v627 = vld [vmem:[%s195 + $0x78] sm:$0xff]
        %v628 = vld [vmem:[%s195 + $0x80] sm:$0xff]
        %v629 = vld [vmem:[%s195 + $0x88] sm:$0xff]
        %v630 = vld [vmem:[%s195 + $0x90] sm:$0xff]
        %647 = vrot.lane.b32.xlu0 %v615, 127
        %v648 = vpop.permute.xlu0 %647
        %649 = vrot.lane.b32.xlu0 %v616, 127
        %v650 = vpop.permute.xlu0 %649
        %651 = vrot.lane.b32.xlu0 %v617, 127
        %v652 = vpop.permute.xlu0 %651
        %653 = vrot.lane.b32.xlu0 %v618, 127
        %v654 = vpop.permute.xlu0 %653
        %655 = vrot.lane.b32.xlu0 %v619, 127
        %v656 = vpop.permute.xlu0 %655
        %657 = vrot.lane.b32.xlu0 %v620, 127
        %v658 = vpop.permute.xlu0 %657
        %659 = vrot.lane.b32.xlu0 %v621, 127
        %v660 = vpop.permute.xlu0 %659
        %661 = vrot.lane.b32.xlu0 %v622, 127
        %v662 = vpop.permute.xlu0 %661
        %663 = vrot.lane.b32.xlu0 %v623, 127
        %v664 = vpop.permute.xlu0 %663
        %665 = vrot.lane.b32.xlu0 %v624, 127
        %v666 = vpop.permute.xlu0 %665
        %667 = vrot.lane.b32.xlu0 %v625, 127
        %v668 = vpop.permute.xlu0 %667
        %669 = vrot.lane.b32.xlu0 %v626, 127
        %v670 = vpop.permute.xlu0 %669
        %671 = vrot.lane.b32.xlu0 %v627, 127
        %v672 = vpop.permute.xlu0 %671
        %673 = vrot.lane.b32.xlu0 %v628, 127
        %v674 = vpop.permute.xlu0 %673
        %675 = vrot.lane.b32.xlu0 %v629, 127
        %v676 = vpop.permute.xlu0 %675
        %677 = vrot.lane.b32.xlu0 %v630, 127
        %v678 = vpop.permute.xlu0 %677
        %v695 = vcombine.low %v648, %v664
        %v696 = vcombine.high %v648, %v664
        %v698 = vunpack.c.l.s4 1983009808
        %v699 = vunpack.c.0.s8 %v698
        %v700 = vlaneseq
        %v701 = vshrl.u32 %v700, 7
        %v702 = vsub.s32 %v699, %v701
        %v703 = vrot.slane %v695, %v702
        %v705 = vunpack.c.l.s4 1983009808
        %v706 = vunpack.c.0.s8 %v705
        %v707 = vlaneseq
        %v708 = vshrl.u32 %v707, 7
        %v709 = vsub.s32 %v706, %v708
        %v710 = vrot.slane %v696, %v709
        %v711 = vcombine.low %v656, %v672
        %v712 = vcombine.high %v656, %v672
        %v714 = vunpack.c.l.s4 1983009808
        %v715 = vunpack.c.0.s8 %v714
        %v716 = vlaneseq
        %v717 = vshrl.u32 %v716, 7
        %v718 = vsub.s32 %v715, %v717
        %v719 = vrot.slane %v711, %v718
        %v721 = vunpack.c.l.s4 1983009808
        %v722 = vunpack.c.0.s8 %v721
        %v723 = vlaneseq
        %v724 = vshrl.u32 %v723, 7
        %v725 = vsub.s32 %v722, %v724
        %v726 = vrot.slane %v712, %v725
        %v727 = vcombine.low %v703, %v719
        %v728 = vcombine.high %v703, %v719
        %v730 = vunpack.c.l.s4 1934713408
        %v731 = vunpack.c.0.s8 %v730
        %v732 = vlaneseq
        %v733 = vshrl.u32 %v732, 7
        %v734 = vsub.s32 %v731, %v733
        %v735 = vrot.slane %v727, %v734
        %v737 = vunpack.c.l.s4 1934713408
        %v738 = vunpack.c.0.s8 %v737
        %v739 = vlaneseq
        %v740 = vshrl.u32 %v739, 7
        %v741 = vsub.s32 %v738, %v740
        %v742 = vrot.slane %v728, %v741
        %v743 = vcombine.low %v710, %v726
        %v744 = vcombine.high %v710, %v726
        %v746 = vunpack.c.l.s4 1934713408
        %v747 = vunpack.c.0.s8 %v746
        %v748 = vlaneseq
        %v749 = vshrl.u32 %v748, 7
        %v750 = vsub.s32 %v747, %v749
        %v751 = vrot.slane %v743, %v750
        %v753 = vunpack.c.l.s4 1934713408
        %v754 = vunpack.c.0.s8 %v753
        %v755 = vlaneseq
        %v756 = vshrl.u32 %v755, 7
        %v757 = vsub.s32 %v754, %v756
        %v758 = vrot.slane %v744, %v757
        %v759 = vcombine.high %v735, 0.0
        %v760 = vcombine.high %v742, 0.0
        %v761 = vcombine.high %v751, 0.0
        %v762 = vcombine.high %v758, 0.0
        %v763 = vcombine.low %v650, %v666
        %v764 = vcombine.high %v650, %v666
        %v766 = vunpack.c.l.s4 1983009808
        %v767 = vunpack.c.0.s8 %v766
        %v768 = vlaneseq
        %v769 = vshrl.u32 %v768, 7
        %v770 = vsub.s32 %v767, %v769
        %v771 = vrot.slane %v763, %v770
        %v773 = vunpack.c.l.s4 1983009808
        %v774 = vunpack.c.0.s8 %v773
        %v775 = vlaneseq
        %v776 = vshrl.u32 %v775, 7
        %v777 = vsub.s32 %v774, %v776
        %v778 = vrot.slane %v764, %v777
        %v779 = vcombine.low %v658, %v674
        %v780 = vcombine.high %v658, %v674
        %v782 = vunpack.c.l.s4 1983009808
        %v783 = vunpack.c.0.s8 %v782
        %v784 = vlaneseq
        %v785 = vshrl.u32 %v784, 7
        %v786 = vsub.s32 %v783, %v785
        %v787 = vrot.slane %v779, %v786
        %v789 = vunpack.c.l.s4 1983009808
        %v790 = vunpack.c.0.s8 %v789
        %v791 = vlaneseq
        %v792 = vshrl.u32 %v791, 7
        %v793 = vsub.s32 %v790, %v792
        %v794 = vrot.slane %v780, %v793
        %v795 = vcombine.low %v771, %v787
        %v796 = vcombine.high %v771, %v787
        %v798 = vunpack.c.l.s4 1934713408
        %v799 = vunpack.c.0.s8 %v798
        %v800 = vlaneseq
        %v801 = vshrl.u32 %v800, 7
        %v802 = vsub.s32 %v799, %v801
        %v803 = vrot.slane %v795, %v802
        %v805 = vunpack.c.l.s4 1934713408
        %v806 = vunpack.c.0.s8 %v805
        %v807 = vlaneseq
        %v808 = vshrl.u32 %v807, 7
        %v809 = vsub.s32 %v806, %v808
        %v810 = vrot.slane %v796, %v809
        %v811 = vcombine.low %v778, %v794
        %v812 = vcombine.high %v778, %v794
        %v814 = vunpack.c.l.s4 1934713408
        %v815 = vunpack.c.0.s8 %v814
        %v816 = vlaneseq
        %v817 = vshrl.u32 %v816, 7
        %v818 = vsub.s32 %v815, %v817
        %v819 = vrot.slane %v811, %v818
        %v821 = vunpack.c.l.s4 1934713408
        %v822 = vunpack.c.0.s8 %v821
        %v823 = vlaneseq
        %v824 = vshrl.u32 %v823, 7
        %v825 = vsub.s32 %v822, %v824
        %v826 = vrot.slane %v812, %v825
        %v827 = vcombine.high %v803, 0.0
        %v828 = vcombine.high %v810, 0.0
        %v829 = vcombine.high %v819, 0.0
        %v830 = vcombine.high %v826, 0.0
        %v831 = vcombine.low %v652, %v668
        %v832 = vcombine.high %v652, %v668
        %v834 = vunpack.c.l.s4 1983009808
        %v835 = vunpack.c.0.s8 %v834
        %v836 = vlaneseq
        %v837 = vshrl.u32 %v836, 7
        %v838 = vsub.s32 %v835, %v837
        %v839 = vrot.slane %v831, %v838
        %v841 = vunpack.c.l.s4 1983009808
        %v842 = vunpack.c.0.s8 %v841
        %v843 = vlaneseq
        %v844 = vshrl.u32 %v843, 7
        %v845 = vsub.s32 %v842, %v844
        %v846 = vrot.slane %v832, %v845
        %v847 = vcombine.low %v660, %v676
        %v848 = vcombine.high %v660, %v676
        %v850 = vunpack.c.l.s4 1983009808
        %v851 = vunpack.c.0.s8 %v850
        %v852 = vlaneseq
        %v853 = vshrl.u32 %v852, 7
        %v854 = vsub.s32 %v851, %v853
        %v855 = vrot.slane %v847, %v854
        %v857 = vunpack.c.l.s4 1983009808
        %v858 = vunpack.c.0.s8 %v857
        %v859 = vlaneseq
        %v860 = vshrl.u32 %v859, 7
        %v861 = vsub.s32 %v858, %v860
        %v862 = vrot.slane %v848, %v861
        %v863 = vcombine.low %v839, %v855
        %v864 = vcombine.high %v839, %v855
        %v866 = vunpack.c.l.s4 1934713408
        %v867 = vunpack.c.0.s8 %v866
        %v868 = vlaneseq
        %v869 = vshrl.u32 %v868, 7
        %v870 = vsub.s32 %v867, %v869
        %v871 = vrot.slane %v863, %v870
        %v873 = vunpack.c.l.s4 1934713408
        %v874 = vunpack.c.0.s8 %v873
        %v875 = vlaneseq
        %v876 = vshrl.u32 %v875, 7
        %v877 = vsub.s32 %v874, %v876
        %v878 = vrot.slane %v864, %v877
        %v879 = vcombine.low %v846, %v862
        %v880 = vcombine.high %v846, %v862
        %v882 = vunpack.c.l.s4 1934713408
        %v883 = vunpack.c.0.s8 %v882
        %v884 = vlaneseq
        %v885 = vshrl.u32 %v884, 7
        %v886 = vsub.s32 %v883, %v885
        %v887 = vrot.slane %v879, %v886
        %v889 = vunpack.c.l.s4 1934713408
        %v890 = vunpack.c.0.s8 %v889
        %v891 = vlaneseq
        %v892 = vshrl.u32 %v891, 7
        %v893 = vsub.s32 %v890, %v892
        %v894 = vrot.slane %v880, %v893
        %v895 = vcombine.high %v871, 0.0
        %v896 = vcombine.high %v878, 0.0
        %v897 = vcombine.high %v887, 0.0
        %v898 = vcombine.high %v894, 0.0
        %v899 = vcombine.low %v654, %v670
        %v900 = vcombine.high %v654, %v670
        %v902 = vunpack.c.l.s4 1983009808
        %v903 = vunpack.c.0.s8 %v902
        %v904 = vlaneseq
        %v905 = vshrl.u32 %v904, 7
        %v906 = vsub.s32 %v903, %v905
        %v907 = vrot.slane %v899, %v906
        %v909 = vunpack.c.l.s4 1983009808
        %v910 = vunpack.c.0.s8 %v909
        %v911 = vlaneseq
        %v912 = vshrl.u32 %v911, 7
        %v913 = vsub.s32 %v910, %v912
        %v914 = vrot.slane %v900, %v913
        %v915 = vcombine.low %v662, %v678
        %v916 = vcombine.high %v662, %v678
        %v918 = vunpack.c.l.s4 1983009808
        %v919 = vunpack.c.0.s8 %v918
        %v920 = vlaneseq
        %v921 = vshrl.u32 %v920, 7
        %v922 = vsub.s32 %v919, %v921
        %v923 = vrot.slane %v915, %v922
        %v925 = vunpack.c.l.s4 1983009808
        %v926 = vunpack.c.0.s8 %v925
        %v927 = vlaneseq
        %v928 = vshrl.u32 %v927, 7
        %v929 = vsub.s32 %v926, %v928
        %v930 = vrot.slane %v916, %v929
        %v931 = vcombine.low %v907, %v923
        %v932 = vcombine.high %v907, %v923
        %v934 = vunpack.c.l.s4 1934713408
        %v935 = vunpack.c.0.s8 %v934
        %v936 = vlaneseq
        %v937 = vshrl.u32 %v936, 7
        %v938 = vsub.s32 %v935, %v937
        %v939 = vrot.slane %v931, %v938
        %v941 = vunpack.c.l.s4 1934713408
        %v942 = vunpack.c.0.s8 %v941
        %v943 = vlaneseq
        %v944 = vshrl.u32 %v943, 7
        %v945 = vsub.s32 %v942, %v944
        %v946 = vrot.slane %v932, %v945
        %v947 = vcombine.low %v914, %v930
        %v948 = vcombine.high %v914, %v930
        %v950 = vunpack.c.l.s4 1934713408
        %v951 = vunpack.c.0.s8 %v950
        %v952 = vlaneseq
        %v953 = vshrl.u32 %v952, 7
        %v954 = vsub.s32 %v951, %v953
        %v955 = vrot.slane %v947, %v954
        %v957 = vunpack.c.l.s4 1934713408
        %v958 = vunpack.c.0.s8 %v957
        %v959 = vlaneseq
        %v960 = vshrl.u32 %v959, 7
        %v961 = vsub.s32 %v958, %v960
        %v962 = vrot.slane %v948, %v961
        %v963 = vcombine.high %v939, 0.0
        %v964 = vcombine.high %v946, 0.0
        %v965 = vcombine.high %v955, 0.0
        %v966 = vcombine.high %v962, 0.0
        %968 = vrot.lane.b32.xlu0 %v759, 32
        %v969 = vpop.permute.xlu0 %968
        %972 = vrot.lane.b32.xlu0 %v742, 64
        %v973 = vpop.permute.xlu0 %972
        %976 = vrot.lane.b32.xlu0 %v760, 96
        %v977 = vpop.permute.xlu0 %976
        %980 = vrot.lane.b32.xlu0 %v761, 32
        %v981 = vpop.permute.xlu0 %980
        %984 = vrot.lane.b32.xlu0 %v758, 64
        %v985 = vpop.permute.xlu0 %984
        %988 = vrot.lane.b32.xlu0 %v762, 96
        %v989 = vpop.permute.xlu0 %988
        %992 = vrot.lane.b32.xlu0 %v827, 32
        %v993 = vpop.permute.xlu0 %992
        %996 = vrot.lane.b32.xlu0 %v810, 64
        %v997 = vpop.permute.xlu0 %996
        %1000 = vrot.lane.b32.xlu0 %v828, 96
        %v1001 = vpop.permute.xlu0 %1000
        %1004 = vrot.lane.b32.xlu0 %v829, 32
        %v1005 = vpop.permute.xlu0 %1004
        %1008 = vrot.lane.b32.xlu0 %v826, 64
        %v1009 = vpop.permute.xlu0 %1008
        %1012 = vrot.lane.b32.xlu0 %v830, 96
        %v1013 = vpop.permute.xlu0 %1012
        %1016 = vrot.lane.b32.xlu0 %v895, 32
        %v1017 = vpop.permute.xlu0 %1016
        %1020 = vrot.lane.b32.xlu0 %v878, 64
        %v1021 = vpop.permute.xlu0 %1020
        %1024 = vrot.lane.b32.xlu0 %v896, 96
        %v1025 = vpop.permute.xlu0 %1024
        %1028 = vrot.lane.b32.xlu0 %v897, 32
        %v1029 = vpop.permute.xlu0 %1028
        %1032 = vrot.lane.b32.xlu0 %v894, 64
        %v1033 = vpop.permute.xlu0 %1032
        %1036 = vrot.lane.b32.xlu0 %v898, 96
        %v1037 = vpop.permute.xlu0 %1036
        %1040 = vrot.lane.b32.xlu0 %v963, 32
        %v1041 = vpop.permute.xlu0 %1040
        %1044 = vrot.lane.b32.xlu0 %v946, 64
        %v1045 = vpop.permute.xlu0 %1044
        %1048 = vrot.lane.b32.xlu0 %v964, 96
        %v1049 = vpop.permute.xlu0 %1048
        %1052 = vrot.lane.b32.xlu0 %v965, 32
        %v1053 = vpop.permute.xlu0 %1052
        %1056 = vrot.lane.b32.xlu0 %v962, 64
        %v1057 = vpop.permute.xlu0 %1056
        %1060 = vrot.lane.b32.xlu0 %v966, 96
        %v1061 = vpop.permute.xlu0 %1060
        %v1063 = vsel %vm580, %v735, %v969
        %v1064 = vsel %vm582, %v1063, %v973
        %v1065 = vsel %vm584, %v1064, %v977
        %v1066 = vsel %vm580, %v751, %v981
        %v1067 = vsel %vm582, %v1066, %v985
        %v1068 = vsel %vm584, %v1067, %v989
        %v1069 = vsel %vm580, %v803, %v993
        %v1070 = vsel %vm582, %v1069, %v997
        %v1071 = vsel %vm584, %v1070, %v1001
        %v1072 = vsel %vm580, %v819, %v1005
        %v1073 = vsel %vm582, %v1072, %v1009
        %v1074 = vsel %vm584, %v1073, %v1013
        %v1075 = vsel %vm580, %v871, %v1017
        %v1076 = vsel %vm582, %v1075, %v1021
        %v1077 = vsel %vm584, %v1076, %v1025
        %v1078 = vsel %vm580, %v887, %v1029
        %v1079 = vsel %vm582, %v1078, %v1033
        %v1080 = vsel %vm584, %v1079, %v1037
        %v1081 = vsel %vm580, %v939, %v1041
        %v1082 = vsel %vm582, %v1081, %v1045
        %v1083 = vsel %vm584, %v1082, %v1049
        %v1084 = vsel %vm580, %v955, %v1053
        %v1085 = vsel %vm582, %v1084, %v1057
        %v1086 = vsel %vm584, %v1085, %v1061
        %v1095 = vrot.slane %v1065, 4
        %v1096 = vrot.slane %v1068, 4
        %v1097 = vrot.slane %v1071, 4
        %v1098 = vrot.slane %v1074, 4
        %v1099 = vrot.slane %v1077, 4
        %v1100 = vrot.slane %v1080, 4
        %v1101 = vrot.slane %v1083, 4
        %v1102 = vrot.slane %v1086, 4
        %1111 = vst [vmem:[#allocation2] sm:$0xf0] %v1095
        %1112 = vst [vmem:[#allocation2 + $0x8] sm:$0xf0] %v1096
        %1113 = vst [vmem:[#allocation2 + $0x10] sm:$0xf0] %v1097
        %1114 = vst [vmem:[#allocation2 + $0x18] sm:$0xf0] %v1098
        %1115 = vst [vmem:[#allocation2 + $0x20] sm:$0xf0] %v1099
        %1116 = vst [vmem:[#allocation2 + $0x28] sm:$0xf0] %v1100
        %1117 = vst [vmem:[#allocation2 + $0x30] sm:$0xf0] %v1101
        %1118 = vst [vmem:[#allocation2 + $0x38] sm:$0xf0] %v1102
        %v1119 = vld [vmem:[%s195] sm:$0xff]
        %v1120 = vld [vmem:[%s195 + $0x8] sm:$0xff]
        %v1121 = vld [vmem:[%s195 + $0x10] sm:$0xff]
        %v1122 = vld [vmem:[%s195 + $0x18] sm:$0xff]
        %v1123 = vld [vmem:[%s195 + $0x28] sm:$0xff]
        %v1124 = vld [vmem:[%s195 + $0x30] sm:$0xff]
        %v1125 = vld [vmem:[%s195 + $0x38] sm:$0xff]
        %v1126 = vld [vmem:[%s195 + $0x40] sm:$0xff]
        %v1127 = vld [vmem:[%s195 + $0x50] sm:$0xff]
        %v1128 = vld [vmem:[%s195 + $0x58] sm:$0xff]
        %v1129 = vld [vmem:[%s195 + $0x60] sm:$0xff]
        %v1130 = vld [vmem:[%s195 + $0x68] sm:$0xff]
        %v1131 = vld [vmem:[%s195 + $0x78] sm:$0xff]
        %v1132 = vld [vmem:[%s195 + $0x80] sm:$0xff]
        %v1133 = vld [vmem:[%s195 + $0x88] sm:$0xff]
        %v1134 = vld [vmem:[%s195 + $0x90] sm:$0xff]
        %1151 = vrot.lane.b32.xlu0 %v1119, 126
        %v1152 = vpop.permute.xlu0 %1151
        %1153 = vrot.lane.b32.xlu0 %v1120, 126
        %v1154 = vpop.permute.xlu0 %1153
        %1155 = vrot.lane.b32.xlu0 %v1121, 126
        %v1156 = vpop.permute.xlu0 %1155
        %1157 = vrot.lane.b32.xlu0 %v1122, 126
        %v1158 = vpop.permute.xlu0 %1157
        %1159 = vrot.lane.b32.xlu0 %v1123, 126
        %v1160 = vpop.permute.xlu0 %1159
        %1161 = vrot.lane.b32.xlu0 %v1124, 126
        %v1162 = vpop.permute.xlu0 %1161
        %1163 = vrot.lane.b32.xlu0 %v1125, 126
        %v1164 = vpop.permute.xlu0 %1163
        %1165 = vrot.lane.b32.xlu0 %v1126, 126
        %v1166 = vpop.permute.xlu0 %1165
        %1167 = vrot.lane.b32.xlu0 %v1127, 126
        %v1168 = vpop.permute.xlu0 %1167
        %1169 = vrot.lane.b32.xlu0 %v1128, 126
        %v1170 = vpop.permute.xlu0 %1169
        %1171 = vrot.lane.b32.xlu0 %v1129, 126
        %v1172 = vpop.permute.xlu0 %1171
        %1173 = vrot.lane.b32.xlu0 %v1130, 126
        %v1174 = vpop.permute.xlu0 %1173
        %1175 = vrot.lane.b32.xlu0 %v1131, 126
        %v1176 = vpop.permute.xlu0 %1175
        %1177 = vrot.lane.b32.xlu0 %v1132, 126
        %v1178 = vpop.permute.xlu0 %1177
        %1179 = vrot.lane.b32.xlu0 %v1133, 126
        %v1180 = vpop.permute.xlu0 %1179
        %1181 = vrot.lane.b32.xlu0 %v1134, 126
        %v1182 = vpop.permute.xlu0 %1181
        %v1199 = vcombine.low %v1152, %v1168
        %v1200 = vcombine.high %v1152, %v1168
        %v1202 = vunpack.c.l.s4 1983009808
        %v1203 = vunpack.c.0.s8 %v1202
        %v1204 = vlaneseq
        %v1205 = vshrl.u32 %v1204, 7
        %v1206 = vsub.s32 %v1203, %v1205
        %v1207 = vrot.slane %v1199, %v1206
        %v1209 = vunpack.c.l.s4 1983009808
        %v1210 = vunpack.c.0.s8 %v1209
        %v1211 = vlaneseq
        %v1212 = vshrl.u32 %v1211, 7
        %v1213 = vsub.s32 %v1210, %v1212
        %v1214 = vrot.slane %v1200, %v1213
        %v1215 = vcombine.low %v1160, %v1176
        %v1216 = vcombine.high %v1160, %v1176
        %v1218 = vunpack.c.l.s4 1983009808
        %v1219 = vunpack.c.0.s8 %v1218
        %v1220 = vlaneseq
        %v1221 = vshrl.u32 %v1220, 7
        %v1222 = vsub.s32 %v1219, %v1221
        %v1223 = vrot.slane %v1215, %v1222
        %v1225 = vunpack.c.l.s4 1983009808
        %v1226 = vunpack.c.0.s8 %v1225
        %v1227 = vlaneseq
        %v1228 = vshrl.u32 %v1227, 7
        %v1229 = vsub.s32 %v1226, %v1228
        %v1230 = vrot.slane %v1216, %v1229
        %v1231 = vcombine.low %v1207, %v1223
        %v1232 = vcombine.high %v1207, %v1223
        %v1234 = vunpack.c.l.s4 1934713408
        %v1235 = vunpack.c.0.s8 %v1234
        %v1236 = vlaneseq
        %v1237 = vshrl.u32 %v1236, 7
        %v1238 = vsub.s32 %v1235, %v1237
        %v1239 = vrot.slane %v1231, %v1238
        %v1241 = vunpack.c.l.s4 1934713408
        %v1242 = vunpack.c.0.s8 %v1241
        %v1243 = vlaneseq
        %v1244 = vshrl.u32 %v1243, 7
        %v1245 = vsub.s32 %v1242, %v1244
        %v1246 = vrot.slane %v1232, %v1245
        %v1247 = vcombine.low %v1214, %v1230
        %v1248 = vcombine.high %v1214, %v1230
        %v1250 = vunpack.c.l.s4 1934713408
        %v1251 = vunpack.c.0.s8 %v1250
        %v1252 = vlaneseq
        %v1253 = vshrl.u32 %v1252, 7
        %v1254 = vsub.s32 %v1251, %v1253
        %v1255 = vrot.slane %v1247, %v1254
        %v1257 = vunpack.c.l.s4 1934713408
        %v1258 = vunpack.c.0.s8 %v1257
        %v1259 = vlaneseq
        %v1260 = vshrl.u32 %v1259, 7
        %v1261 = vsub.s32 %v1258, %v1260
        %v1262 = vrot.slane %v1248, %v1261
        %v1263 = vcombine.high %v1239, 0.0
        %v1264 = vcombine.high %v1246, 0.0
        %v1265 = vcombine.high %v1255, 0.0
        %v1266 = vcombine.high %v1262, 0.0
        %v1267 = vcombine.low %v1154, %v1170
        %v1268 = vcombine.high %v1154, %v1170
        %v1270 = vunpack.c.l.s4 1983009808
        %v1271 = vunpack.c.0.s8 %v1270
        %v1272 = vlaneseq
        %v1273 = vshrl.u32 %v1272, 7
        %v1274 = vsub.s32 %v1271, %v1273
        %v1275 = vrot.slane %v1267, %v1274
        %v1277 = vunpack.c.l.s4 1983009808
        %v1278 = vunpack.c.0.s8 %v1277
        %v1279 = vlaneseq
        %v1280 = vshrl.u32 %v1279, 7
        %v1281 = vsub.s32 %v1278, %v1280
        %v1282 = vrot.slane %v1268, %v1281
        %v1283 = vcombine.low %v1162, %v1178
        %v1284 = vcombine.high %v1162, %v1178
        %v1286 = vunpack.c.l.s4 1983009808
        %v1287 = vunpack.c.0.s8 %v1286
        %v1288 = vlaneseq
        %v1289 = vshrl.u32 %v1288, 7
        %v1290 = vsub.s32 %v1287, %v1289
        %v1291 = vrot.slane %v1283, %v1290
        %v1293 = vunpack.c.l.s4 1983009808
        %v1294 = vunpack.c.0.s8 %v1293
        %v1295 = vlaneseq
        %v1296 = vshrl.u32 %v1295, 7
        %v1297 = vsub.s32 %v1294, %v1296
        %v1298 = vrot.slane %v1284, %v1297
        %v1299 = vcombine.low %v1275, %v1291
        %v1300 = vcombine.high %v1275, %v1291
        %v1302 = vunpack.c.l.s4 1934713408
        %v1303 = vunpack.c.0.s8 %v1302
        %v1304 = vlaneseq
        %v1305 = vshrl.u32 %v1304, 7
        %v1306 = vsub.s32 %v1303, %v1305
        %v1307 = vrot.slane %v1299, %v1306
        %v1309 = vunpack.c.l.s4 1934713408
        %v1310 = vunpack.c.0.s8 %v1309
        %v1311 = vlaneseq
        %v1312 = vshrl.u32 %v1311, 7
        %v1313 = vsub.s32 %v1310, %v1312
        %v1314 = vrot.slane %v1300, %v1313
        %v1315 = vcombine.low %v1282, %v1298
        %v1316 = vcombine.high %v1282, %v1298
        %v1318 = vunpack.c.l.s4 1934713408
        %v1319 = vunpack.c.0.s8 %v1318
        %v1320 = vlaneseq
        %v1321 = vshrl.u32 %v1320, 7
        %v1322 = vsub.s32 %v1319, %v1321
        %v1323 = vrot.slane %v1315, %v1322
        %v1325 = vunpack.c.l.s4 1934713408
        %v1326 = vunpack.c.0.s8 %v1325
        %v1327 = vlaneseq
        %v1328 = vshrl.u32 %v1327, 7
        %v1329 = vsub.s32 %v1326, %v1328
        %v1330 = vrot.slane %v1316, %v1329
        %v1331 = vcombine.high %v1307, 0.0
        %v1332 = vcombine.high %v1314, 0.0
        %v1333 = vcombine.high %v1323, 0.0
        %v1334 = vcombine.high %v1330, 0.0
        %v1335 = vcombine.low %v1156, %v1172
        %v1336 = vcombine.high %v1156, %v1172
        %v1338 = vunpack.c.l.s4 1983009808
        %v1339 = vunpack.c.0.s8 %v1338
        %v1340 = vlaneseq
        %v1341 = vshrl.u32 %v1340, 7
        %v1342 = vsub.s32 %v1339, %v1341
        %v1343 = vrot.slane %v1335, %v1342
        %v1345 = vunpack.c.l.s4 1983009808
        %v1346 = vunpack.c.0.s8 %v1345
        %v1347 = vlaneseq
        %v1348 = vshrl.u32 %v1347, 7
        %v1349 = vsub.s32 %v1346, %v1348
        %v1350 = vrot.slane %v1336, %v1349
        %v1351 = vcombine.low %v1164, %v1180
        %v1352 = vcombine.high %v1164, %v1180
        %v1354 = vunpack.c.l.s4 1983009808
        %v1355 = vunpack.c.0.s8 %v1354
        %v1356 = vlaneseq
        %v1357 = vshrl.u32 %v1356, 7
        %v1358 = vsub.s32 %v1355, %v1357
        %v1359 = vrot.slane %v1351, %v1358
        %v1361 = vunpack.c.l.s4 1983009808
        %v1362 = vunpack.c.0.s8 %v1361
        %v1363 = vlaneseq
        %v1364 = vshrl.u32 %v1363, 7
        %v1365 = vsub.s32 %v1362, %v1364
        %v1366 = vrot.slane %v1352, %v1365
        %v1367 = vcombine.low %v1343, %v1359
        %v1368 = vcombine.high %v1343, %v1359
        %v1370 = vunpack.c.l.s4 1934713408
        %v1371 = vunpack.c.0.s8 %v1370
        %v1372 = vlaneseq
        %v1373 = vshrl.u32 %v1372, 7
        %v1374 = vsub.s32 %v1371, %v1373
        %v1375 = vrot.slane %v1367, %v1374
        %v1377 = vunpack.c.l.s4 1934713408
        %v1378 = vunpack.c.0.s8 %v1377
        %v1379 = vlaneseq
        %v1380 = vshrl.u32 %v1379, 7
        %v1381 = vsub.s32 %v1378, %v1380
        %v1382 = vrot.slane %v1368, %v1381
        %v1383 = vcombine.low %v1350, %v1366
        %v1384 = vcombine.high %v1350, %v1366
        %v1386 = vunpack.c.l.s4 1934713408
        %v1387 = vunpack.c.0.s8 %v1386
        %v1388 = vlaneseq
        %v1389 = vshrl.u32 %v1388, 7
        %v1390 = vsub.s32 %v1387, %v1389
        %v1391 = vrot.slane %v1383, %v1390
        %v1393 = vunpack.c.l.s4 1934713408
        %v1394 = vunpack.c.0.s8 %v1393
        %v1395 = vlaneseq
        %v1396 = vshrl.u32 %v1395, 7
        %v1397 = vsub.s32 %v1394, %v1396
        %v1398 = vrot.slane %v1384, %v1397
        %v1399 = vcombine.high %v1375, 0.0
        %v1400 = vcombine.high %v1382, 0.0
        %v1401 = vcombine.high %v1391, 0.0
        %v1402 = vcombine.high %v1398, 0.0
        %v1403 = vcombine.low %v1158, %v1174
        %v1404 = vcombine.high %v1158, %v1174
        %v1406 = vunpack.c.l.s4 1983009808
        %v1407 = vunpack.c.0.s8 %v1406
        %v1408 = vlaneseq
        %v1409 = vshrl.u32 %v1408, 7
        %v1410 = vsub.s32 %v1407, %v1409
        %v1411 = vrot.slane %v1403, %v1410
        %v1413 = vunpack.c.l.s4 1983009808
        %v1414 = vunpack.c.0.s8 %v1413
        %v1415 = vlaneseq
        %v1416 = vshrl.u32 %v1415, 7
        %v1417 = vsub.s32 %v1414, %v1416
        %v1418 = vrot.slane %v1404, %v1417
        %v1419 = vcombine.low %v1166, %v1182
        %v1420 = vcombine.high %v1166, %v1182
        %v1422 = vunpack.c.l.s4 1983009808
        %v1423 = vunpack.c.0.s8 %v1422
        %v1424 = vlaneseq
        %v1425 = vshrl.u32 %v1424, 7
        %v1426 = vsub.s32 %v1423, %v1425
        %v1427 = vrot.slane %v1419, %v1426
        %v1429 = vunpack.c.l.s4 1983009808
        %v1430 = vunpack.c.0.s8 %v1429
        %v1431 = vlaneseq
        %v1432 = vshrl.u32 %v1431, 7
        %v1433 = vsub.s32 %v1430, %v1432
        %v1434 = vrot.slane %v1420, %v1433
        %v1435 = vcombine.low %v1411, %v1427
        %v1436 = vcombine.high %v1411, %v1427
        %v1438 = vunpack.c.l.s4 1934713408
        %v1439 = vunpack.c.0.s8 %v1438
        %v1440 = vlaneseq
        %v1441 = vshrl.u32 %v1440, 7
        %v1442 = vsub.s32 %v1439, %v1441
        %v1443 = vrot.slane %v1435, %v1442
        %v1445 = vunpack.c.l.s4 1934713408
        %v1446 = vunpack.c.0.s8 %v1445
        %v1447 = vlaneseq
        %v1448 = vshrl.u32 %v1447, 7
        %v1449 = vsub.s32 %v1446, %v1448
        %v1450 = vrot.slane %v1436, %v1449
        %v1451 = vcombine.low %v1418, %v1434
        %v1452 = vcombine.high %v1418, %v1434
        %v1454 = vunpack.c.l.s4 1934713408
        %v1455 = vunpack.c.0.s8 %v1454
        %v1456 = vlaneseq
        %v1457 = vshrl.u32 %v1456, 7
        %v1458 = vsub.s32 %v1455, %v1457
        %v1459 = vrot.slane %v1451, %v1458
        %v1461 = vunpack.c.l.s4 1934713408
        %v1462 = vunpack.c.0.s8 %v1461
        %v1463 = vlaneseq
        %v1464 = vshrl.u32 %v1463, 7
        %v1465 = vsub.s32 %v1462, %v1464
        %v1466 = vrot.slane %v1452, %v1465
        %v1467 = vcombine.high %v1443, 0.0
        %v1468 = vcombine.high %v1450, 0.0
        %v1469 = vcombine.high %v1459, 0.0
        %v1470 = vcombine.high %v1466, 0.0
        %1472 = vrot.lane.b32.xlu0 %v1263, 32
        %v1473 = vpop.permute.xlu0 %1472
        %1476 = vrot.lane.b32.xlu0 %v1246, 64
        %v1477 = vpop.permute.xlu0 %1476
        %1480 = vrot.lane.b32.xlu0 %v1264, 96
        %v1481 = vpop.permute.xlu0 %1480
        %1484 = vrot.lane.b32.xlu0 %v1265, 32
        %v1485 = vpop.permute.xlu0 %1484
        %1488 = vrot.lane.b32.xlu0 %v1262, 64
        %v1489 = vpop.permute.xlu0 %1488
        %1492 = vrot.lane.b32.xlu0 %v1266, 96
        %v1493 = vpop.permute.xlu0 %1492
        %1496 = vrot.lane.b32.xlu0 %v1331, 32
        %v1497 = vpop.permute.xlu0 %1496
        %1500 = vrot.lane.b32.xlu0 %v1314, 64
        %v1501 = vpop.permute.xlu0 %1500
        %1504 = vrot.lane.b32.xlu0 %v1332, 96
        %v1505 = vpop.permute.xlu0 %1504
        %1508 = vrot.lane.b32.xlu0 %v1333, 32
        %v1509 = vpop.permute.xlu0 %1508
        %1512 = vrot.lane.b32.xlu0 %v1330, 64
        %v1513 = vpop.permute.xlu0 %1512
        %1516 = vrot.lane.b32.xlu0 %v1334, 96
        %v1517 = vpop.permute.xlu0 %1516
        %1520 = vrot.lane.b32.xlu0 %v1399, 32
        %v1521 = vpop.permute.xlu0 %1520
        %1524 = vrot.lane.b32.xlu0 %v1382, 64
        %v1525 = vpop.permute.xlu0 %1524
        %1528 = vrot.lane.b32.xlu0 %v1400, 96
        %v1529 = vpop.permute.xlu0 %1528
        %1532 = vrot.lane.b32.xlu0 %v1401, 32
        %v1533 = vpop.permute.xlu0 %1532
        %1536 = vrot.lane.b32.xlu0 %v1398, 64
        %v1537 = vpop.permute.xlu0 %1536
        %1540 = vrot.lane.b32.xlu0 %v1402, 96
        %v1541 = vpop.permute.xlu0 %1540
        %1544 = vrot.lane.b32.xlu0 %v1467, 32
        %v1545 = vpop.permute.xlu0 %1544
        %1548 = vrot.lane.b32.xlu0 %v1450, 64
        %v1549 = vpop.permute.xlu0 %1548
        %1552 = vrot.lane.b32.xlu0 %v1468, 96
        %v1553 = vpop.permute.xlu0 %1552
        %1556 = vrot.lane.b32.xlu0 %v1469, 32
        %v1557 = vpop.permute.xlu0 %1556
        %1560 = vrot.lane.b32.xlu0 %v1466, 64
        %v1561 = vpop.permute.xlu0 %1560
        %1564 = vrot.lane.b32.xlu0 %v1470, 96
        %v1565 = vpop.permute.xlu0 %1564
        %v1567 = vsel %vm580, %v1239, %v1473
        %v1568 = vsel %vm582, %v1567, %v1477
        %v1569 = vsel %vm584, %v1568, %v1481
        %v1570 = vsel %vm580, %v1255, %v1485
        %v1571 = vsel %vm582, %v1570, %v1489
        %v1572 = vsel %vm584, %v1571, %v1493
        %v1573 = vsel %vm580, %v1307, %v1497
        %v1574 = vsel %vm582, %v1573, %v1501
        %v1575 = vsel %vm584, %v1574, %v1505
        %v1576 = vsel %vm580, %v1323, %v1509
        %v1577 = vsel %vm582, %v1576, %v1513
        %v1578 = vsel %vm584, %v1577, %v1517
        %v1579 = vsel %vm580, %v1375, %v1521
        %v1580 = vsel %vm582, %v1579, %v1525
        %v1581 = vsel %vm584, %v1580, %v1529
        %v1582 = vsel %vm580, %v1391, %v1533
        %v1583 = vsel %vm582, %v1582, %v1537
        %v1584 = vsel %vm584, %v1583, %v1541
        %v1585 = vsel %vm580, %v1443, %v1545
        %v1586 = vsel %vm582, %v1585, %v1549
        %v1587 = vsel %vm584, %v1586, %v1553
        %v1588 = vsel %vm580, %v1459, %v1557
        %v1589 = vsel %vm582, %v1588, %v1561
        %v1590 = vsel %vm584, %v1589, %v1565
        %1591 = vst [vmem:[#allocation2 + $0x40] sm:$0xf] %v1569
        %1592 = vst [vmem:[#allocation2 + $0x48] sm:$0xf] %v1572
        %1593 = vst [vmem:[#allocation2 + $0x50] sm:$0xf] %v1575
        %1594 = vst [vmem:[#allocation2 + $0x58] sm:$0xf] %v1578
        %1595 = vst [vmem:[#allocation2 + $0x60] sm:$0xf] %v1581
        %1596 = vst [vmem:[#allocation2 + $0x68] sm:$0xf] %v1584
        %1597 = vst [vmem:[#allocation2 + $0x70] sm:$0xf] %v1587
        %1598 = vst [vmem:[#allocation2 + $0x78] sm:$0xf] %v1590
        %v1599 = vld [vmem:[%s195 + $0x1] sm:$0xff]
        %v1600 = vld [vmem:[%s195 + $0x9] sm:$0xff]
        %v1601 = vld [vmem:[%s195 + $0x11] sm:$0xff]
        %v1602 = vld [vmem:[%s195 + $0x19] sm:$0xff]
        %v1603 = vld [vmem:[%s195 + $0x29] sm:$0xff]
        %v1604 = vld [vmem:[%s195 + $0x31] sm:$0xff]
        %v1605 = vld [vmem:[%s195 + $0x39] sm:$0xff]
        %v1606 = vld [vmem:[%s195 + $0x41] sm:$0xff]
        %v1607 = vld [vmem:[%s195 + $0x51] sm:$0xff]
        %v1608 = vld [vmem:[%s195 + $0x59] sm:$0xff]
        %v1609 = vld [vmem:[%s195 + $0x61] sm:$0xff]
        %v1610 = vld [vmem:[%s195 + $0x69] sm:$0xff]
        %v1611 = vld [vmem:[%s195 + $0x79] sm:$0xff]
        %v1612 = vld [vmem:[%s195 + $0x81] sm:$0xff]
        %v1613 = vld [vmem:[%s195 + $0x89] sm:$0xff]
        %v1614 = vld [vmem:[%s195 + $0x91] sm:$0xff]
        %v1615 = vcombine.low %v1599, %v1607
        %v1616 = vcombine.high %v1599, %v1607
        %v1618 = vunpack.c.l.s4 1983009808
        %v1619 = vunpack.c.0.s8 %v1618
        %v1620 = vlaneseq
        %v1621 = vshrl.u32 %v1620, 7
        %v1622 = vsub.s32 %v1619, %v1621
        %v1623 = vrot.slane %v1615, %v1622
        %v1625 = vunpack.c.l.s4 1983009808
        %v1626 = vunpack.c.0.s8 %v1625
        %v1627 = vlaneseq
        %v1628 = vshrl.u32 %v1627, 7
        %v1629 = vsub.s32 %v1626, %v1628
        %v1630 = vrot.slane %v1616, %v1629
        %v1631 = vcombine.low %v1603, %v1611
        %v1632 = vcombine.high %v1603, %v1611
        %v1634 = vunpack.c.l.s4 1983009808
        %v1635 = vunpack.c.0.s8 %v1634
        %v1636 = vlaneseq
        %v1637 = vshrl.u32 %v1636, 7
        %v1638 = vsub.s32 %v1635, %v1637
        %v1639 = vrot.slane %v1631, %v1638
        %v1641 = vunpack.c.l.s4 1983009808
        %v1642 = vunpack.c.0.s8 %v1641
        %v1643 = vlaneseq
        %v1644 = vshrl.u32 %v1643, 7
        %v1645 = vsub.s32 %v1642, %v1644
        %v1646 = vrot.slane %v1632, %v1645
        %v1647 = vcombine.low %v1623, %v1639
        %v1648 = vcombine.high %v1623, %v1639
        %v1650 = vunpack.c.l.s4 1934713408
        %v1651 = vunpack.c.0.s8 %v1650
        %v1652 = vlaneseq
        %v1653 = vshrl.u32 %v1652, 7
        %v1654 = vsub.s32 %v1651, %v1653
        %v1655 = vrot.slane %v1647, %v1654
        %v1657 = vunpack.c.l.s4 1934713408
        %v1658 = vunpack.c.0.s8 %v1657
        %v1659 = vlaneseq
        %v1660 = vshrl.u32 %v1659, 7
        %v1661 = vsub.s32 %v1658, %v1660
        %v1662 = vrot.slane %v1648, %v1661
        %v1663 = vcombine.low %v1630, %v1646
        %v1664 = vcombine.high %v1630, %v1646
        %v1666 = vunpack.c.l.s4 1934713408
        %v1667 = vunpack.c.0.s8 %v1666
        %v1668 = vlaneseq
        %v1669 = vshrl.u32 %v1668, 7
        %v1670 = vsub.s32 %v1667, %v1669
        %v1671 = vrot.slane %v1663, %v1670
        %v1673 = vunpack.c.l.s4 1934713408
        %v1674 = vunpack.c.0.s8 %v1673
        %v1675 = vlaneseq
        %v1676 = vshrl.u32 %v1675, 7
        %v1677 = vsub.s32 %v1674, %v1676
        %v1678 = vrot.slane %v1664, %v1677
        %v1679 = vcombine.high %v1655, 0.0
        %v1680 = vcombine.high %v1662, 0.0
        %v1681 = vcombine.high %v1671, 0.0
        %v1682 = vcombine.high %v1678, 0.0
        %v1683 = vcombine.low %v1600, %v1608
        %v1684 = vcombine.high %v1600, %v1608
        %v1686 = vunpack.c.l.s4 1983009808
        %v1687 = vunpack.c.0.s8 %v1686
        %v1688 = vlaneseq
        %v1689 = vshrl.u32 %v1688, 7
        %v1690 = vsub.s32 %v1687, %v1689
        %v1691 = vrot.slane %v1683, %v1690
        %v1693 = vunpack.c.l.s4 1983009808
        %v1694 = vunpack.c.0.s8 %v1693
        %v1695 = vlaneseq
        %v1696 = vshrl.u32 %v1695, 7
        %v1697 = vsub.s32 %v1694, %v1696
        %v1698 = vrot.slane %v1684, %v1697
        %v1699 = vcombine.low %v1604, %v1612
        %v1700 = vcombine.high %v1604, %v1612
        %v1702 = vunpack.c.l.s4 1983009808
        %v1703 = vunpack.c.0.s8 %v1702
        %v1704 = vlaneseq
        %v1705 = vshrl.u32 %v1704, 7
        %v1706 = vsub.s32 %v1703, %v1705
        %v1707 = vrot.slane %v1699, %v1706
        %v1709 = vunpack.c.l.s4 1983009808
        %v1710 = vunpack.c.0.s8 %v1709
        %v1711 = vlaneseq
        %v1712 = vshrl.u32 %v1711, 7
        %v1713 = vsub.s32 %v1710, %v1712
        %v1714 = vrot.slane %v1700, %v1713
        %v1715 = vcombine.low %v1691, %v1707
        %v1716 = vcombine.high %v1691, %v1707
        %v1718 = vunpack.c.l.s4 1934713408
        %v1719 = vunpack.c.0.s8 %v1718
        %v1720 = vlaneseq
        %v1721 = vshrl.u32 %v1720, 7
        %v1722 = vsub.s32 %v1719, %v1721
        %v1723 = vrot.slane %v1715, %v1722
        %v1725 = vunpack.c.l.s4 1934713408
        %v1726 = vunpack.c.0.s8 %v1725
        %v1727 = vlaneseq
        %v1728 = vshrl.u32 %v1727, 7
        %v1729 = vsub.s32 %v1726, %v1728
        %v1730 = vrot.slane %v1716, %v1729
        %v1731 = vcombine.low %v1698, %v1714
        %v1732 = vcombine.high %v1698, %v1714
        %v1734 = vunpack.c.l.s4 1934713408
        %v1735 = vunpack.c.0.s8 %v1734
        %v1736 = vlaneseq
        %v1737 = vshrl.u32 %v1736, 7
        %v1738 = vsub.s32 %v1735, %v1737
        %v1739 = vrot.slane %v1731, %v1738
        %v1741 = vunpack.c.l.s4 1934713408
        %v1742 = vunpack.c.0.s8 %v1741
        %v1743 = vlaneseq
        %v1744 = vshrl.u32 %v1743, 7
        %v1745 = vsub.s32 %v1742, %v1744
        %v1746 = vrot.slane %v1732, %v1745
        %v1747 = vcombine.high %v1723, 0.0
        %v1748 = vcombine.high %v1730, 0.0
        %v1749 = vcombine.high %v1739, 0.0
        %v1750 = vcombine.high %v1746, 0.0
        %v1751 = vcombine.low %v1601, %v1609
        %v1752 = vcombine.high %v1601, %v1609
        %v1754 = vunpack.c.l.s4 1983009808
        %v1755 = vunpack.c.0.s8 %v1754
        %v1756 = vlaneseq
        %v1757 = vshrl.u32 %v1756, 7
        %v1758 = vsub.s32 %v1755, %v1757
        %v1759 = vrot.slane %v1751, %v1758
        %v1761 = vunpack.c.l.s4 1983009808
        %v1762 = vunpack.c.0.s8 %v1761
        %v1763 = vlaneseq
        %v1764 = vshrl.u32 %v1763, 7
        %v1765 = vsub.s32 %v1762, %v1764
        %v1766 = vrot.slane %v1752, %v1765
        %v1767 = vcombine.low %v1605, %v1613
        %v1768 = vcombine.high %v1605, %v1613
        %v1770 = vunpack.c.l.s4 1983009808
        %v1771 = vunpack.c.0.s8 %v1770
        %v1772 = vlaneseq
        %v1773 = vshrl.u32 %v1772, 7
        %v1774 = vsub.s32 %v1771, %v1773
        %v1775 = vrot.slane %v1767, %v1774
        %v1777 = vunpack.c.l.s4 1983009808
        %v1778 = vunpack.c.0.s8 %v1777
        %v1779 = vlaneseq
        %v1780 = vshrl.u32 %v1779, 7
        %v1781 = vsub.s32 %v1778, %v1780
        %v1782 = vrot.slane %v1768, %v1781
        %v1783 = vcombine.low %v1759, %v1775
        %v1784 = vcombine.high %v1759, %v1775
        %v1786 = vunpack.c.l.s4 1934713408
        %v1787 = vunpack.c.0.s8 %v1786
        %v1788 = vlaneseq
        %v1789 = vshrl.u32 %v1788, 7
        %v1790 = vsub.s32 %v1787, %v1789
        %v1791 = vrot.slane %v1783, %v1790
        %v1793 = vunpack.c.l.s4 1934713408
        %v1794 = vunpack.c.0.s8 %v1793
        %v1795 = vlaneseq
        %v1796 = vshrl.u32 %v1795, 7
        %v1797 = vsub.s32 %v1794, %v1796
        %v1798 = vrot.slane %v1784, %v1797
        %v1799 = vcombine.low %v1766, %v1782
        %v1800 = vcombine.high %v1766, %v1782
        %v1802 = vunpack.c.l.s4 1934713408
        %v1803 = vunpack.c.0.s8 %v1802
        %v1804 = vlaneseq
        %v1805 = vshrl.u32 %v1804, 7
        %v1806 = vsub.s32 %v1803, %v1805
        %v1807 = vrot.slane %v1799, %v1806
        %v1809 = vunpack.c.l.s4 1934713408
        %v1810 = vunpack.c.0.s8 %v1809
        %v1811 = vlaneseq
        %v1812 = vshrl.u32 %v1811, 7
        %v1813 = vsub.s32 %v1810, %v1812
        %v1814 = vrot.slane %v1800, %v1813
        %v1815 = vcombine.high %v1791, 0.0
        %v1816 = vcombine.high %v1798, 0.0
        %v1817 = vcombine.high %v1807, 0.0
        %v1818 = vcombine.high %v1814, 0.0
        %v1819 = vcombine.low %v1602, %v1610
        %v1820 = vcombine.high %v1602, %v1610
        %v1822 = vunpack.c.l.s4 1983009808
        %v1823 = vunpack.c.0.s8 %v1822
        %v1824 = vlaneseq
        %v1825 = vshrl.u32 %v1824, 7
        %v1826 = vsub.s32 %v1823, %v1825
        %v1827 = vrot.slane %v1819, %v1826
        %v1829 = vunpack.c.l.s4 1983009808
        %v1830 = vunpack.c.0.s8 %v1829
        %v1831 = vlaneseq
        %v1832 = vshrl.u32 %v1831, 7
        %v1833 = vsub.s32 %v1830, %v1832
        %v1834 = vrot.slane %v1820, %v1833
        %v1835 = vcombine.low %v1606, %v1614
        %v1836 = vcombine.high %v1606, %v1614
        %v1838 = vunpack.c.l.s4 1983009808
        %v1839 = vunpack.c.0.s8 %v1838
        %v1840 = vlaneseq
        %v1841 = vshrl.u32 %v1840, 7
        %v1842 = vsub.s32 %v1839, %v1841
        %v1843 = vrot.slane %v1835, %v1842
        %v1845 = vunpack.c.l.s4 1983009808
        %v1846 = vunpack.c.0.s8 %v1845
        %v1847 = vlaneseq
        %v1848 = vshrl.u32 %v1847, 7
        %v1849 = vsub.s32 %v1846, %v1848
        %v1850 = vrot.slane %v1836, %v1849
        %v1851 = vcombine.low %v1827, %v1843
        %v1852 = vcombine.high %v1827, %v1843
        %v1854 = vunpack.c.l.s4 1934713408
        %v1855 = vunpack.c.0.s8 %v1854
        %v1856 = vlaneseq
        %v1857 = vshrl.u32 %v1856, 7
        %v1858 = vsub.s32 %v1855, %v1857
        %v1859 = vrot.slane %v1851, %v1858
        %v1861 = vunpack.c.l.s4 1934713408
        %v1862 = vunpack.c.0.s8 %v1861
        %v1863 = vlaneseq
        %v1864 = vshrl.u32 %v1863, 7
        %v1865 = vsub.s32 %v1862, %v1864
        %v1866 = vrot.slane %v1852, %v1865
        %v1867 = vcombine.low %v1834, %v1850
        %v1868 = vcombine.high %v1834, %v1850
        %v1870 = vunpack.c.l.s4 1934713408
        %v1871 = vunpack.c.0.s8 %v1870
        %v1872 = vlaneseq
        %v1873 = vshrl.u32 %v1872, 7
        %v1874 = vsub.s32 %v1871, %v1873
        %v1875 = vrot.slane %v1867, %v1874
        %v1877 = vunpack.c.l.s4 1934713408
        %v1878 = vunpack.c.0.s8 %v1877
        %v1879 = vlaneseq
        %v1880 = vshrl.u32 %v1879, 7
        %v1881 = vsub.s32 %v1878, %v1880
        %v1882 = vrot.slane %v1868, %v1881
        %v1883 = vcombine.high %v1859, 0.0
        %v1884 = vcombine.high %v1866, 0.0
        %v1885 = vcombine.high %v1875, 0.0
        %v1886 = vcombine.high %v1882, 0.0
        %1888 = vrot.lane.b32.xlu0 %v1679, 32
        %v1889 = vpop.permute.xlu0 %1888
        %1892 = vrot.lane.b32.xlu0 %v1662, 64
        %v1893 = vpop.permute.xlu0 %1892
        %1896 = vrot.lane.b32.xlu0 %v1680, 96
        %v1897 = vpop.permute.xlu0 %1896
        %1900 = vrot.lane.b32.xlu0 %v1681, 32
        %v1901 = vpop.permute.xlu0 %1900
        %1904 = vrot.lane.b32.xlu0 %v1678, 64
        %v1905 = vpop.permute.xlu0 %1904
        %1908 = vrot.lane.b32.xlu0 %v1682, 96
        %v1909 = vpop.permute.xlu0 %1908
        %1912 = vrot.lane.b32.xlu0 %v1747, 32
        %v1913 = vpop.permute.xlu0 %1912
        %1916 = vrot.lane.b32.xlu0 %v1730, 64
        %v1917 = vpop.permute.xlu0 %1916
        %1920 = vrot.lane.b32.xlu0 %v1748, 96
        %v1921 = vpop.permute.xlu0 %1920
        %1924 = vrot.lane.b32.xlu0 %v1749, 32
        %v1925 = vpop.permute.xlu0 %1924
        %1928 = vrot.lane.b32.xlu0 %v1746, 64
        %v1929 = vpop.permute.xlu0 %1928
        %1932 = vrot.lane.b32.xlu0 %v1750, 96
        %v1933 = vpop.permute.xlu0 %1932
        %1936 = vrot.lane.b32.xlu0 %v1815, 32
        %v1937 = vpop.permute.xlu0 %1936
        %1940 = vrot.lane.b32.xlu0 %v1798, 64
        %v1941 = vpop.permute.xlu0 %1940
        %1944 = vrot.lane.b32.xlu0 %v1816, 96
        %v1945 = vpop.permute.xlu0 %1944
        %1948 = vrot.lane.b32.xlu0 %v1817, 32
        %v1949 = vpop.permute.xlu0 %1948
        %1952 = vrot.lane.b32.xlu0 %v1814, 64
        %v1953 = vpop.permute.xlu0 %1952
        %1956 = vrot.lane.b32.xlu0 %v1818, 96
        %v1957 = vpop.permute.xlu0 %1956
        %1960 = vrot.lane.b32.xlu0 %v1883, 32
        %v1961 = vpop.permute.xlu0 %1960
        %1964 = vrot.lane.b32.xlu0 %v1866, 64
        %v1965 = vpop.permute.xlu0 %1964
        %1968 = vrot.lane.b32.xlu0 %v1884, 96
        %v1969 = vpop.permute.xlu0 %1968
        %1972 = vrot.lane.b32.xlu0 %v1885, 32
        %v1973 = vpop.permute.xlu0 %1972
        %1976 = vrot.lane.b32.xlu0 %v1882, 64
        %v1977 = vpop.permute.xlu0 %1976
        %1980 = vrot.lane.b32.xlu0 %v1886, 96
        %v1981 = vpop.permute.xlu0 %1980
        %v1983 = vsel %vm580, %v1655, %v1889
        %v1984 = vsel %vm582, %v1983, %v1893
        %v1985 = vsel %vm584, %v1984, %v1897
        %v1986 = vsel %vm580, %v1671, %v1901
        %v1987 = vsel %vm582, %v1986, %v1905
        %v1988 = vsel %vm584, %v1987, %v1909
        %v1989 = vsel %vm580, %v1723, %v1913
        %v1990 = vsel %vm582, %v1989, %v1917
        %v1991 = vsel %vm584, %v1990, %v1921
        %v1992 = vsel %vm580, %v1739, %v1925
        %v1993 = vsel %vm582, %v1992, %v1929
        %v1994 = vsel %vm584, %v1993, %v1933
        %v1995 = vsel %vm580, %v1791, %v1937
        %v1996 = vsel %vm582, %v1995, %v1941
        %v1997 = vsel %vm584, %v1996, %v1945
        %v1998 = vsel %vm580, %v1807, %v1949
        %v1999 = vsel %vm582, %v1998, %v1953
        %v2000 = vsel %vm584, %v1999, %v1957
        %v2001 = vsel %vm580, %v1859, %v1961
        %v2002 = vsel %vm582, %v2001, %v1965
        %v2003 = vsel %vm584, %v2002, %v1969
        %v2004 = vsel %vm580, %v1875, %v1973
        %v2005 = vsel %vm582, %v2004, %v1977
        %v2006 = vsel %vm584, %v2005, %v1981
        %v2015 = vrot.slane %v1985, 4
        %v2016 = vrot.slane %v1988, 4
        %v2017 = vrot.slane %v1991, 4
        %v2018 = vrot.slane %v1994, 4
        %v2019 = vrot.slane %v1997, 4
        %v2020 = vrot.slane %v2000, 4
        %v2021 = vrot.slane %v2003, 4
        %v2022 = vrot.slane %v2006, 4
        %2031 = vst [vmem:[#allocation2 + $0x40] sm:$0xf0] %v2015
        %2032 = vst [vmem:[#allocation2 + $0x48] sm:$0xf0] %v2016
        %2033 = vst [vmem:[#allocation2 + $0x50] sm:$0xf0] %v2017
        %2034 = vst [vmem:[#allocation2 + $0x58] sm:$0xf0] %v2018
        %2035 = vst [vmem:[#allocation2 + $0x60] sm:$0xf0] %v2019
        %2036 = vst [vmem:[#allocation2 + $0x68] sm:$0xf0] %v2020
        %2037 = vst [vmem:[#allocation2 + $0x70] sm:$0xf0] %v2021
        %2038 = vst [vmem:[#allocation2 + $0x78] sm:$0xf0] %v2022
        %v2039 = vld [vmem:[%s195 + $0x1] sm:$0xff]
        %v2040 = vld [vmem:[%s195 + $0x9] sm:$0xff]
        %v2041 = vld [vmem:[%s195 + $0x11] sm:$0xff]
        %v2042 = vld [vmem:[%s195 + $0x19] sm:$0xff]
        %v2043 = vld [vmem:[%s195 + $0x29] sm:$0xff]
        %v2044 = vld [vmem:[%s195 + $0x31] sm:$0xff]
        %v2045 = vld [vmem:[%s195 + $0x39] sm:$0xff]
        %v2046 = vld [vmem:[%s195 + $0x41] sm:$0xff]
        %v2047 = vld [vmem:[%s195 + $0x51] sm:$0xff]
        %v2048 = vld [vmem:[%s195 + $0x59] sm:$0xff]
        %v2049 = vld [vmem:[%s195 + $0x61] sm:$0xff]
        %v2050 = vld [vmem:[%s195 + $0x69] sm:$0xff]
        %v2051 = vld [vmem:[%s195 + $0x79] sm:$0xff]
        %v2052 = vld [vmem:[%s195 + $0x81] sm:$0xff]
        %v2053 = vld [vmem:[%s195 + $0x89] sm:$0xff]
        %v2054 = vld [vmem:[%s195 + $0x91] sm:$0xff]
        %2071 = vrot.lane.b32.xlu0 %v2039, 127
        %v2072 = vpop.permute.xlu0 %2071
        %2073 = vrot.lane.b32.xlu0 %v2040, 127
        %v2074 = vpop.permute.xlu0 %2073
        %2075 = vrot.lane.b32.xlu0 %v2041, 127
        %v2076 = vpop.permute.xlu0 %2075
        %2077 = vrot.lane.b32.xlu0 %v2042, 127
        %v2078 = vpop.permute.xlu0 %2077
        %2079 = vrot.lane.b32.xlu0 %v2043, 127
        %v2080 = vpop.permute.xlu0 %2079
        %2081 = vrot.lane.b32.xlu0 %v2044, 127
        %v2082 = vpop.permute.xlu0 %2081
        %2083 = vrot.lane.b32.xlu0 %v2045, 127
        %v2084 = vpop.permute.xlu0 %2083
        %2085 = vrot.lane.b32.xlu0 %v2046, 127
        %v2086 = vpop.permute.xlu0 %2085
        %2087 = vrot.lane.b32.xlu0 %v2047, 127
        %v2088 = vpop.permute.xlu0 %2087
        %2089 = vrot.lane.b32.xlu0 %v2048, 127
        %v2090 = vpop.permute.xlu0 %2089
        %2091 = vrot.lane.b32.xlu0 %v2049, 127
        %v2092 = vpop.permute.xlu0 %2091
        %2093 = vrot.lane.b32.xlu0 %v2050, 127
        %v2094 = vpop.permute.xlu0 %2093
        %2095 = vrot.lane.b32.xlu0 %v2051, 127
        %v2096 = vpop.permute.xlu0 %2095
        %2097 = vrot.lane.b32.xlu0 %v2052, 127
        %v2098 = vpop.permute.xlu0 %2097
        %2099 = vrot.lane.b32.xlu0 %v2053, 127
        %v2100 = vpop.permute.xlu0 %2099
        %2101 = vrot.lane.b32.xlu0 %v2054, 127
        %v2102 = vpop.permute.xlu0 %2101
        %v2119 = vcombine.low %v2072, %v2088
        %v2120 = vcombine.high %v2072, %v2088
        %v2122 = vunpack.c.l.s4 1983009808
        %v2123 = vunpack.c.0.s8 %v2122
        %v2124 = vlaneseq
        %v2125 = vshrl.u32 %v2124, 7
        %v2126 = vsub.s32 %v2123, %v2125
        %v2127 = vrot.slane %v2119, %v2126
        %v2129 = vunpack.c.l.s4 1983009808
        %v2130 = vunpack.c.0.s8 %v2129
        %v2131 = vlaneseq
        %v2132 = vshrl.u32 %v2131, 7
        %v2133 = vsub.s32 %v2130, %v2132
        %v2134 = vrot.slane %v2120, %v2133
        %v2135 = vcombine.low %v2080, %v2096
        %v2136 = vcombine.high %v2080, %v2096
        %v2138 = vunpack.c.l.s4 1983009808
        %v2139 = vunpack.c.0.s8 %v2138
        %v2140 = vlaneseq
        %v2141 = vshrl.u32 %v2140, 7
        %v2142 = vsub.s32 %v2139, %v2141
        %v2143 = vrot.slane %v2135, %v2142
        %v2145 = vunpack.c.l.s4 1983009808
        %v2146 = vunpack.c.0.s8 %v2145
        %v2147 = vlaneseq
        %v2148 = vshrl.u32 %v2147, 7
        %v2149 = vsub.s32 %v2146, %v2148
        %v2150 = vrot.slane %v2136, %v2149
        %v2151 = vcombine.low %v2127, %v2143
        %v2152 = vcombine.high %v2127, %v2143
        %v2154 = vunpack.c.l.s4 1934713408
        %v2155 = vunpack.c.0.s8 %v2154
        %v2156 = vlaneseq
        %v2157 = vshrl.u32 %v2156, 7
        %v2158 = vsub.s32 %v2155, %v2157
        %v2159 = vrot.slane %v2151, %v2158
        %v2161 = vunpack.c.l.s4 1934713408
        %v2162 = vunpack.c.0.s8 %v2161
        %v2163 = vlaneseq
        %v2164 = vshrl.u32 %v2163, 7
        %v2165 = vsub.s32 %v2162, %v2164
        %v2166 = vrot.slane %v2152, %v2165
        %v2167 = vcombine.low %v2134, %v2150
        %v2168 = vcombine.high %v2134, %v2150
        %v2170 = vunpack.c.l.s4 1934713408
        %v2171 = vunpack.c.0.s8 %v2170
        %v2172 = vlaneseq
        %v2173 = vshrl.u32 %v2172, 7
        %v2174 = vsub.s32 %v2171, %v2173
        %v2175 = vrot.slane %v2167, %v2174
        %v2177 = vunpack.c.l.s4 1934713408
        %v2178 = vunpack.c.0.s8 %v2177
        %v2179 = vlaneseq
        %v2180 = vshrl.u32 %v2179, 7
        %v2181 = vsub.s32 %v2178, %v2180
        %v2182 = vrot.slane %v2168, %v2181
        %v2183 = vcombine.high %v2159, 0.0
        %v2184 = vcombine.high %v2166, 0.0
        %v2185 = vcombine.high %v2175, 0.0
        %v2186 = vcombine.high %v2182, 0.0
        %v2187 = vcombine.low %v2074, %v2090
        %v2188 = vcombine.high %v2074, %v2090
        %v2190 = vunpack.c.l.s4 1983009808
        %v2191 = vunpack.c.0.s8 %v2190
        %v2192 = vlaneseq
        %v2193 = vshrl.u32 %v2192, 7
        %v2194 = vsub.s32 %v2191, %v2193
        %v2195 = vrot.slane %v2187, %v2194
        %v2197 = vunpack.c.l.s4 1983009808
        %v2198 = vunpack.c.0.s8 %v2197
        %v2199 = vlaneseq
        %v2200 = vshrl.u32 %v2199, 7
        %v2201 = vsub.s32 %v2198, %v2200
        %v2202 = vrot.slane %v2188, %v2201
        %v2203 = vcombine.low %v2082, %v2098
        %v2204 = vcombine.high %v2082, %v2098
        %v2206 = vunpack.c.l.s4 1983009808
        %v2207 = vunpack.c.0.s8 %v2206
        %v2208 = vlaneseq
        %v2209 = vshrl.u32 %v2208, 7
        %v2210 = vsub.s32 %v2207, %v2209
        %v2211 = vrot.slane %v2203, %v2210
        %v2213 = vunpack.c.l.s4 1983009808
        %v2214 = vunpack.c.0.s8 %v2213
        %v2215 = vlaneseq
        %v2216 = vshrl.u32 %v2215, 7
        %v2217 = vsub.s32 %v2214, %v2216
        %v2218 = vrot.slane %v2204, %v2217
        %v2219 = vcombine.low %v2195, %v2211
        %v2220 = vcombine.high %v2195, %v2211
        %v2222 = vunpack.c.l.s4 1934713408
        %v2223 = vunpack.c.0.s8 %v2222
        %v2224 = vlaneseq
        %v2225 = vshrl.u32 %v2224, 7
        %v2226 = vsub.s32 %v2223, %v2225
        %v2227 = vrot.slane %v2219, %v2226
        %v2229 = vunpack.c.l.s4 1934713408
        %v2230 = vunpack.c.0.s8 %v2229
        %v2231 = vlaneseq
        %v2232 = vshrl.u32 %v2231, 7
        %v2233 = vsub.s32 %v2230, %v2232
        %v2234 = vrot.slane %v2220, %v2233
        %v2235 = vcombine.low %v2202, %v2218
        %v2236 = vcombine.high %v2202, %v2218
        %v2238 = vunpack.c.l.s4 1934713408
        %v2239 = vunpack.c.0.s8 %v2238
        %v2240 = vlaneseq
        %v2241 = vshrl.u32 %v2240, 7
        %v2242 = vsub.s32 %v2239, %v2241
        %v2243 = vrot.slane %v2235, %v2242
        %v2245 = vunpack.c.l.s4 1934713408
        %v2246 = vunpack.c.0.s8 %v2245
        %v2247 = vlaneseq
        %v2248 = vshrl.u32 %v2247, 7
        %v2249 = vsub.s32 %v2246, %v2248
        %v2250 = vrot.slane %v2236, %v2249
        %v2251 = vcombine.high %v2227, 0.0
        %v2252 = vcombine.high %v2234, 0.0
        %v2253 = vcombine.high %v2243, 0.0
        %v2254 = vcombine.high %v2250, 0.0
        %v2255 = vcombine.low %v2076, %v2092
        %v2256 = vcombine.high %v2076, %v2092
        %v2258 = vunpack.c.l.s4 1983009808
        %v2259 = vunpack.c.0.s8 %v2258
        %v2260 = vlaneseq
        %v2261 = vshrl.u32 %v2260, 7
        %v2262 = vsub.s32 %v2259, %v2261
        %v2263 = vrot.slane %v2255, %v2262
        %v2265 = vunpack.c.l.s4 1983009808
        %v2266 = vunpack.c.0.s8 %v2265
        %v2267 = vlaneseq
        %v2268 = vshrl.u32 %v2267, 7
        %v2269 = vsub.s32 %v2266, %v2268
        %v2270 = vrot.slane %v2256, %v2269
        %v2271 = vcombine.low %v2084, %v2100
        %v2272 = vcombine.high %v2084, %v2100
        %v2274 = vunpack.c.l.s4 1983009808
        %v2275 = vunpack.c.0.s8 %v2274
        %v2276 = vlaneseq
        %v2277 = vshrl.u32 %v2276, 7
        %v2278 = vsub.s32 %v2275, %v2277
        %v2279 = vrot.slane %v2271, %v2278
        %v2281 = vunpack.c.l.s4 1983009808
        %v2282 = vunpack.c.0.s8 %v2281
        %v2283 = vlaneseq
        %v2284 = vshrl.u32 %v2283, 7
        %v2285 = vsub.s32 %v2282, %v2284
        %v2286 = vrot.slane %v2272, %v2285
        %v2287 = vcombine.low %v2263, %v2279
        %v2288 = vcombine.high %v2263, %v2279
        %v2290 = vunpack.c.l.s4 1934713408
        %v2291 = vunpack.c.0.s8 %v2290
        %v2292 = vlaneseq
        %v2293 = vshrl.u32 %v2292, 7
        %v2294 = vsub.s32 %v2291, %v2293
        %v2295 = vrot.slane %v2287, %v2294
        %v2297 = vunpack.c.l.s4 1934713408
        %v2298 = vunpack.c.0.s8 %v2297
        %v2299 = vlaneseq
        %v2300 = vshrl.u32 %v2299, 7
        %v2301 = vsub.s32 %v2298, %v2300
        %v2302 = vrot.slane %v2288, %v2301
        %v2303 = vcombine.low %v2270, %v2286
        %v2304 = vcombine.high %v2270, %v2286
        %v2306 = vunpack.c.l.s4 1934713408
        %v2307 = vunpack.c.0.s8 %v2306
        %v2308 = vlaneseq
        %v2309 = vshrl.u32 %v2308, 7
        %v2310 = vsub.s32 %v2307, %v2309
        %v2311 = vrot.slane %v2303, %v2310
        %v2313 = vunpack.c.l.s4 1934713408
        %v2314 = vunpack.c.0.s8 %v2313
        %v2315 = vlaneseq
        %v2316 = vshrl.u32 %v2315, 7
        %v2317 = vsub.s32 %v2314, %v2316
        %v2318 = vrot.slane %v2304, %v2317
        %v2319 = vcombine.high %v2295, 0.0
        %v2320 = vcombine.high %v2302, 0.0
        %v2321 = vcombine.high %v2311, 0.0
        %v2322 = vcombine.high %v2318, 0.0
        %v2323 = vcombine.low %v2078, %v2094
        %v2324 = vcombine.high %v2078, %v2094
        %v2326 = vunpack.c.l.s4 1983009808
        %v2327 = vunpack.c.0.s8 %v2326
        %v2328 = vlaneseq
        %v2329 = vshrl.u32 %v2328, 7
        %v2330 = vsub.s32 %v2327, %v2329
        %v2331 = vrot.slane %v2323, %v2330
        %v2333 = vunpack.c.l.s4 1983009808
        %v2334 = vunpack.c.0.s8 %v2333
        %v2335 = vlaneseq
        %v2336 = vshrl.u32 %v2335, 7
        %v2337 = vsub.s32 %v2334, %v2336
        %v2338 = vrot.slane %v2324, %v2337
        %v2339 = vcombine.low %v2086, %v2102
        %v2340 = vcombine.high %v2086, %v2102
        %v2342 = vunpack.c.l.s4 1983009808
        %v2343 = vunpack.c.0.s8 %v2342
        %v2344 = vlaneseq
        %v2345 = vshrl.u32 %v2344, 7
        %v2346 = vsub.s32 %v2343, %v2345
        %v2347 = vrot.slane %v2339, %v2346
        %v2349 = vunpack.c.l.s4 1983009808
        %v2350 = vunpack.c.0.s8 %v2349
        %v2351 = vlaneseq
        %v2352 = vshrl.u32 %v2351, 7
        %v2353 = vsub.s32 %v2350, %v2352
        %v2354 = vrot.slane %v2340, %v2353
        %v2355 = vcombine.low %v2331, %v2347
        %v2356 = vcombine.high %v2331, %v2347
        %v2358 = vunpack.c.l.s4 1934713408
        %v2359 = vunpack.c.0.s8 %v2358
        %v2360 = vlaneseq
        %v2361 = vshrl.u32 %v2360, 7
        %v2362 = vsub.s32 %v2359, %v2361
        %v2363 = vrot.slane %v2355, %v2362
        %v2365 = vunpack.c.l.s4 1934713408
        %v2366 = vunpack.c.0.s8 %v2365
        %v2367 = vlaneseq
        %v2368 = vshrl.u32 %v2367, 7
        %v2369 = vsub.s32 %v2366, %v2368
        %v2370 = vrot.slane %v2356, %v2369
        %v2371 = vcombine.low %v2338, %v2354
        %v2372 = vcombine.high %v2338, %v2354
        %v2374 = vunpack.c.l.s4 1934713408
        %v2375 = vunpack.c.0.s8 %v2374
        %v2376 = vlaneseq
        %v2377 = vshrl.u32 %v2376, 7
        %v2378 = vsub.s32 %v2375, %v2377
        %v2379 = vrot.slane %v2371, %v2378
        %v2381 = vunpack.c.l.s4 1934713408
        %v2382 = vunpack.c.0.s8 %v2381
        %v2383 = vlaneseq
        %v2384 = vshrl.u32 %v2383, 7
        %v2385 = vsub.s32 %v2382, %v2384
        %v2386 = vrot.slane %v2372, %v2385
        %v2387 = vcombine.high %v2363, 0.0
        %v2388 = vcombine.high %v2370, 0.0
        %v2389 = vcombine.high %v2379, 0.0
        %v2390 = vcombine.high %v2386, 0.0
        %2392 = vrot.lane.b32.xlu0 %v2183, 32
        %v2393 = vpop.permute.xlu0 %2392
        %2396 = vrot.lane.b32.xlu0 %v2166, 64
        %v2397 = vpop.permute.xlu0 %2396
        %2400 = vrot.lane.b32.xlu0 %v2184, 96
        %v2401 = vpop.permute.xlu0 %2400
        %2404 = vrot.lane.b32.xlu0 %v2185, 32
        %v2405 = vpop.permute.xlu0 %2404
        %2408 = vrot.lane.b32.xlu0 %v2182, 64
        %v2409 = vpop.permute.xlu0 %2408
        %2412 = vrot.lane.b32.xlu0 %v2186, 96
        %v2413 = vpop.permute.xlu0 %2412
        %2416 = vrot.lane.b32.xlu0 %v2251, 32
        %v2417 = vpop.permute.xlu0 %2416
        %2420 = vrot.lane.b32.xlu0 %v2234, 64
        %v2421 = vpop.permute.xlu0 %2420
        %2424 = vrot.lane.b32.xlu0 %v2252, 96
        %v2425 = vpop.permute.xlu0 %2424
        %2428 = vrot.lane.b32.xlu0 %v2253, 32
        %v2429 = vpop.permute.xlu0 %2428
        %2432 = vrot.lane.b32.xlu0 %v2250, 64
        %v2433 = vpop.permute.xlu0 %2432
        %2436 = vrot.lane.b32.xlu0 %v2254, 96
        %v2437 = vpop.permute.xlu0 %2436
        %2440 = vrot.lane.b32.xlu0 %v2319, 32
        %v2441 = vpop.permute.xlu0 %2440
        %2444 = vrot.lane.b32.xlu0 %v2302, 64
        %v2445 = vpop.permute.xlu0 %2444
        %2448 = vrot.lane.b32.xlu0 %v2320, 96
        %v2449 = vpop.permute.xlu0 %2448
        %2452 = vrot.lane.b32.xlu0 %v2321, 32
        %v2453 = vpop.permute.xlu0 %2452
        %2456 = vrot.lane.b32.xlu0 %v2318, 64
        %v2457 = vpop.permute.xlu0 %2456
        %2460 = vrot.lane.b32.xlu0 %v2322, 96
        %v2461 = vpop.permute.xlu0 %2460
        %2464 = vrot.lane.b32.xlu0 %v2387, 32
        %v2465 = vpop.permute.xlu0 %2464
        %2468 = vrot.lane.b32.xlu0 %v2370, 64
        %v2469 = vpop.permute.xlu0 %2468
        %2472 = vrot.lane.b32.xlu0 %v2388, 96
        %v2473 = vpop.permute.xlu0 %2472
        %2476 = vrot.lane.b32.xlu0 %v2389, 32
        %v2477 = vpop.permute.xlu0 %2476
        %2480 = vrot.lane.b32.xlu0 %v2386, 64
        %v2481 = vpop.permute.xlu0 %2480
        %2484 = vrot.lane.b32.xlu0 %v2390, 96
        %v2485 = vpop.permute.xlu0 %2484
        %v2487 = vsel %vm580, %v2159, %v2393
        %v2488 = vsel %vm582, %v2487, %v2397
        %v2489 = vsel %vm584, %v2488, %v2401
        %v2490 = vsel %vm580, %v2175, %v2405
        %v2491 = vsel %vm582, %v2490, %v2409
        %v2492 = vsel %vm584, %v2491, %v2413
        %v2493 = vsel %vm580, %v2227, %v2417
        %v2494 = vsel %vm582, %v2493, %v2421
        %v2495 = vsel %vm584, %v2494, %v2425
        %v2496 = vsel %vm580, %v2243, %v2429
        %v2497 = vsel %vm582, %v2496, %v2433
        %v2498 = vsel %vm584, %v2497, %v2437
        %v2499 = vsel %vm580, %v2295, %v2441
        %v2500 = vsel %vm582, %v2499, %v2445
        %v2501 = vsel %vm584, %v2500, %v2449
        %v2502 = vsel %vm580, %v2311, %v2453
        %v2503 = vsel %vm582, %v2502, %v2457
        %v2504 = vsel %vm584, %v2503, %v2461
        %v2505 = vsel %vm580, %v2363, %v2465
        %v2506 = vsel %vm582, %v2505, %v2469
        %v2507 = vsel %vm584, %v2506, %v2473
        %v2508 = vsel %vm580, %v2379, %v2477
        %v2509 = vsel %vm582, %v2508, %v2481
        %v2510 = vsel %vm584, %v2509, %v2485
        %2511 = vst [vmem:[#allocation2 + $0x80] sm:$0xf] %v2489
        %2512 = vst [vmem:[#allocation2 + $0x88] sm:$0xf] %v2492
        %2513 = vst [vmem:[#allocation2 + $0x90] sm:$0xf] %v2495
        %2514 = vst [vmem:[#allocation2 + $0x98] sm:$0xf] %v2498
        %2515 = vst [vmem:[#allocation2 + $0xa0] sm:$0xf] %v2501
        %2516 = vst [vmem:[#allocation2 + $0xa8] sm:$0xf] %v2504
        %2517 = vst [vmem:[#allocation2 + $0xb0] sm:$0xf] %v2507
        %2518 = vst [vmem:[#allocation2 + $0xb8] sm:$0xf] %v2510
        %v2519 = vld [vmem:[%s195 + $0x1] sm:$0xff]
        %v2520 = vld [vmem:[%s195 + $0x9] sm:$0xff]
        %v2521 = vld [vmem:[%s195 + $0x11] sm:$0xff]
        %v2522 = vld [vmem:[%s195 + $0x19] sm:$0xff]
        %v2523 = vld [vmem:[%s195 + $0x29] sm:$0xff]
        %v2524 = vld [vmem:[%s195 + $0x31] sm:$0xff]
        %v2525 = vld [vmem:[%s195 + $0x39] sm:$0xff]
        %v2526 = vld [vmem:[%s195 + $0x41] sm:$0xff]
        %v2527 = vld [vmem:[%s195 + $0x51] sm:$0xff]
        %v2528 = vld [vmem:[%s195 + $0x59] sm:$0xff]
        %v2529 = vld [vmem:[%s195 + $0x61] sm:$0xff]
        %v2530 = vld [vmem:[%s195 + $0x69] sm:$0xff]
        %v2531 = vld [vmem:[%s195 + $0x79] sm:$0xff]
        %v2532 = vld [vmem:[%s195 + $0x81] sm:$0xff]
        %v2533 = vld [vmem:[%s195 + $0x89] sm:$0xff]
        %v2534 = vld [vmem:[%s195 + $0x91] sm:$0xff]
        %2551 = vrot.lane.b32.xlu0 %v2519, 126
        %v2552 = vpop.permute.xlu0 %2551
        %2553 = vrot.lane.b32.xlu0 %v2520, 126
        %v2554 = vpop.permute.xlu0 %2553
        %2555 = vrot.lane.b32.xlu0 %v2521, 126
        %v2556 = vpop.permute.xlu0 %2555
        %2557 = vrot.lane.b32.xlu0 %v2522, 126
        %v2558 = vpop.permute.xlu0 %2557
        %2559 = vrot.lane.b32.xlu0 %v2523, 126
        %v2560 = vpop.permute.xlu0 %2559
        %2561 = vrot.lane.b32.xlu0 %v2524, 126
        %v2562 = vpop.permute.xlu0 %2561
        %2563 = vrot.lane.b32.xlu0 %v2525, 126
        %v2564 = vpop.permute.xlu0 %2563
        %2565 = vrot.lane.b32.xlu0 %v2526, 126
        %v2566 = vpop.permute.xlu0 %2565
        %2567 = vrot.lane.b32.xlu0 %v2527, 126
        %v2568 = vpop.permute.xlu0 %2567
        %2569 = vrot.lane.b32.xlu0 %v2528, 126
        %v2570 = vpop.permute.xlu0 %2569
        %2571 = vrot.lane.b32.xlu0 %v2529, 126
        %v2572 = vpop.permute.xlu0 %2571
        %2573 = vrot.lane.b32.xlu0 %v2530, 126
        %v2574 = vpop.permute.xlu0 %2573
        %2575 = vrot.lane.b32.xlu0 %v2531, 126
        %v2576 = vpop.permute.xlu0 %2575
        %2577 = vrot.lane.b32.xlu0 %v2532, 126
        %v2578 = vpop.permute.xlu0 %2577
        %2579 = vrot.lane.b32.xlu0 %v2533, 126
        %v2580 = vpop.permute.xlu0 %2579
        %2581 = vrot.lane.b32.xlu0 %v2534, 126
        %v2582 = vpop.permute.xlu0 %2581
        %v2599 = vcombine.low %v2552, %v2568
        %v2600 = vcombine.high %v2552, %v2568
        %v2602 = vunpack.c.l.s4 1983009808
        %v2603 = vunpack.c.0.s8 %v2602
        %v2604 = vlaneseq
        %v2605 = vshrl.u32 %v2604, 7
        %v2606 = vsub.s32 %v2603, %v2605
        %v2607 = vrot.slane %v2599, %v2606
        %v2609 = vunpack.c.l.s4 1983009808
        %v2610 = vunpack.c.0.s8 %v2609
        %v2611 = vlaneseq
        %v2612 = vshrl.u32 %v2611, 7
        %v2613 = vsub.s32 %v2610, %v2612
        %v2614 = vrot.slane %v2600, %v2613
        %v2615 = vcombine.low %v2560, %v2576
        %v2616 = vcombine.high %v2560, %v2576
        %v2618 = vunpack.c.l.s4 1983009808
        %v2619 = vunpack.c.0.s8 %v2618
        %v2620 = vlaneseq
        %v2621 = vshrl.u32 %v2620, 7
        %v2622 = vsub.s32 %v2619, %v2621
        %v2623 = vrot.slane %v2615, %v2622
        %v2625 = vunpack.c.l.s4 1983009808
        %v2626 = vunpack.c.0.s8 %v2625
        %v2627 = vlaneseq
        %v2628 = vshrl.u32 %v2627, 7
        %v2629 = vsub.s32 %v2626, %v2628
        %v2630 = vrot.slane %v2616, %v2629
        %v2631 = vcombine.low %v2607, %v2623
        %v2632 = vcombine.high %v2607, %v2623
        %v2634 = vunpack.c.l.s4 1934713408
        %v2635 = vunpack.c.0.s8 %v2634
        %v2636 = vlaneseq
        %v2637 = vshrl.u32 %v2636, 7
        %v2638 = vsub.s32 %v2635, %v2637
        %v2639 = vrot.slane %v2631, %v2638
        %v2641 = vunpack.c.l.s4 1934713408
        %v2642 = vunpack.c.0.s8 %v2641
        %v2643 = vlaneseq
        %v2644 = vshrl.u32 %v2643, 7
        %v2645 = vsub.s32 %v2642, %v2644
        %v2646 = vrot.slane %v2632, %v2645
        %v2647 = vcombine.low %v2614, %v2630
        %v2648 = vcombine.high %v2614, %v2630
        %v2650 = vunpack.c.l.s4 1934713408
        %v2651 = vunpack.c.0.s8 %v2650
        %v2652 = vlaneseq
        %v2653 = vshrl.u32 %v2652, 7
        %v2654 = vsub.s32 %v2651, %v2653
        %v2655 = vrot.slane %v2647, %v2654
        %v2657 = vunpack.c.l.s4 1934713408
        %v2658 = vunpack.c.0.s8 %v2657
        %v2659 = vlaneseq
        %v2660 = vshrl.u32 %v2659, 7
        %v2661 = vsub.s32 %v2658, %v2660
        %v2662 = vrot.slane %v2648, %v2661
        %v2663 = vcombine.high %v2639, 0.0
        %v2664 = vcombine.high %v2646, 0.0
        %v2665 = vcombine.high %v2655, 0.0
        %v2666 = vcombine.high %v2662, 0.0
        %v2667 = vcombine.low %v2554, %v2570
        %v2668 = vcombine.high %v2554, %v2570
        %v2670 = vunpack.c.l.s4 1983009808
        %v2671 = vunpack.c.0.s8 %v2670
        %v2672 = vlaneseq
        %v2673 = vshrl.u32 %v2672, 7
        %v2674 = vsub.s32 %v2671, %v2673
        %v2675 = vrot.slane %v2667, %v2674
        %v2677 = vunpack.c.l.s4 1983009808
        %v2678 = vunpack.c.0.s8 %v2677
        %v2679 = vlaneseq
        %v2680 = vshrl.u32 %v2679, 7
        %v2681 = vsub.s32 %v2678, %v2680
        %v2682 = vrot.slane %v2668, %v2681
        %v2683 = vcombine.low %v2562, %v2578
        %v2684 = vcombine.high %v2562, %v2578
        %v2686 = vunpack.c.l.s4 1983009808
        %v2687 = vunpack.c.0.s8 %v2686
        %v2688 = vlaneseq
        %v2689 = vshrl.u32 %v2688, 7
        %v2690 = vsub.s32 %v2687, %v2689
        %v2691 = vrot.slane %v2683, %v2690
        %v2693 = vunpack.c.l.s4 1983009808
        %v2694 = vunpack.c.0.s8 %v2693
        %v2695 = vlaneseq
        %v2696 = vshrl.u32 %v2695, 7
        %v2697 = vsub.s32 %v2694, %v2696
        %v2698 = vrot.slane %v2684, %v2697
        %v2699 = vcombine.low %v2675, %v2691
        %v2700 = vcombine.high %v2675, %v2691
        %v2702 = vunpack.c.l.s4 1934713408
        %v2703 = vunpack.c.0.s8 %v2702
        %v2704 = vlaneseq
        %v2705 = vshrl.u32 %v2704, 7
        %v2706 = vsub.s32 %v2703, %v2705
        %v2707 = vrot.slane %v2699, %v2706
        %v2709 = vunpack.c.l.s4 1934713408
        %v2710 = vunpack.c.0.s8 %v2709
        %v2711 = vlaneseq
        %v2712 = vshrl.u32 %v2711, 7
        %v2713 = vsub.s32 %v2710, %v2712
        %v2714 = vrot.slane %v2700, %v2713
        %v2715 = vcombine.low %v2682, %v2698
        %v2716 = vcombine.high %v2682, %v2698
        %v2718 = vunpack.c.l.s4 1934713408
        %v2719 = vunpack.c.0.s8 %v2718
        %v2720 = vlaneseq
        %v2721 = vshrl.u32 %v2720, 7
        %v2722 = vsub.s32 %v2719, %v2721
        %v2723 = vrot.slane %v2715, %v2722
        %v2725 = vunpack.c.l.s4 1934713408
        %v2726 = vunpack.c.0.s8 %v2725
        %v2727 = vlaneseq
        %v2728 = vshrl.u32 %v2727, 7
        %v2729 = vsub.s32 %v2726, %v2728
        %v2730 = vrot.slane %v2716, %v2729
        %v2731 = vcombine.high %v2707, 0.0
        %v2732 = vcombine.high %v2714, 0.0
        %v2733 = vcombine.high %v2723, 0.0
        %v2734 = vcombine.high %v2730, 0.0
        %v2735 = vcombine.low %v2556, %v2572
        %v2736 = vcombine.high %v2556, %v2572
        %v2738 = vunpack.c.l.s4 1983009808
        %v2739 = vunpack.c.0.s8 %v2738
        %v2740 = vlaneseq
        %v2741 = vshrl.u32 %v2740, 7
        %v2742 = vsub.s32 %v2739, %v2741
        %v2743 = vrot.slane %v2735, %v2742
        %v2745 = vunpack.c.l.s4 1983009808
        %v2746 = vunpack.c.0.s8 %v2745
        %v2747 = vlaneseq
        %v2748 = vshrl.u32 %v2747, 7
        %v2749 = vsub.s32 %v2746, %v2748
        %v2750 = vrot.slane %v2736, %v2749
        %v2751 = vcombine.low %v2564, %v2580
        %v2752 = vcombine.high %v2564, %v2580
        %v2754 = vunpack.c.l.s4 1983009808
        %v2755 = vunpack.c.0.s8 %v2754
        %v2756 = vlaneseq
        %v2757 = vshrl.u32 %v2756, 7
        %v2758 = vsub.s32 %v2755, %v2757
        %v2759 = vrot.slane %v2751, %v2758
        %v2761 = vunpack.c.l.s4 1983009808
        %v2762 = vunpack.c.0.s8 %v2761
        %v2763 = vlaneseq
        %v2764 = vshrl.u32 %v2763, 7
        %v2765 = vsub.s32 %v2762, %v2764
        %v2766 = vrot.slane %v2752, %v2765
        %v2767 = vcombine.low %v2743, %v2759
        %v2768 = vcombine.high %v2743, %v2759
        %v2770 = vunpack.c.l.s4 1934713408
        %v2771 = vunpack.c.0.s8 %v2770
        %v2772 = vlaneseq
        %v2773 = vshrl.u32 %v2772, 7
        %v2774 = vsub.s32 %v2771, %v2773
        %v2775 = vrot.slane %v2767, %v2774
        %v2777 = vunpack.c.l.s4 1934713408
        %v2778 = vunpack.c.0.s8 %v2777
        %v2779 = vlaneseq
        %v2780 = vshrl.u32 %v2779, 7
        %v2781 = vsub.s32 %v2778, %v2780
        %v2782 = vrot.slane %v2768, %v2781
        %v2783 = vcombine.low %v2750, %v2766
        %v2784 = vcombine.high %v2750, %v2766
        %v2786 = vunpack.c.l.s4 1934713408
        %v2787 = vunpack.c.0.s8 %v2786
        %v2788 = vlaneseq
        %v2789 = vshrl.u32 %v2788, 7
        %v2790 = vsub.s32 %v2787, %v2789
        %v2791 = vrot.slane %v2783, %v2790
        %v2793 = vunpack.c.l.s4 1934713408
        %v2794 = vunpack.c.0.s8 %v2793
        %v2795 = vlaneseq
        %v2796 = vshrl.u32 %v2795, 7
        %v2797 = vsub.s32 %v2794, %v2796
        %v2798 = vrot.slane %v2784, %v2797
        %v2799 = vcombine.high %v2775, 0.0
        %v2800 = vcombine.high %v2782, 0.0
        %v2801 = vcombine.high %v2791, 0.0
        %v2802 = vcombine.high %v2798, 0.0
        %v2803 = vcombine.low %v2558, %v2574
        %v2804 = vcombine.high %v2558, %v2574
        %v2806 = vunpack.c.l.s4 1983009808
        %v2807 = vunpack.c.0.s8 %v2806
        %v2808 = vlaneseq
        %v2809 = vshrl.u32 %v2808, 7
        %v2810 = vsub.s32 %v2807, %v2809
        %v2811 = vrot.slane %v2803, %v2810
        %v2813 = vunpack.c.l.s4 1983009808
        %v2814 = vunpack.c.0.s8 %v2813
        %v2815 = vlaneseq
        %v2816 = vshrl.u32 %v2815, 7
        %v2817 = vsub.s32 %v2814, %v2816
        %v2818 = vrot.slane %v2804, %v2817
        %v2819 = vcombine.low %v2566, %v2582
        %v2820 = vcombine.high %v2566, %v2582
        %v2822 = vunpack.c.l.s4 1983009808
        %v2823 = vunpack.c.0.s8 %v2822
        %v2824 = vlaneseq
        %v2825 = vshrl.u32 %v2824, 7
        %v2826 = vsub.s32 %v2823, %v2825
        %v2827 = vrot.slane %v2819, %v2826
        %v2829 = vunpack.c.l.s4 1983009808
        %v2830 = vunpack.c.0.s8 %v2829
        %v2831 = vlaneseq
        %v2832 = vshrl.u32 %v2831, 7
        %v2833 = vsub.s32 %v2830, %v2832
        %v2834 = vrot.slane %v2820, %v2833
        %v2835 = vcombine.low %v2811, %v2827
        %v2836 = vcombine.high %v2811, %v2827
        %v2838 = vunpack.c.l.s4 1934713408
        %v2839 = vunpack.c.0.s8 %v2838
        %v2840 = vlaneseq
        %v2841 = vshrl.u32 %v2840, 7
        %v2842 = vsub.s32 %v2839, %v2841
        %v2843 = vrot.slane %v2835, %v2842
        %v2845 = vunpack.c.l.s4 1934713408
        %v2846 = vunpack.c.0.s8 %v2845
        %v2847 = vlaneseq
        %v2848 = vshrl.u32 %v2847, 7
        %v2849 = vsub.s32 %v2846, %v2848
        %v2850 = vrot.slane %v2836, %v2849
        %v2851 = vcombine.low %v2818, %v2834
        %v2852 = vcombine.high %v2818, %v2834
        %v2854 = vunpack.c.l.s4 1934713408
        %v2855 = vunpack.c.0.s8 %v2854
        %v2856 = vlaneseq
        %v2857 = vshrl.u32 %v2856, 7
        %v2858 = vsub.s32 %v2855, %v2857
        %v2859 = vrot.slane %v2851, %v2858
        %v2861 = vunpack.c.l.s4 1934713408
        %v2862 = vunpack.c.0.s8 %v2861
        %v2863 = vlaneseq
        %v2864 = vshrl.u32 %v2863, 7
        %v2865 = vsub.s32 %v2862, %v2864
        %v2866 = vrot.slane %v2852, %v2865
        %v2867 = vcombine.high %v2843, 0.0
        %v2868 = vcombine.high %v2850, 0.0
        %v2869 = vcombine.high %v2859, 0.0
        %v2870 = vcombine.high %v2866, 0.0
        %2872 = vrot.lane.b32.xlu0 %v2663, 32
        %v2873 = vpop.permute.xlu0 %2872
        %2876 = vrot.lane.b32.xlu0 %v2646, 64
        %v2877 = vpop.permute.xlu0 %2876
        %2880 = vrot.lane.b32.xlu0 %v2664, 96
        %v2881 = vpop.permute.xlu0 %2880
        %2884 = vrot.lane.b32.xlu0 %v2665, 32
        %v2885 = vpop.permute.xlu0 %2884
        %2888 = vrot.lane.b32.xlu0 %v2662, 64
        %v2889 = vpop.permute.xlu0 %2888
        %2892 = vrot.lane.b32.xlu0 %v2666, 96
        %v2893 = vpop.permute.xlu0 %2892
        %2896 = vrot.lane.b32.xlu0 %v2731, 32
        %v2897 = vpop.permute.xlu0 %2896
        %2900 = vrot.lane.b32.xlu0 %v2714, 64
        %v2901 = vpop.permute.xlu0 %2900
        %2904 = vrot.lane.b32.xlu0 %v2732, 96
        %v2905 = vpop.permute.xlu0 %2904
        %2908 = vrot.lane.b32.xlu0 %v2733, 32
        %v2909 = vpop.permute.xlu0 %2908
        %2912 = vrot.lane.b32.xlu0 %v2730, 64
        %v2913 = vpop.permute.xlu0 %2912
        %2916 = vrot.lane.b32.xlu0 %v2734, 96
        %v2917 = vpop.permute.xlu0 %2916
        %2920 = vrot.lane.b32.xlu0 %v2799, 32
        %v2921 = vpop.permute.xlu0 %2920
        %2924 = vrot.lane.b32.xlu0 %v2782, 64
        %v2925 = vpop.permute.xlu0 %2924
        %2928 = vrot.lane.b32.xlu0 %v2800, 96
        %v2929 = vpop.permute.xlu0 %2928
        %2932 = vrot.lane.b32.xlu0 %v2801, 32
        %v2933 = vpop.permute.xlu0 %2932
        %2936 = vrot.lane.b32.xlu0 %v2798, 64
        %v2937 = vpop.permute.xlu0 %2936
        %2940 = vrot.lane.b32.xlu0 %v2802, 96
        %v2941 = vpop.permute.xlu0 %2940
        %2944 = vrot.lane.b32.xlu0 %v2867, 32
        %v2945 = vpop.permute.xlu0 %2944
        %2948 = vrot.lane.b32.xlu0 %v2850, 64
        %v2949 = vpop.permute.xlu0 %2948
        %2952 = vrot.lane.b32.xlu0 %v2868, 96
        %v2953 = vpop.permute.xlu0 %2952
        %2956 = vrot.lane.b32.xlu0 %v2869, 32
        %v2957 = vpop.permute.xlu0 %2956
        %2960 = vrot.lane.b32.xlu0 %v2866, 64
        %v2961 = vpop.permute.xlu0 %2960
        %2964 = vrot.lane.b32.xlu0 %v2870, 96
        %v2965 = vpop.permute.xlu0 %2964
        %v2967 = vsel %vm580, %v2639, %v2873
        %v2968 = vsel %vm582, %v2967, %v2877
        %v2969 = vsel %vm584, %v2968, %v2881
        %v2970 = vsel %vm580, %v2655, %v2885
        %v2971 = vsel %vm582, %v2970, %v2889
        %v2972 = vsel %vm584, %v2971, %v2893
        %v2973 = vsel %vm580, %v2707, %v2897
        %v2974 = vsel %vm582, %v2973, %v2901
        %v2975 = vsel %vm584, %v2974, %v2905
        %v2976 = vsel %vm580, %v2723, %v2909
        %v2977 = vsel %vm582, %v2976, %v2913
        %v2978 = vsel %vm584, %v2977, %v2917
        %v2979 = vsel %vm580, %v2775, %v2921
        %v2980 = vsel %vm582, %v2979, %v2925
        %v2981 = vsel %vm584, %v2980, %v2929
        %v2982 = vsel %vm580, %v2791, %v2933
        %v2983 = vsel %vm582, %v2982, %v2937
        %v2984 = vsel %vm584, %v2983, %v2941
        %v2985 = vsel %vm580, %v2843, %v2945
        %v2986 = vsel %vm582, %v2985, %v2949
        %v2987 = vsel %vm584, %v2986, %v2953
        %v2988 = vsel %vm580, %v2859, %v2957
        %v2989 = vsel %vm582, %v2988, %v2961
        %v2990 = vsel %vm584, %v2989, %v2965
        %v2999 = vrot.slane %v2969, 4
        %v3000 = vrot.slane %v2972, 4
        %v3001 = vrot.slane %v2975, 4
        %v3002 = vrot.slane %v2978, 4
        %v3003 = vrot.slane %v2981, 4
        %v3004 = vrot.slane %v2984, 4
        %v3005 = vrot.slane %v2987, 4
        %v3006 = vrot.slane %v2990, 4
        %3015 = vst [vmem:[#allocation2 + $0x80] sm:$0xf0] %v2999
        %3016 = vst [vmem:[#allocation2 + $0x88] sm:$0xf0] %v3000
        %3017 = vst [vmem:[#allocation2 + $0x90] sm:$0xf0] %v3001
        %3018 = vst [vmem:[#allocation2 + $0x98] sm:$0xf0] %v3002
        %3019 = vst [vmem:[#allocation2 + $0xa0] sm:$0xf0] %v3003
        %3020 = vst [vmem:[#allocation2 + $0xa8] sm:$0xf0] %v3004
        %3021 = vst [vmem:[#allocation2 + $0xb0] sm:$0xf0] %v3005
        %3022 = vst [vmem:[#allocation2 + $0xb8] sm:$0xf0] %v3006
        %v3023 = vld [vmem:[%s195 + $0x2] sm:$0xff]
        %v3024 = vld [vmem:[%s195 + $0xa] sm:$0xff]
        %v3025 = vld [vmem:[%s195 + $0x12] sm:$0xff]
        %v3026 = vld [vmem:[%s195 + $0x1a] sm:$0xff]
        %v3027 = vld [vmem:[%s195 + $0x2a] sm:$0xff]
        %v3028 = vld [vmem:[%s195 + $0x32] sm:$0xff]
        %v3029 = vld [vmem:[%s195 + $0x3a] sm:$0xff]
        %v3030 = vld [vmem:[%s195 + $0x42] sm:$0xff]
        %v3031 = vld [vmem:[%s195 + $0x52] sm:$0xff]
        %v3032 = vld [vmem:[%s195 + $0x5a] sm:$0xff]
        %v3033 = vld [vmem:[%s195 + $0x62] sm:$0xff]
        %v3034 = vld [vmem:[%s195 + $0x6a] sm:$0xff]
        %v3035 = vld [vmem:[%s195 + $0x7a] sm:$0xff]
        %v3036 = vld [vmem:[%s195 + $0x82] sm:$0xff]
        %v3037 = vld [vmem:[%s195 + $0x8a] sm:$0xff]
        %v3038 = vld [vmem:[%s195 + $0x92] sm:$0xff]
        %v3039 = vcombine.low %v3023, %v3031
        %v3040 = vcombine.high %v3023, %v3031
        %v3042 = vunpack.c.l.s4 1983009808
        %v3043 = vunpack.c.0.s8 %v3042
        %v3044 = vlaneseq
        %v3045 = vshrl.u32 %v3044, 7
        %v3046 = vsub.s32 %v3043, %v3045
        %v3047 = vrot.slane %v3039, %v3046
        %v3049 = vunpack.c.l.s4 1983009808
        %v3050 = vunpack.c.0.s8 %v3049
        %v3051 = vlaneseq
        %v3052 = vshrl.u32 %v3051, 7
        %v3053 = vsub.s32 %v3050, %v3052
        %v3054 = vrot.slane %v3040, %v3053
        %v3055 = vcombine.low %v3027, %v3035
        %v3056 = vcombine.high %v3027, %v3035
        %v3058 = vunpack.c.l.s4 1983009808
        %v3059 = vunpack.c.0.s8 %v3058
        %v3060 = vlaneseq
        %v3061 = vshrl.u32 %v3060, 7
        %v3062 = vsub.s32 %v3059, %v3061
        %v3063 = vrot.slane %v3055, %v3062
        %v3065 = vunpack.c.l.s4 1983009808
        %v3066 = vunpack.c.0.s8 %v3065
        %v3067 = vlaneseq
        %v3068 = vshrl.u32 %v3067, 7
        %v3069 = vsub.s32 %v3066, %v3068
        %v3070 = vrot.slane %v3056, %v3069
        %v3071 = vcombine.low %v3047, %v3063
        %v3072 = vcombine.high %v3047, %v3063
        %v3074 = vunpack.c.l.s4 1934713408
        %v3075 = vunpack.c.0.s8 %v3074
        %v3076 = vlaneseq
        %v3077 = vshrl.u32 %v3076, 7
        %v3078 = vsub.s32 %v3075, %v3077
        %v3079 = vrot.slane %v3071, %v3078
        %v3081 = vunpack.c.l.s4 1934713408
        %v3082 = vunpack.c.0.s8 %v3081
        %v3083 = vlaneseq
        %v3084 = vshrl.u32 %v3083, 7
        %v3085 = vsub.s32 %v3082, %v3084
        %v3086 = vrot.slane %v3072, %v3085
        %v3087 = vcombine.low %v3054, %v3070
        %v3088 = vcombine.high %v3054, %v3070
        %v3090 = vunpack.c.l.s4 1934713408
        %v3091 = vunpack.c.0.s8 %v3090
        %v3092 = vlaneseq
        %v3093 = vshrl.u32 %v3092, 7
        %v3094 = vsub.s32 %v3091, %v3093
        %v3095 = vrot.slane %v3087, %v3094
        %v3097 = vunpack.c.l.s4 1934713408
        %v3098 = vunpack.c.0.s8 %v3097
        %v3099 = vlaneseq
        %v3100 = vshrl.u32 %v3099, 7
        %v3101 = vsub.s32 %v3098, %v3100
        %v3102 = vrot.slane %v3088, %v3101
        %v3103 = vcombine.high %v3079, 0.0
        %v3104 = vcombine.high %v3086, 0.0
        %v3105 = vcombine.high %v3095, 0.0
        %v3106 = vcombine.high %v3102, 0.0
        %v3107 = vcombine.low %v3024, %v3032
        %v3108 = vcombine.high %v3024, %v3032
        %v3110 = vunpack.c.l.s4 1983009808
        %v3111 = vunpack.c.0.s8 %v3110
        %v3112 = vlaneseq
        %v3113 = vshrl.u32 %v3112, 7
        %v3114 = vsub.s32 %v3111, %v3113
        %v3115 = vrot.slane %v3107, %v3114
        %v3117 = vunpack.c.l.s4 1983009808
        %v3118 = vunpack.c.0.s8 %v3117
        %v3119 = vlaneseq
        %v3120 = vshrl.u32 %v3119, 7
        %v3121 = vsub.s32 %v3118, %v3120
        %v3122 = vrot.slane %v3108, %v3121
        %v3123 = vcombine.low %v3028, %v3036
        %v3124 = vcombine.high %v3028, %v3036
        %v3126 = vunpack.c.l.s4 1983009808
        %v3127 = vunpack.c.0.s8 %v3126
        %v3128 = vlaneseq
        %v3129 = vshrl.u32 %v3128, 7
        %v3130 = vsub.s32 %v3127, %v3129
        %v3131 = vrot.slane %v3123, %v3130
        %v3133 = vunpack.c.l.s4 1983009808
        %v3134 = vunpack.c.0.s8 %v3133
        %v3135 = vlaneseq
        %v3136 = vshrl.u32 %v3135, 7
        %v3137 = vsub.s32 %v3134, %v3136
        %v3138 = vrot.slane %v3124, %v3137
        %v3139 = vcombine.low %v3115, %v3131
        %v3140 = vcombine.high %v3115, %v3131
        %v3142 = vunpack.c.l.s4 1934713408
        %v3143 = vunpack.c.0.s8 %v3142
        %v3144 = vlaneseq
        %v3145 = vshrl.u32 %v3144, 7
        %v3146 = vsub.s32 %v3143, %v3145
        %v3147 = vrot.slane %v3139, %v3146
        %v3149 = vunpack.c.l.s4 1934713408
        %v3150 = vunpack.c.0.s8 %v3149
        %v3151 = vlaneseq
        %v3152 = vshrl.u32 %v3151, 7
        %v3153 = vsub.s32 %v3150, %v3152
        %v3154 = vrot.slane %v3140, %v3153
        %v3155 = vcombine.low %v3122, %v3138
        %v3156 = vcombine.high %v3122, %v3138
        %v3158 = vunpack.c.l.s4 1934713408
        %v3159 = vunpack.c.0.s8 %v3158
        %v3160 = vlaneseq
        %v3161 = vshrl.u32 %v3160, 7
        %v3162 = vsub.s32 %v3159, %v3161
        %v3163 = vrot.slane %v3155, %v3162
        %v3165 = vunpack.c.l.s4 1934713408
        %v3166 = vunpack.c.0.s8 %v3165
        %v3167 = vlaneseq
        %v3168 = vshrl.u32 %v3167, 7
        %v3169 = vsub.s32 %v3166, %v3168
        %v3170 = vrot.slane %v3156, %v3169
        %v3171 = vcombine.high %v3147, 0.0
        %v3172 = vcombine.high %v3154, 0.0
        %v3173 = vcombine.high %v3163, 0.0
        %v3174 = vcombine.high %v3170, 0.0
        %v3175 = vcombine.low %v3025, %v3033
        %v3176 = vcombine.high %v3025, %v3033
        %v3178 = vunpack.c.l.s4 1983009808
        %v3179 = vunpack.c.0.s8 %v3178
        %v3180 = vlaneseq
        %v3181 = vshrl.u32 %v3180, 7
        %v3182 = vsub.s32 %v3179, %v3181
        %v3183 = vrot.slane %v3175, %v3182
        %v3185 = vunpack.c.l.s4 1983009808
        %v3186 = vunpack.c.0.s8 %v3185
        %v3187 = vlaneseq
        %v3188 = vshrl.u32 %v3187, 7
        %v3189 = vsub.s32 %v3186, %v3188
        %v3190 = vrot.slane %v3176, %v3189
        %v3191 = vcombine.low %v3029, %v3037
        %v3192 = vcombine.high %v3029, %v3037
        %v3194 = vunpack.c.l.s4 1983009808
        %v3195 = vunpack.c.0.s8 %v3194
        %v3196 = vlaneseq
        %v3197 = vshrl.u32 %v3196, 7
        %v3198 = vsub.s32 %v3195, %v3197
        %v3199 = vrot.slane %v3191, %v3198
        %v3201 = vunpack.c.l.s4 1983009808
        %v3202 = vunpack.c.0.s8 %v3201
        %v3203 = vlaneseq
        %v3204 = vshrl.u32 %v3203, 7
        %v3205 = vsub.s32 %v3202, %v3204
        %v3206 = vrot.slane %v3192, %v3205
        %v3207 = vcombine.low %v3183, %v3199
        %v3208 = vcombine.high %v3183, %v3199
        %v3210 = vunpack.c.l.s4 1934713408
        %v3211 = vunpack.c.0.s8 %v3210
        %v3212 = vlaneseq
        %v3213 = vshrl.u32 %v3212, 7
        %v3214 = vsub.s32 %v3211, %v3213
        %v3215 = vrot.slane %v3207, %v3214
        %v3217 = vunpack.c.l.s4 1934713408
        %v3218 = vunpack.c.0.s8 %v3217
        %v3219 = vlaneseq
        %v3220 = vshrl.u32 %v3219, 7
        %v3221 = vsub.s32 %v3218, %v3220
        %v3222 = vrot.slane %v3208, %v3221
        %v3223 = vcombine.low %v3190, %v3206
        %v3224 = vcombine.high %v3190, %v3206
        %v3226 = vunpack.c.l.s4 1934713408
        %v3227 = vunpack.c.0.s8 %v3226
        %v3228 = vlaneseq
        %v3229 = vshrl.u32 %v3228, 7
        %v3230 = vsub.s32 %v3227, %v3229
        %v3231 = vrot.slane %v3223, %v3230
        %v3233 = vunpack.c.l.s4 1934713408
        %v3234 = vunpack.c.0.s8 %v3233
        %v3235 = vlaneseq
        %v3236 = vshrl.u32 %v3235, 7
        %v3237 = vsub.s32 %v3234, %v3236
        %v3238 = vrot.slane %v3224, %v3237
        %v3239 = vcombine.high %v3215, 0.0
        %v3240 = vcombine.high %v3222, 0.0
        %v3241 = vcombine.high %v3231, 0.0
        %v3242 = vcombine.high %v3238, 0.0
        %v3243 = vcombine.low %v3026, %v3034
        %v3244 = vcombine.high %v3026, %v3034
        %v3246 = vunpack.c.l.s4 1983009808
        %v3247 = vunpack.c.0.s8 %v3246
        %v3248 = vlaneseq
        %v3249 = vshrl.u32 %v3248, 7
        %v3250 = vsub.s32 %v3247, %v3249
        %v3251 = vrot.slane %v3243, %v3250
        %v3253 = vunpack.c.l.s4 1983009808
        %v3254 = vunpack.c.0.s8 %v3253
        %v3255 = vlaneseq
        %v3256 = vshrl.u32 %v3255, 7
        %v3257 = vsub.s32 %v3254, %v3256
        %v3258 = vrot.slane %v3244, %v3257
        %v3259 = vcombine.low %v3030, %v3038
        %v3260 = vcombine.high %v3030, %v3038
        %v3262 = vunpack.c.l.s4 1983009808
        %v3263 = vunpack.c.0.s8 %v3262
        %v3264 = vlaneseq
        %v3265 = vshrl.u32 %v3264, 7
        %v3266 = vsub.s32 %v3263, %v3265
        %v3267 = vrot.slane %v3259, %v3266
        %v3269 = vunpack.c.l.s4 1983009808
        %v3270 = vunpack.c.0.s8 %v3269
        %v3271 = vlaneseq
        %v3272 = vshrl.u32 %v3271, 7
        %v3273 = vsub.s32 %v3270, %v3272
        %v3274 = vrot.slane %v3260, %v3273
        %v3275 = vcombine.low %v3251, %v3267
        %v3276 = vcombine.high %v3251, %v3267
        %v3278 = vunpack.c.l.s4 1934713408
        %v3279 = vunpack.c.0.s8 %v3278
        %v3280 = vlaneseq
        %v3281 = vshrl.u32 %v3280, 7
        %v3282 = vsub.s32 %v3279, %v3281
        %v3283 = vrot.slane %v3275, %v3282
        %v3285 = vunpack.c.l.s4 1934713408
        %v3286 = vunpack.c.0.s8 %v3285
        %v3287 = vlaneseq
        %v3288 = vshrl.u32 %v3287, 7
        %v3289 = vsub.s32 %v3286, %v3288
        %v3290 = vrot.slane %v3276, %v3289
        %v3291 = vcombine.low %v3258, %v3274
        %v3292 = vcombine.high %v3258, %v3274
        %v3294 = vunpack.c.l.s4 1934713408
        %v3295 = vunpack.c.0.s8 %v3294
        %v3296 = vlaneseq
        %v3297 = vshrl.u32 %v3296, 7
        %v3298 = vsub.s32 %v3295, %v3297
        %v3299 = vrot.slane %v3291, %v3298
        %v3301 = vunpack.c.l.s4 1934713408
        %v3302 = vunpack.c.0.s8 %v3301
        %v3303 = vlaneseq
        %v3304 = vshrl.u32 %v3303, 7
        %v3305 = vsub.s32 %v3302, %v3304
        %v3306 = vrot.slane %v3292, %v3305
        %v3307 = vcombine.high %v3283, 0.0
        %v3308 = vcombine.high %v3290, 0.0
        %v3309 = vcombine.high %v3299, 0.0
        %v3310 = vcombine.high %v3306, 0.0
        %3312 = vrot.lane.b32.xlu0 %v3103, 32
        %v3313 = vpop.permute.xlu0 %3312
        %3316 = vrot.lane.b32.xlu0 %v3086, 64
        %v3317 = vpop.permute.xlu0 %3316
        %3320 = vrot.lane.b32.xlu0 %v3104, 96
        %v3321 = vpop.permute.xlu0 %3320
        %3324 = vrot.lane.b32.xlu0 %v3105, 32
        %v3325 = vpop.permute.xlu0 %3324
        %3328 = vrot.lane.b32.xlu0 %v3102, 64
        %v3329 = vpop.permute.xlu0 %3328
        %3332 = vrot.lane.b32.xlu0 %v3106, 96
        %v3333 = vpop.permute.xlu0 %3332
        %3336 = vrot.lane.b32.xlu0 %v3171, 32
        %v3337 = vpop.permute.xlu0 %3336
        %3340 = vrot.lane.b32.xlu0 %v3154, 64
        %v3341 = vpop.permute.xlu0 %3340
        %3344 = vrot.lane.b32.xlu0 %v3172, 96
        %v3345 = vpop.permute.xlu0 %3344
        %3348 = vrot.lane.b32.xlu0 %v3173, 32
        %v3349 = vpop.permute.xlu0 %3348
        %3352 = vrot.lane.b32.xlu0 %v3170, 64
        %v3353 = vpop.permute.xlu0 %3352
        %3356 = vrot.lane.b32.xlu0 %v3174, 96
        %v3357 = vpop.permute.xlu0 %3356
        %3360 = vrot.lane.b32.xlu0 %v3239, 32
        %v3361 = vpop.permute.xlu0 %3360
        %3364 = vrot.lane.b32.xlu0 %v3222, 64
        %v3365 = vpop.permute.xlu0 %3364
        %3368 = vrot.lane.b32.xlu0 %v3240, 96
        %v3369 = vpop.permute.xlu0 %3368
        %3372 = vrot.lane.b32.xlu0 %v3241, 32
        %v3373 = vpop.permute.xlu0 %3372
        %3376 = vrot.lane.b32.xlu0 %v3238, 64
        %v3377 = vpop.permute.xlu0 %3376
        %3380 = vrot.lane.b32.xlu0 %v3242, 96
        %v3381 = vpop.permute.xlu0 %3380
        %3384 = vrot.lane.b32.xlu0 %v3307, 32
        %v3385 = vpop.permute.xlu0 %3384
        %3388 = vrot.lane.b32.xlu0 %v3290, 64
        %v3389 = vpop.permute.xlu0 %3388
        %3392 = vrot.lane.b32.xlu0 %v3308, 96
        %v3393 = vpop.permute.xlu0 %3392
        %3396 = vrot.lane.b32.xlu0 %v3309, 32
        %v3397 = vpop.permute.xlu0 %3396
        %3400 = vrot.lane.b32.xlu0 %v3306, 64
        %v3401 = vpop.permute.xlu0 %3400
        %3404 = vrot.lane.b32.xlu0 %v3310, 96
        %v3405 = vpop.permute.xlu0 %3404
        %v3407 = vsel %vm580, %v3079, %v3313
        %v3408 = vsel %vm582, %v3407, %v3317
        %v3409 = vsel %vm584, %v3408, %v3321
        %v3410 = vsel %vm580, %v3095, %v3325
        %v3411 = vsel %vm582, %v3410, %v3329
        %v3412 = vsel %vm584, %v3411, %v3333
        %v3413 = vsel %vm580, %v3147, %v3337
        %v3414 = vsel %vm582, %v3413, %v3341
        %v3415 = vsel %vm584, %v3414, %v3345
        %v3416 = vsel %vm580, %v3163, %v3349
        %v3417 = vsel %vm582, %v3416, %v3353
        %v3418 = vsel %vm584, %v3417, %v3357
        %v3419 = vsel %vm580, %v3215, %v3361
        %v3420 = vsel %vm582, %v3419, %v3365
        %v3421 = vsel %vm584, %v3420, %v3369
        %v3422 = vsel %vm580, %v3231, %v3373
        %v3423 = vsel %vm582, %v3422, %v3377
        %v3424 = vsel %vm584, %v3423, %v3381
        %v3425 = vsel %vm580, %v3283, %v3385
        %v3426 = vsel %vm582, %v3425, %v3389
        %v3427 = vsel %vm584, %v3426, %v3393
        %v3428 = vsel %vm580, %v3299, %v3397
        %v3429 = vsel %vm582, %v3428, %v3401
        %v3430 = vsel %vm584, %v3429, %v3405
        %3431 = vst [vmem:[#allocation2 + $0xc0] sm:$0xf] %v3409
        %3432 = vst [vmem:[#allocation2 + $0xc8] sm:$0xf] %v3412
        %3433 = vst [vmem:[#allocation2 + $0xd0] sm:$0xf] %v3415
        %3434 = vst [vmem:[#allocation2 + $0xd8] sm:$0xf] %v3418
        %3435 = vst [vmem:[#allocation2 + $0xe0] sm:$0xf] %v3421
        %3436 = vst [vmem:[#allocation2 + $0xe8] sm:$0xf] %v3424
        %3437 = vst [vmem:[#allocation2 + $0xf0] sm:$0xf] %v3427
        %3438 = vst [vmem:[#allocation2 + $0xf8] sm:$0xf] %v3430
        %v3439 = vld [vmem:[%s195 + $0x2] sm:$0xff]
        %v3440 = vld [vmem:[%s195 + $0xa] sm:$0xff]
        %v3441 = vld [vmem:[%s195 + $0x12] sm:$0xff]
        %v3442 = vld [vmem:[%s195 + $0x1a] sm:$0xff]
        %v3443 = vld [vmem:[%s195 + $0x2a] sm:$0xff]
        %v3444 = vld [vmem:[%s195 + $0x32] sm:$0xff]
        %v3445 = vld [vmem:[%s195 + $0x3a] sm:$0xff]
        %v3446 = vld [vmem:[%s195 + $0x42] sm:$0xff]
        %v3447 = vld [vmem:[%s195 + $0x52] sm:$0xff]
        %v3448 = vld [vmem:[%s195 + $0x5a] sm:$0xff]
        %v3449 = vld [vmem:[%s195 + $0x62] sm:$0xff]
        %v3450 = vld [vmem:[%s195 + $0x6a] sm:$0xff]
        %v3451 = vld [vmem:[%s195 + $0x7a] sm:$0xff]
        %v3452 = vld [vmem:[%s195 + $0x82] sm:$0xff]
        %v3453 = vld [vmem:[%s195 + $0x8a] sm:$0xff]
        %v3454 = vld [vmem:[%s195 + $0x92] sm:$0xff]
        %3471 = vrot.lane.b32.xlu0 %v3439, 127
        %v3472 = vpop.permute.xlu0 %3471
        %3473 = vrot.lane.b32.xlu0 %v3440, 127
        %v3474 = vpop.permute.xlu0 %3473
        %3475 = vrot.lane.b32.xlu0 %v3441, 127
        %v3476 = vpop.permute.xlu0 %3475
        %3477 = vrot.lane.b32.xlu0 %v3442, 127
        %v3478 = vpop.permute.xlu0 %3477
        %3479 = vrot.lane.b32.xlu0 %v3443, 127
        %v3480 = vpop.permute.xlu0 %3479
        %3481 = vrot.lane.b32.xlu0 %v3444, 127
        %v3482 = vpop.permute.xlu0 %3481
        %3483 = vrot.lane.b32.xlu0 %v3445, 127
        %v3484 = vpop.permute.xlu0 %3483
        %3485 = vrot.lane.b32.xlu0 %v3446, 127
        %v3486 = vpop.permute.xlu0 %3485
        %3487 = vrot.lane.b32.xlu0 %v3447, 127
        %v3488 = vpop.permute.xlu0 %3487
        %3489 = vrot.lane.b32.xlu0 %v3448, 127
        %v3490 = vpop.permute.xlu0 %3489
        %3491 = vrot.lane.b32.xlu0 %v3449, 127
        %v3492 = vpop.permute.xlu0 %3491
        %3493 = vrot.lane.b32.xlu0 %v3450, 127
        %v3494 = vpop.permute.xlu0 %3493
        %3495 = vrot.lane.b32.xlu0 %v3451, 127
        %v3496 = vpop.permute.xlu0 %3495
        %3497 = vrot.lane.b32.xlu0 %v3452, 127
        %v3498 = vpop.permute.xlu0 %3497
        %3499 = vrot.lane.b32.xlu0 %v3453, 127
        %v3500 = vpop.permute.xlu0 %3499
        %3501 = vrot.lane.b32.xlu0 %v3454, 127
        %v3502 = vpop.permute.xlu0 %3501
        %v3519 = vcombine.low %v3472, %v3488
        %v3520 = vcombine.high %v3472, %v3488
        %v3522 = vunpack.c.l.s4 1983009808
        %v3523 = vunpack.c.0.s8 %v3522
        %v3524 = vlaneseq
        %v3525 = vshrl.u32 %v3524, 7
        %v3526 = vsub.s32 %v3523, %v3525
        %v3527 = vrot.slane %v3519, %v3526
        %v3529 = vunpack.c.l.s4 1983009808
        %v3530 = vunpack.c.0.s8 %v3529
        %v3531 = vlaneseq
        %v3532 = vshrl.u32 %v3531, 7
        %v3533 = vsub.s32 %v3530, %v3532
        %v3534 = vrot.slane %v3520, %v3533
        %v3535 = vcombine.low %v3480, %v3496
        %v3536 = vcombine.high %v3480, %v3496
        %v3538 = vunpack.c.l.s4 1983009808
        %v3539 = vunpack.c.0.s8 %v3538
        %v3540 = vlaneseq
        %v3541 = vshrl.u32 %v3540, 7
        %v3542 = vsub.s32 %v3539, %v3541
        %v3543 = vrot.slane %v3535, %v3542
        %v3545 = vunpack.c.l.s4 1983009808
        %v3546 = vunpack.c.0.s8 %v3545
        %v3547 = vlaneseq
        %v3548 = vshrl.u32 %v3547, 7
        %v3549 = vsub.s32 %v3546, %v3548
        %v3550 = vrot.slane %v3536, %v3549
        %v3551 = vcombine.low %v3527, %v3543
        %v3552 = vcombine.high %v3527, %v3543
        %v3554 = vunpack.c.l.s4 1934713408
        %v3555 = vunpack.c.0.s8 %v3554
        %v3556 = vlaneseq
        %v3557 = vshrl.u32 %v3556, 7
        %v3558 = vsub.s32 %v3555, %v3557
        %v3559 = vrot.slane %v3551, %v3558
        %v3561 = vunpack.c.l.s4 1934713408
        %v3562 = vunpack.c.0.s8 %v3561
        %v3563 = vlaneseq
        %v3564 = vshrl.u32 %v3563, 7
        %v3565 = vsub.s32 %v3562, %v3564
        %v3566 = vrot.slane %v3552, %v3565
        %v3567 = vcombine.low %v3534, %v3550
        %v3568 = vcombine.high %v3534, %v3550
        %v3570 = vunpack.c.l.s4 1934713408
        %v3571 = vunpack.c.0.s8 %v3570
        %v3572 = vlaneseq
        %v3573 = vshrl.u32 %v3572, 7
        %v3574 = vsub.s32 %v3571, %v3573
        %v3575 = vrot.slane %v3567, %v3574
        %v3577 = vunpack.c.l.s4 1934713408
        %v3578 = vunpack.c.0.s8 %v3577
        %v3579 = vlaneseq
        %v3580 = vshrl.u32 %v3579, 7
        %v3581 = vsub.s32 %v3578, %v3580
        %v3582 = vrot.slane %v3568, %v3581
        %v3583 = vcombine.high %v3559, 0.0
        %v3584 = vcombine.high %v3566, 0.0
        %v3585 = vcombine.high %v3575, 0.0
        %v3586 = vcombine.high %v3582, 0.0
        %v3587 = vcombine.low %v3474, %v3490
        %v3588 = vcombine.high %v3474, %v3490
        %v3590 = vunpack.c.l.s4 1983009808
        %v3591 = vunpack.c.0.s8 %v3590
        %v3592 = vlaneseq
        %v3593 = vshrl.u32 %v3592, 7
        %v3594 = vsub.s32 %v3591, %v3593
        %v3595 = vrot.slane %v3587, %v3594
        %v3597 = vunpack.c.l.s4 1983009808
        %v3598 = vunpack.c.0.s8 %v3597
        %v3599 = vlaneseq
        %v3600 = vshrl.u32 %v3599, 7
        %v3601 = vsub.s32 %v3598, %v3600
        %v3602 = vrot.slane %v3588, %v3601
        %v3603 = vcombine.low %v3482, %v3498
        %v3604 = vcombine.high %v3482, %v3498
        %v3606 = vunpack.c.l.s4 1983009808
        %v3607 = vunpack.c.0.s8 %v3606
        %v3608 = vlaneseq
        %v3609 = vshrl.u32 %v3608, 7
        %v3610 = vsub.s32 %v3607, %v3609
        %v3611 = vrot.slane %v3603, %v3610
        %v3613 = vunpack.c.l.s4 1983009808
        %v3614 = vunpack.c.0.s8 %v3613
        %v3615 = vlaneseq
        %v3616 = vshrl.u32 %v3615, 7
        %v3617 = vsub.s32 %v3614, %v3616
        %v3618 = vrot.slane %v3604, %v3617
        %v3619 = vcombine.low %v3595, %v3611
        %v3620 = vcombine.high %v3595, %v3611
        %v3622 = vunpack.c.l.s4 1934713408
        %v3623 = vunpack.c.0.s8 %v3622
        %v3624 = vlaneseq
        %v3625 = vshrl.u32 %v3624, 7
        %v3626 = vsub.s32 %v3623, %v3625
        %v3627 = vrot.slane %v3619, %v3626
        %v3629 = vunpack.c.l.s4 1934713408
        %v3630 = vunpack.c.0.s8 %v3629
        %v3631 = vlaneseq
        %v3632 = vshrl.u32 %v3631, 7
        %v3633 = vsub.s32 %v3630, %v3632
        %v3634 = vrot.slane %v3620, %v3633
        %v3635 = vcombine.low %v3602, %v3618
        %v3636 = vcombine.high %v3602, %v3618
        %v3638 = vunpack.c.l.s4 1934713408
        %v3639 = vunpack.c.0.s8 %v3638
        %v3640 = vlaneseq
        %v3641 = vshrl.u32 %v3640, 7
        %v3642 = vsub.s32 %v3639, %v3641
        %v3643 = vrot.slane %v3635, %v3642
        %v3645 = vunpack.c.l.s4 1934713408
        %v3646 = vunpack.c.0.s8 %v3645
        %v3647 = vlaneseq
        %v3648 = vshrl.u32 %v3647, 7
        %v3649 = vsub.s32 %v3646, %v3648
        %v3650 = vrot.slane %v3636, %v3649
        %v3651 = vcombine.high %v3627, 0.0
        %v3652 = vcombine.high %v3634, 0.0
        %v3653 = vcombine.high %v3643, 0.0
        %v3654 = vcombine.high %v3650, 0.0
        %v3655 = vcombine.low %v3476, %v3492
        %v3656 = vcombine.high %v3476, %v3492
        %v3658 = vunpack.c.l.s4 1983009808
        %v3659 = vunpack.c.0.s8 %v3658
        %v3660 = vlaneseq
        %v3661 = vshrl.u32 %v3660, 7
        %v3662 = vsub.s32 %v3659, %v3661
        %v3663 = vrot.slane %v3655, %v3662
        %v3665 = vunpack.c.l.s4 1983009808
        %v3666 = vunpack.c.0.s8 %v3665
        %v3667 = vlaneseq
        %v3668 = vshrl.u32 %v3667, 7
        %v3669 = vsub.s32 %v3666, %v3668
        %v3670 = vrot.slane %v3656, %v3669
        %v3671 = vcombine.low %v3484, %v3500
        %v3672 = vcombine.high %v3484, %v3500
        %v3674 = vunpack.c.l.s4 1983009808
        %v3675 = vunpack.c.0.s8 %v3674
        %v3676 = vlaneseq
        %v3677 = vshrl.u32 %v3676, 7
        %v3678 = vsub.s32 %v3675, %v3677
        %v3679 = vrot.slane %v3671, %v3678
        %v3681 = vunpack.c.l.s4 1983009808
        %v3682 = vunpack.c.0.s8 %v3681
        %v3683 = vlaneseq
        %v3684 = vshrl.u32 %v3683, 7
        %v3685 = vsub.s32 %v3682, %v3684
        %v3686 = vrot.slane %v3672, %v3685
        %v3687 = vcombine.low %v3663, %v3679
        %v3688 = vcombine.high %v3663, %v3679
        %v3690 = vunpack.c.l.s4 1934713408
        %v3691 = vunpack.c.0.s8 %v3690
        %v3692 = vlaneseq
        %v3693 = vshrl.u32 %v3692, 7
        %v3694 = vsub.s32 %v3691, %v3693
        %v3695 = vrot.slane %v3687, %v3694
        %v3697 = vunpack.c.l.s4 1934713408
        %v3698 = vunpack.c.0.s8 %v3697
        %v3699 = vlaneseq
        %v3700 = vshrl.u32 %v3699, 7
        %v3701 = vsub.s32 %v3698, %v3700
        %v3702 = vrot.slane %v3688, %v3701
        %v3703 = vcombine.low %v3670, %v3686
        %v3704 = vcombine.high %v3670, %v3686
        %v3706 = vunpack.c.l.s4 1934713408
        %v3707 = vunpack.c.0.s8 %v3706
        %v3708 = vlaneseq
        %v3709 = vshrl.u32 %v3708, 7
        %v3710 = vsub.s32 %v3707, %v3709
        %v3711 = vrot.slane %v3703, %v3710
        %v3713 = vunpack.c.l.s4 1934713408
        %v3714 = vunpack.c.0.s8 %v3713
        %v3715 = vlaneseq
        %v3716 = vshrl.u32 %v3715, 7
        %v3717 = vsub.s32 %v3714, %v3716
        %v3718 = vrot.slane %v3704, %v3717
        %v3719 = vcombine.high %v3695, 0.0
        %v3720 = vcombine.high %v3702, 0.0
        %v3721 = vcombine.high %v3711, 0.0
        %v3722 = vcombine.high %v3718, 0.0
        %v3723 = vcombine.low %v3478, %v3494
        %v3724 = vcombine.high %v3478, %v3494
        %v3726 = vunpack.c.l.s4 1983009808
        %v3727 = vunpack.c.0.s8 %v3726
        %v3728 = vlaneseq
        %v3729 = vshrl.u32 %v3728, 7
        %v3730 = vsub.s32 %v3727, %v3729
        %v3731 = vrot.slane %v3723, %v3730
        %v3733 = vunpack.c.l.s4 1983009808
        %v3734 = vunpack.c.0.s8 %v3733
        %v3735 = vlaneseq
        %v3736 = vshrl.u32 %v3735, 7
        %v3737 = vsub.s32 %v3734, %v3736
        %v3738 = vrot.slane %v3724, %v3737
        %v3739 = vcombine.low %v3486, %v3502
        %v3740 = vcombine.high %v3486, %v3502
        %v3742 = vunpack.c.l.s4 1983009808
        %v3743 = vunpack.c.0.s8 %v3742
        %v3744 = vlaneseq
        %v3745 = vshrl.u32 %v3744, 7
        %v3746 = vsub.s32 %v3743, %v3745
        %v3747 = vrot.slane %v3739, %v3746
        %v3749 = vunpack.c.l.s4 1983009808
        %v3750 = vunpack.c.0.s8 %v3749
        %v3751 = vlaneseq
        %v3752 = vshrl.u32 %v3751, 7
        %v3753 = vsub.s32 %v3750, %v3752
        %v3754 = vrot.slane %v3740, %v3753
        %v3755 = vcombine.low %v3731, %v3747
        %v3756 = vcombine.high %v3731, %v3747
        %v3758 = vunpack.c.l.s4 1934713408
        %v3759 = vunpack.c.0.s8 %v3758
        %v3760 = vlaneseq
        %v3761 = vshrl.u32 %v3760, 7
        %v3762 = vsub.s32 %v3759, %v3761
        %v3763 = vrot.slane %v3755, %v3762
        %v3765 = vunpack.c.l.s4 1934713408
        %v3766 = vunpack.c.0.s8 %v3765
        %v3767 = vlaneseq
        %v3768 = vshrl.u32 %v3767, 7
        %v3769 = vsub.s32 %v3766, %v3768
        %v3770 = vrot.slane %v3756, %v3769
        %v3771 = vcombine.low %v3738, %v3754
        %v3772 = vcombine.high %v3738, %v3754
        %v3774 = vunpack.c.l.s4 1934713408
        %v3775 = vunpack.c.0.s8 %v3774
        %v3776 = vlaneseq
        %v3777 = vshrl.u32 %v3776, 7
        %v3778 = vsub.s32 %v3775, %v3777
        %v3779 = vrot.slane %v3771, %v3778
        %v3781 = vunpack.c.l.s4 1934713408
        %v3782 = vunpack.c.0.s8 %v3781
        %v3783 = vlaneseq
        %v3784 = vshrl.u32 %v3783, 7
        %v3785 = vsub.s32 %v3782, %v3784
        %v3786 = vrot.slane %v3772, %v3785
        %v3787 = vcombine.high %v3763, 0.0
        %v3788 = vcombine.high %v3770, 0.0
        %v3789 = vcombine.high %v3779, 0.0
        %v3790 = vcombine.high %v3786, 0.0
        %3792 = vrot.lane.b32.xlu0 %v3583, 32
        %v3793 = vpop.permute.xlu0 %3792
        %3796 = vrot.lane.b32.xlu0 %v3566, 64
        %v3797 = vpop.permute.xlu0 %3796
        %3800 = vrot.lane.b32.xlu0 %v3584, 96
        %v3801 = vpop.permute.xlu0 %3800
        %3804 = vrot.lane.b32.xlu0 %v3585, 32
        %v3805 = vpop.permute.xlu0 %3804
        %3808 = vrot.lane.b32.xlu0 %v3582, 64
        %v3809 = vpop.permute.xlu0 %3808
        %3812 = vrot.lane.b32.xlu0 %v3586, 96
        %v3813 = vpop.permute.xlu0 %3812
        %3816 = vrot.lane.b32.xlu0 %v3651, 32
        %v3817 = vpop.permute.xlu0 %3816
        %3820 = vrot.lane.b32.xlu0 %v3634, 64
        %v3821 = vpop.permute.xlu0 %3820
        %3824 = vrot.lane.b32.xlu0 %v3652, 96
        %v3825 = vpop.permute.xlu0 %3824
        %3828 = vrot.lane.b32.xlu0 %v3653, 32
        %v3829 = vpop.permute.xlu0 %3828
        %3832 = vrot.lane.b32.xlu0 %v3650, 64
        %v3833 = vpop.permute.xlu0 %3832
        %3836 = vrot.lane.b32.xlu0 %v3654, 96
        %v3837 = vpop.permute.xlu0 %3836
        %3840 = vrot.lane.b32.xlu0 %v3719, 32
        %v3841 = vpop.permute.xlu0 %3840
        %3844 = vrot.lane.b32.xlu0 %v3702, 64
        %v3845 = vpop.permute.xlu0 %3844
        %3848 = vrot.lane.b32.xlu0 %v3720, 96
        %v3849 = vpop.permute.xlu0 %3848
        %3852 = vrot.lane.b32.xlu0 %v3721, 32
        %v3853 = vpop.permute.xlu0 %3852
        %3856 = vrot.lane.b32.xlu0 %v3718, 64
        %v3857 = vpop.permute.xlu0 %3856
        %3860 = vrot.lane.b32.xlu0 %v3722, 96
        %v3861 = vpop.permute.xlu0 %3860
        %3864 = vrot.lane.b32.xlu0 %v3787, 32
        %v3865 = vpop.permute.xlu0 %3864
        %3868 = vrot.lane.b32.xlu0 %v3770, 64
        %v3869 = vpop.permute.xlu0 %3868
        %3872 = vrot.lane.b32.xlu0 %v3788, 96
        %v3873 = vpop.permute.xlu0 %3872
        %3876 = vrot.lane.b32.xlu0 %v3789, 32
        %v3877 = vpop.permute.xlu0 %3876
        %3880 = vrot.lane.b32.xlu0 %v3786, 64
        %v3881 = vpop.permute.xlu0 %3880
        %3884 = vrot.lane.b32.xlu0 %v3790, 96
        %v3885 = vpop.permute.xlu0 %3884
        %v3887 = vsel %vm580, %v3559, %v3793
        %v3888 = vsel %vm582, %v3887, %v3797
        %v3889 = vsel %vm584, %v3888, %v3801
        %v3890 = vsel %vm580, %v3575, %v3805
        %v3891 = vsel %vm582, %v3890, %v3809
        %v3892 = vsel %vm584, %v3891, %v3813
        %v3893 = vsel %vm580, %v3627, %v3817
        %v3894 = vsel %vm582, %v3893, %v3821
        %v3895 = vsel %vm584, %v3894, %v3825
        %v3896 = vsel %vm580, %v3643, %v3829
        %v3897 = vsel %vm582, %v3896, %v3833
        %v3898 = vsel %vm584, %v3897, %v3837
        %v3899 = vsel %vm580, %v3695, %v3841
        %v3900 = vsel %vm582, %v3899, %v3845
        %v3901 = vsel %vm584, %v3900, %v3849
        %v3902 = vsel %vm580, %v3711, %v3853
        %v3903 = vsel %vm582, %v3902, %v3857
        %v3904 = vsel %vm584, %v3903, %v3861
        %v3905 = vsel %vm580, %v3763, %v3865
        %v3906 = vsel %vm582, %v3905, %v3869
        %v3907 = vsel %vm584, %v3906, %v3873
        %v3908 = vsel %vm580, %v3779, %v3877
        %v3909 = vsel %vm582, %v3908, %v3881
        %v3910 = vsel %vm584, %v3909, %v3885
        %v3919 = vrot.slane %v3889, 4
        %v3920 = vrot.slane %v3892, 4
        %v3921 = vrot.slane %v3895, 4
        %v3922 = vrot.slane %v3898, 4
        %v3923 = vrot.slane %v3901, 4
        %v3924 = vrot.slane %v3904, 4
        %v3925 = vrot.slane %v3907, 4
        %v3926 = vrot.slane %v3910, 4
        %3935 = vst [vmem:[#allocation2 + $0xc0] sm:$0xf0] %v3919
        %3936 = vst [vmem:[#allocation2 + $0xc8] sm:$0xf0] %v3920
        %3937 = vst [vmem:[#allocation2 + $0xd0] sm:$0xf0] %v3921
        %3938 = vst [vmem:[#allocation2 + $0xd8] sm:$0xf0] %v3922
        %3939 = vst [vmem:[#allocation2 + $0xe0] sm:$0xf0] %v3923
        %3940 = vst [vmem:[#allocation2 + $0xe8] sm:$0xf0] %v3924
        %3941 = vst [vmem:[#allocation2 + $0xf0] sm:$0xf0] %v3925
        %3942 = vst [vmem:[#allocation2 + $0xf8] sm:$0xf0] %v3926
        %v3943 = vld [vmem:[%s195 + $0x2] sm:$0xff]
        %v3944 = vld [vmem:[%s195 + $0xa] sm:$0xff]
        %v3945 = vld [vmem:[%s195 + $0x12] sm:$0xff]
        %v3946 = vld [vmem:[%s195 + $0x1a] sm:$0xff]
        %v3947 = vld [vmem:[%s195 + $0x2a] sm:$0xff]
        %v3948 = vld [vmem:[%s195 + $0x32] sm:$0xff]
        %v3949 = vld [vmem:[%s195 + $0x3a] sm:$0xff]
        %v3950 = vld [vmem:[%s195 + $0x42] sm:$0xff]
        %v3951 = vld [vmem:[%s195 + $0x52] sm:$0xff]
        %v3952 = vld [vmem:[%s195 + $0x5a] sm:$0xff]
        %v3953 = vld [vmem:[%s195 + $0x62] sm:$0xff]
        %v3954 = vld [vmem:[%s195 + $0x6a] sm:$0xff]
        %v3955 = vld [vmem:[%s195 + $0x7a] sm:$0xff]
        %v3956 = vld [vmem:[%s195 + $0x82] sm:$0xff]
        %v3957 = vld [vmem:[%s195 + $0x8a] sm:$0xff]
        %v3958 = vld [vmem:[%s195 + $0x92] sm:$0xff]
        %3975 = vrot.lane.b32.xlu0 %v3943, 126
        %v3976 = vpop.permute.xlu0 %3975
        %3977 = vrot.lane.b32.xlu0 %v3944, 126
        %v3978 = vpop.permute.xlu0 %3977
        %3979 = vrot.lane.b32.xlu0 %v3945, 126
        %v3980 = vpop.permute.xlu0 %3979
        %3981 = vrot.lane.b32.xlu0 %v3946, 126
        %v3982 = vpop.permute.xlu0 %3981
        %3983 = vrot.lane.b32.xlu0 %v3947, 126
        %v3984 = vpop.permute.xlu0 %3983
        %3985 = vrot.lane.b32.xlu0 %v3948, 126
        %v3986 = vpop.permute.xlu0 %3985
        %3987 = vrot.lane.b32.xlu0 %v3949, 126
        %v3988 = vpop.permute.xlu0 %3987
        %3989 = vrot.lane.b32.xlu0 %v3950, 126
        %v3990 = vpop.permute.xlu0 %3989
        %3991 = vrot.lane.b32.xlu0 %v3951, 126
        %v3992 = vpop.permute.xlu0 %3991
        %3993 = vrot.lane.b32.xlu0 %v3952, 126
        %v3994 = vpop.permute.xlu0 %3993
        %3995 = vrot.lane.b32.xlu0 %v3953, 126
        %v3996 = vpop.permute.xlu0 %3995
        %3997 = vrot.lane.b32.xlu0 %v3954, 126
        %v3998 = vpop.permute.xlu0 %3997
        %3999 = vrot.lane.b32.xlu0 %v3955, 126
        %v4000 = vpop.permute.xlu0 %3999
        %4001 = vrot.lane.b32.xlu0 %v3956, 126
        %v4002 = vpop.permute.xlu0 %4001
        %4003 = vrot.lane.b32.xlu0 %v3957, 126
        %v4004 = vpop.permute.xlu0 %4003
        %4005 = vrot.lane.b32.xlu0 %v3958, 126
        %v4006 = vpop.permute.xlu0 %4005
        %v4023 = vcombine.low %v3976, %v3992
        %v4024 = vcombine.high %v3976, %v3992
        %v4026 = vunpack.c.l.s4 1983009808
        %v4027 = vunpack.c.0.s8 %v4026
        %v4028 = vlaneseq
        %v4029 = vshrl.u32 %v4028, 7
        %v4030 = vsub.s32 %v4027, %v4029
        %v4031 = vrot.slane %v4023, %v4030
        %v4033 = vunpack.c.l.s4 1983009808
        %v4034 = vunpack.c.0.s8 %v4033
        %v4035 = vlaneseq
        %v4036 = vshrl.u32 %v4035, 7
        %v4037 = vsub.s32 %v4034, %v4036
        %v4038 = vrot.slane %v4024, %v4037
        %v4039 = vcombine.low %v3984, %v4000
        %v4040 = vcombine.high %v3984, %v4000
        %v4042 = vunpack.c.l.s4 1983009808
        %v4043 = vunpack.c.0.s8 %v4042
        %v4044 = vlaneseq
        %v4045 = vshrl.u32 %v4044, 7
        %v4046 = vsub.s32 %v4043, %v4045
        %v4047 = vrot.slane %v4039, %v4046
        %v4049 = vunpack.c.l.s4 1983009808
        %v4050 = vunpack.c.0.s8 %v4049
        %v4051 = vlaneseq
        %v4052 = vshrl.u32 %v4051, 7
        %v4053 = vsub.s32 %v4050, %v4052
        %v4054 = vrot.slane %v4040, %v4053
        %v4055 = vcombine.low %v4031, %v4047
        %v4056 = vcombine.high %v4031, %v4047
        %v4058 = vunpack.c.l.s4 1934713408
        %v4059 = vunpack.c.0.s8 %v4058
        %v4060 = vlaneseq
        %v4061 = vshrl.u32 %v4060, 7
        %v4062 = vsub.s32 %v4059, %v4061
        %v4063 = vrot.slane %v4055, %v4062
        %v4065 = vunpack.c.l.s4 1934713408
        %v4066 = vunpack.c.0.s8 %v4065
        %v4067 = vlaneseq
        %v4068 = vshrl.u32 %v4067, 7
        %v4069 = vsub.s32 %v4066, %v4068
        %v4070 = vrot.slane %v4056, %v4069
        %v4071 = vcombine.low %v4038, %v4054
        %v4072 = vcombine.high %v4038, %v4054
        %v4074 = vunpack.c.l.s4 1934713408
        %v4075 = vunpack.c.0.s8 %v4074
        %v4076 = vlaneseq
        %v4077 = vshrl.u32 %v4076, 7
        %v4078 = vsub.s32 %v4075, %v4077
        %v4079 = vrot.slane %v4071, %v4078
        %v4081 = vunpack.c.l.s4 1934713408
        %v4082 = vunpack.c.0.s8 %v4081
        %v4083 = vlaneseq
        %v4084 = vshrl.u32 %v4083, 7
        %v4085 = vsub.s32 %v4082, %v4084
        %v4086 = vrot.slane %v4072, %v4085
        %v4087 = vcombine.high %v4063, 0.0
        %v4088 = vcombine.high %v4070, 0.0
        %v4089 = vcombine.high %v4079, 0.0
        %v4090 = vcombine.high %v4086, 0.0
        %v4091 = vcombine.low %v3978, %v3994
        %v4092 = vcombine.high %v3978, %v3994
        %v4094 = vunpack.c.l.s4 1983009808
        %v4095 = vunpack.c.0.s8 %v4094
        %v4096 = vlaneseq
        %v4097 = vshrl.u32 %v4096, 7
        %v4098 = vsub.s32 %v4095, %v4097
        %v4099 = vrot.slane %v4091, %v4098
        %v4101 = vunpack.c.l.s4 1983009808
        %v4102 = vunpack.c.0.s8 %v4101
        %v4103 = vlaneseq
        %v4104 = vshrl.u32 %v4103, 7
        %v4105 = vsub.s32 %v4102, %v4104
        %v4106 = vrot.slane %v4092, %v4105
        %v4107 = vcombine.low %v3986, %v4002
        %v4108 = vcombine.high %v3986, %v4002
        %v4110 = vunpack.c.l.s4 1983009808
        %v4111 = vunpack.c.0.s8 %v4110
        %v4112 = vlaneseq
        %v4113 = vshrl.u32 %v4112, 7
        %v4114 = vsub.s32 %v4111, %v4113
        %v4115 = vrot.slane %v4107, %v4114
        %v4117 = vunpack.c.l.s4 1983009808
        %v4118 = vunpack.c.0.s8 %v4117
        %v4119 = vlaneseq
        %v4120 = vshrl.u32 %v4119, 7
        %v4121 = vsub.s32 %v4118, %v4120
        %v4122 = vrot.slane %v4108, %v4121
        %v4123 = vcombine.low %v4099, %v4115
        %v4124 = vcombine.high %v4099, %v4115
        %v4126 = vunpack.c.l.s4 1934713408
        %v4127 = vunpack.c.0.s8 %v4126
        %v4128 = vlaneseq
        %v4129 = vshrl.u32 %v4128, 7
        %v4130 = vsub.s32 %v4127, %v4129
        %v4131 = vrot.slane %v4123, %v4130
        %v4133 = vunpack.c.l.s4 1934713408
        %v4134 = vunpack.c.0.s8 %v4133
        %v4135 = vlaneseq
        %v4136 = vshrl.u32 %v4135, 7
        %v4137 = vsub.s32 %v4134, %v4136
        %v4138 = vrot.slane %v4124, %v4137
        %v4139 = vcombine.low %v4106, %v4122
        %v4140 = vcombine.high %v4106, %v4122
        %v4142 = vunpack.c.l.s4 1934713408
        %v4143 = vunpack.c.0.s8 %v4142
        %v4144 = vlaneseq
        %v4145 = vshrl.u32 %v4144, 7
        %v4146 = vsub.s32 %v4143, %v4145
        %v4147 = vrot.slane %v4139, %v4146
        %v4149 = vunpack.c.l.s4 1934713408
        %v4150 = vunpack.c.0.s8 %v4149
        %v4151 = vlaneseq
        %v4152 = vshrl.u32 %v4151, 7
        %v4153 = vsub.s32 %v4150, %v4152
        %v4154 = vrot.slane %v4140, %v4153
        %v4155 = vcombine.high %v4131, 0.0
        %v4156 = vcombine.high %v4138, 0.0
        %v4157 = vcombine.high %v4147, 0.0
        %v4158 = vcombine.high %v4154, 0.0
        %v4159 = vcombine.low %v3980, %v3996
        %v4160 = vcombine.high %v3980, %v3996
        %v4162 = vunpack.c.l.s4 1983009808
        %v4163 = vunpack.c.0.s8 %v4162
        %v4164 = vlaneseq
        %v4165 = vshrl.u32 %v4164, 7
        %v4166 = vsub.s32 %v4163, %v4165
        %v4167 = vrot.slane %v4159, %v4166
        %v4169 = vunpack.c.l.s4 1983009808
        %v4170 = vunpack.c.0.s8 %v4169
        %v4171 = vlaneseq
        %v4172 = vshrl.u32 %v4171, 7
        %v4173 = vsub.s32 %v4170, %v4172
        %v4174 = vrot.slane %v4160, %v4173
        %v4175 = vcombine.low %v3988, %v4004
        %v4176 = vcombine.high %v3988, %v4004
        %v4178 = vunpack.c.l.s4 1983009808
        %v4179 = vunpack.c.0.s8 %v4178
        %v4180 = vlaneseq
        %v4181 = vshrl.u32 %v4180, 7
        %v4182 = vsub.s32 %v4179, %v4181
        %v4183 = vrot.slane %v4175, %v4182
        %v4185 = vunpack.c.l.s4 1983009808
        %v4186 = vunpack.c.0.s8 %v4185
        %v4187 = vlaneseq
        %v4188 = vshrl.u32 %v4187, 7
        %v4189 = vsub.s32 %v4186, %v4188
        %v4190 = vrot.slane %v4176, %v4189
        %v4191 = vcombine.low %v4167, %v4183
        %v4192 = vcombine.high %v4167, %v4183
        %v4194 = vunpack.c.l.s4 1934713408
        %v4195 = vunpack.c.0.s8 %v4194
        %v4196 = vlaneseq
        %v4197 = vshrl.u32 %v4196, 7
        %v4198 = vsub.s32 %v4195, %v4197
        %v4199 = vrot.slane %v4191, %v4198
        %v4201 = vunpack.c.l.s4 1934713408
        %v4202 = vunpack.c.0.s8 %v4201
        %v4203 = vlaneseq
        %v4204 = vshrl.u32 %v4203, 7
        %v4205 = vsub.s32 %v4202, %v4204
        %v4206 = vrot.slane %v4192, %v4205
        %v4207 = vcombine.low %v4174, %v4190
        %v4208 = vcombine.high %v4174, %v4190
        %v4210 = vunpack.c.l.s4 1934713408
        %v4211 = vunpack.c.0.s8 %v4210
        %v4212 = vlaneseq
        %v4213 = vshrl.u32 %v4212, 7
        %v4214 = vsub.s32 %v4211, %v4213
        %v4215 = vrot.slane %v4207, %v4214
        %v4217 = vunpack.c.l.s4 1934713408
        %v4218 = vunpack.c.0.s8 %v4217
        %v4219 = vlaneseq
        %v4220 = vshrl.u32 %v4219, 7
        %v4221 = vsub.s32 %v4218, %v4220
        %v4222 = vrot.slane %v4208, %v4221
        %v4223 = vcombine.high %v4199, 0.0
        %v4224 = vcombine.high %v4206, 0.0
        %v4225 = vcombine.high %v4215, 0.0
        %v4226 = vcombine.high %v4222, 0.0
        %v4227 = vcombine.low %v3982, %v3998
        %v4228 = vcombine.high %v3982, %v3998
        %v4230 = vunpack.c.l.s4 1983009808
        %v4231 = vunpack.c.0.s8 %v4230
        %v4232 = vlaneseq
        %v4233 = vshrl.u32 %v4232, 7
        %v4234 = vsub.s32 %v4231, %v4233
        %v4235 = vrot.slane %v4227, %v4234
        %v4237 = vunpack.c.l.s4 1983009808
        %v4238 = vunpack.c.0.s8 %v4237
        %v4239 = vlaneseq
        %v4240 = vshrl.u32 %v4239, 7
        %v4241 = vsub.s32 %v4238, %v4240
        %v4242 = vrot.slane %v4228, %v4241
        %v4243 = vcombine.low %v3990, %v4006
        %v4244 = vcombine.high %v3990, %v4006
        %v4246 = vunpack.c.l.s4 1983009808
        %v4247 = vunpack.c.0.s8 %v4246
        %v4248 = vlaneseq
        %v4249 = vshrl.u32 %v4248, 7
        %v4250 = vsub.s32 %v4247, %v4249
        %v4251 = vrot.slane %v4243, %v4250
        %v4253 = vunpack.c.l.s4 1983009808
        %v4254 = vunpack.c.0.s8 %v4253
        %v4255 = vlaneseq
        %v4256 = vshrl.u32 %v4255, 7
        %v4257 = vsub.s32 %v4254, %v4256
        %v4258 = vrot.slane %v4244, %v4257
        %v4259 = vcombine.low %v4235, %v4251
        %v4260 = vcombine.high %v4235, %v4251
        %v4262 = vunpack.c.l.s4 1934713408
        %v4263 = vunpack.c.0.s8 %v4262
        %v4264 = vlaneseq
        %v4265 = vshrl.u32 %v4264, 7
        %v4266 = vsub.s32 %v4263, %v4265
        %v4267 = vrot.slane %v4259, %v4266
        %v4269 = vunpack.c.l.s4 1934713408
        %v4270 = vunpack.c.0.s8 %v4269
        %v4271 = vlaneseq
        %v4272 = vshrl.u32 %v4271, 7
        %v4273 = vsub.s32 %v4270, %v4272
        %v4274 = vrot.slane %v4260, %v4273
        %v4275 = vcombine.low %v4242, %v4258
        %v4276 = vcombine.high %v4242, %v4258
        %v4278 = vunpack.c.l.s4 1934713408
        %v4279 = vunpack.c.0.s8 %v4278
        %v4280 = vlaneseq
        %v4281 = vshrl.u32 %v4280, 7
        %v4282 = vsub.s32 %v4279, %v4281
        %v4283 = vrot.slane %v4275, %v4282
        %v4285 = vunpack.c.l.s4 1934713408
        %v4286 = vunpack.c.0.s8 %v4285
        %v4287 = vlaneseq
        %v4288 = vshrl.u32 %v4287, 7
        %v4289 = vsub.s32 %v4286, %v4288
        %v4290 = vrot.slane %v4276, %v4289
        %v4291 = vcombine.high %v4267, 0.0
        %v4292 = vcombine.high %v4274, 0.0
        %v4293 = vcombine.high %v4283, 0.0
        %v4294 = vcombine.high %v4290, 0.0
        %4296 = vrot.lane.b32.xlu0 %v4087, 32
        %v4297 = vpop.permute.xlu0 %4296
        %4300 = vrot.lane.b32.xlu0 %v4070, 64
        %v4301 = vpop.permute.xlu0 %4300
        %4304 = vrot.lane.b32.xlu0 %v4088, 96
        %v4305 = vpop.permute.xlu0 %4304
        %4308 = vrot.lane.b32.xlu0 %v4089, 32
        %v4309 = vpop.permute.xlu0 %4308
        %4312 = vrot.lane.b32.xlu0 %v4086, 64
        %v4313 = vpop.permute.xlu0 %4312
        %4316 = vrot.lane.b32.xlu0 %v4090, 96
        %v4317 = vpop.permute.xlu0 %4316
        %4320 = vrot.lane.b32.xlu0 %v4155, 32
        %v4321 = vpop.permute.xlu0 %4320
        %4324 = vrot.lane.b32.xlu0 %v4138, 64
        %v4325 = vpop.permute.xlu0 %4324
        %4328 = vrot.lane.b32.xlu0 %v4156, 96
        %v4329 = vpop.permute.xlu0 %4328
        %4332 = vrot.lane.b32.xlu0 %v4157, 32
        %v4333 = vpop.permute.xlu0 %4332
        %4336 = vrot.lane.b32.xlu0 %v4154, 64
        %v4337 = vpop.permute.xlu0 %4336
        %4340 = vrot.lane.b32.xlu0 %v4158, 96
        %v4341 = vpop.permute.xlu0 %4340
        %4344 = vrot.lane.b32.xlu0 %v4223, 32
        %v4345 = vpop.permute.xlu0 %4344
        %4348 = vrot.lane.b32.xlu0 %v4206, 64
        %v4349 = vpop.permute.xlu0 %4348
        %4352 = vrot.lane.b32.xlu0 %v4224, 96
        %v4353 = vpop.permute.xlu0 %4352
        %4356 = vrot.lane.b32.xlu0 %v4225, 32
        %v4357 = vpop.permute.xlu0 %4356
        %4360 = vrot.lane.b32.xlu0 %v4222, 64
        %v4361 = vpop.permute.xlu0 %4360
        %4364 = vrot.lane.b32.xlu0 %v4226, 96
        %v4365 = vpop.permute.xlu0 %4364
        %4368 = vrot.lane.b32.xlu0 %v4291, 32
        %v4369 = vpop.permute.xlu0 %4368
        %4372 = vrot.lane.b32.xlu0 %v4274, 64
        %v4373 = vpop.permute.xlu0 %4372
        %4376 = vrot.lane.b32.xlu0 %v4292, 96
        %v4377 = vpop.permute.xlu0 %4376
        %4380 = vrot.lane.b32.xlu0 %v4293, 32
        %v4381 = vpop.permute.xlu0 %4380
        %4384 = vrot.lane.b32.xlu0 %v4290, 64
        %v4385 = vpop.permute.xlu0 %4384
        %4388 = vrot.lane.b32.xlu0 %v4294, 96
        %v4389 = vpop.permute.xlu0 %4388
        %v4391 = vsel %vm580, %v4063, %v4297
        %v4392 = vsel %vm582, %v4391, %v4301
        %v4393 = vsel %vm584, %v4392, %v4305
        %v4394 = vsel %vm580, %v4079, %v4309
        %v4395 = vsel %vm582, %v4394, %v4313
        %v4396 = vsel %vm584, %v4395, %v4317
        %v4397 = vsel %vm580, %v4131, %v4321
        %v4398 = vsel %vm582, %v4397, %v4325
        %v4399 = vsel %vm584, %v4398, %v4329
        %v4400 = vsel %vm580, %v4147, %v4333
        %v4401 = vsel %vm582, %v4400, %v4337
        %v4402 = vsel %vm584, %v4401, %v4341
        %v4403 = vsel %vm580, %v4199, %v4345
        %v4404 = vsel %vm582, %v4403, %v4349
        %v4405 = vsel %vm584, %v4404, %v4353
        %v4406 = vsel %vm580, %v4215, %v4357
        %v4407 = vsel %vm582, %v4406, %v4361
        %v4408 = vsel %vm584, %v4407, %v4365
        %v4409 = vsel %vm580, %v4267, %v4369
        %v4410 = vsel %vm582, %v4409, %v4373
        %v4411 = vsel %vm584, %v4410, %v4377
        %v4412 = vsel %vm580, %v4283, %v4381
        %v4413 = vsel %vm582, %v4412, %v4385
        %v4414 = vsel %vm584, %v4413, %v4389
        %4415 = vst [vmem:[#allocation2 + $0x100] sm:$0xf] %v4393
        %4416 = vst [vmem:[#allocation2 + $0x108] sm:$0xf] %v4396
        %4417 = vst [vmem:[#allocation2 + $0x110] sm:$0xf] %v4399
        %4418 = vst [vmem:[#allocation2 + $0x118] sm:$0xf] %v4402
        %4419 = vst [vmem:[#allocation2 + $0x120] sm:$0xf] %v4405
        %4420 = vst [vmem:[#allocation2 + $0x128] sm:$0xf] %v4408
        %4421 = vst [vmem:[#allocation2 + $0x130] sm:$0xf] %v4411
        %4422 = vst [vmem:[#allocation2 + $0x138] sm:$0xf] %v4414
        %v4423 = vld [vmem:[%s1] sm:$0xff]
        %v4424 = vld [vmem:[#allocation2] sm:$0xff]
        %v4425 = vld [vmem:[#allocation2 + $0x8] sm:$0xff]
        %v4426 = vld [vmem:[#allocation2 + $0x10] sm:$0xff]
        %v4427 = vld [vmem:[#allocation2 + $0x18] sm:$0xff]
        %v4428 = vld [vmem:[#allocation2 + $0x20] sm:$0xff]
        %v4429 = vld [vmem:[#allocation2 + $0x28] sm:$0xff]
        %v4430 = vld [vmem:[#allocation2 + $0x30] sm:$0xff]
        %v4431 = vld [vmem:[#allocation2 + $0x38] sm:$0xff]
        %v4432 = vld [vmem:[#allocation2 + $0x40] sm:$0xff]
        %v4433 = vld [vmem:[#allocation2 + $0x48] sm:$0xff]
        %v4434 = vld [vmem:[#allocation2 + $0x50] sm:$0xff]
        %v4435 = vld [vmem:[#allocation2 + $0x58] sm:$0xff]
        %v4436 = vld [vmem:[#allocation2 + $0x60] sm:$0xff]
        %v4437 = vld [vmem:[#allocation2 + $0x68] sm:$0xff]
        %v4438 = vld [vmem:[#allocation2 + $0x70] sm:$0xff]
        %v4439 = vld [vmem:[#allocation2 + $0x78] sm:$0xff]
        %v4440 = vld [vmem:[#allocation2 + $0x80] sm:$0xff]
        %v4441 = vld [vmem:[#allocation2 + $0x88] sm:$0xff]
        %v4442 = vld [vmem:[#allocation2 + $0x90] sm:$0xff]
        %v4443 = vld [vmem:[#allocation2 + $0x98] sm:$0xff]
        %v4444 = vld [vmem:[#allocation2 + $0xa0] sm:$0xff]
        %v4445 = vld [vmem:[#allocation2 + $0xa8] sm:$0xff]
        %v4446 = vld [vmem:[#allocation2 + $0xb0] sm:$0xff]
        %v4447 = vld [vmem:[#allocation2 + $0xb8] sm:$0xff]
        %v4448 = vld [vmem:[#allocation2 + $0xc0] sm:$0xff]
        %v4449 = vld [vmem:[#allocation2 + $0xc8] sm:$0xff]
        %v4450 = vld [vmem:[#allocation2 + $0xd0] sm:$0xff]
        %v4451 = vld [vmem:[#allocation2 + $0xd8] sm:$0xff]
        %v4452 = vld [vmem:[#allocation2 + $0xe0] sm:$0xff]
        %v4453 = vld [vmem:[#allocation2 + $0xe8] sm:$0xff]
        %v4454 = vld [vmem:[#allocation2 + $0xf0] sm:$0xff]
        %v4455 = vld [vmem:[#allocation2 + $0xf8] sm:$0xff]
        %v4456 = vld [vmem:[#allocation2 + $0x100] sm:$0xf]
        %v4457 = vld [vmem:[#allocation2 + $0x108] sm:$0xf]
        %v4458 = vld [vmem:[#allocation2 + $0x110] sm:$0xf]
        %v4459 = vld [vmem:[#allocation2 + $0x118] sm:$0xf]
        %v4460 = vld [vmem:[#allocation2 + $0x120] sm:$0xf]
        %v4461 = vld [vmem:[#allocation2 + $0x128] sm:$0xf]
        %v4462 = vld [vmem:[#allocation2 + $0x130] sm:$0xf]
        %v4463 = vld [vmem:[#allocation2 + $0x138] sm:$0xf]
        %vm4464 = vcmask 293888
        %v4466 = vsel %vm4464, %v4423, 0
        %vm4468 = vcmask 1043456
        %v4470 = vsel %vm4468, %v4456, 0
        %v4473 = vsel %vm4468, %v4457, 0
        %v4476 = vsel %vm4468, %v4458, 0
        %v4479 = vsel %vm4468, %v4459, 0
        %v4482 = vsel %vm4468, %v4460, 0
        %v4485 = vsel %vm4468, %v4461, 0
        %v4488 = vsel %vm4468, %v4462, 0
        %v4491 = vsel %vm4468, %v4463, 0
        %4493 = vmatprep.subr.mxu0 0.0
        %4494 = vmatpush1.msra.mxu0 0.0
        %4495 = vmatprep.subr.mxu0 0.0
        %4496 = vmatpush1.msra.mxu0 0.0
        %4497 = vmatprep.subr.mxu0 0.0
        %4498 = vmatpush1.msra.mxu0 0.0
        %4499 = vmatprep.subr.mxu0 0.0
        %4500 = vmatpush1.msra.mxu0 0.0
        %4501 = vmatprep.subr.mxu0 0.0
        %4502 = vmatpush1.msra.mxu0 0.0
        %4503 = vmatprep.subr.mxu0 0.0
        %4504 = vmatpush1.msra.mxu0 0.0
        %4505 = vmatprep.subr.mxu0 0.0
        %4506 = vmatpush1.msra.mxu0 0.0
        %4507 = vmatprep.subr.mxu0 0.0
        %4508 = vmatpush1.msra.mxu0 0.0
        %4509 = vmatprep.subr.mxu0 0.0
        %4510 = vmatpush1.msra.mxu0 0.0
        %4511 = vmatprep.subr.mxu0 0.0
        %4512 = vmatpush1.msra.mxu0 0.0
        %4513 = vmatprep.subr.mxu0 0.0
        %4514 = vmatpush1.msra.mxu0 0.0
        %4515 = vmatprep.subr.mxu0 %v4473
        %4516 = vmatpush1.msra.mxu0 %v4470
        %4517 = vmatprep.subr.mxu0 %v4449
        %4518 = vmatpush1.msra.mxu0 %v4448
        %4519 = vmatprep.subr.mxu0 %v4441
        %4520 = vmatpush1.msra.mxu0 %v4440
        %4521 = vmatprep.subr.mxu0 %v4433
        %4522 = vmatpush1.msra.mxu0 %v4432
        %4523 = vmatprep.subr.mxu0 %v4425
        %4524 = vmatpush1.msra.mxu0 %v4424
        %4525 = vmatprep.subr.mxu0 0.0
        %4526 = vmatpush2.msra.mxu0 0.0
        %4527 = vmatprep.subr.mxu0 0.0
        %4528 = vmatpush2.msra.mxu0 0.0
        %4529 = vmatprep.subr.mxu0 0.0
        %4530 = vmatpush2.msra.mxu0 0.0
        %4531 = vmatprep.subr.mxu0 0.0
        %4532 = vmatpush2.msra.mxu0 0.0
        %4533 = vmatprep.subr.mxu0 0.0
        %4534 = vmatpush2.msra.mxu0 0.0
        %4535 = vmatprep.subr.mxu0 0.0
        %4536 = vmatpush2.msra.mxu0 0.0
        %4537 = vmatprep.subr.mxu0 0.0
        %4538 = vmatpush2.msra.mxu0 0.0
        %4539 = vmatprep.subr.mxu0 0.0
        %4540 = vmatpush2.msra.mxu0 0.0
        %4541 = vmatprep.subr.mxu0 0.0
        %4542 = vmatpush2.msra.mxu0 0.0
        %4543 = vmatprep.subr.mxu0 0.0
        %4544 = vmatpush2.msra.mxu0 0.0
        %4545 = vmatprep.subr.mxu0 0.0
        %4546 = vmatpush2.msra.mxu0 0.0
        %4547 = vmatprep.subr.mxu0 0.0
        %4548 = vmatpush2.msra.mxu0 0.0
        %4549 = vmatprep.subr.mxu0 0.0
        %4550 = vmatpush2.msra.mxu0 0.0
        %4551 = vmatprep.subr.mxu0 0.0
        %4552 = vmatpush2.msra.mxu0 0.0
        %4553 = vmatprep.subr.mxu0 0.0
        %4554 = vmatpush2.msra.mxu0 0.0
        %4555 = vmatprep.subr.mxu0 0.0
        %4556 = vmatpush2.msra.mxu0 0.0
        %4557 = vmatprep.mubr.f32.mxu0 0.0
        %4558 = vmatmul.mubr.f32.gmra.mxu0 %v4466
        %v4559 = vpop.f32.mrf.mxu0
        %v4560 = vadd.f32 0.0, %v4559
        %v4561 = vpop.f32.mrf.mxu0
        %v4562 = vadd.f32 0.0, %v4561
        %4563 = vdwg.mxu0
        %4564 = vmatprep.subr.mxu0 0.0
        %4565 = vmatpush1.msra.mxu0 0.0
        %4566 = vmatprep.subr.mxu0 0.0
        %4567 = vmatpush1.msra.mxu0 0.0
        %4568 = vmatprep.subr.mxu0 0.0
        %4569 = vmatpush1.msra.mxu0 0.0
        %4570 = vmatprep.subr.mxu0 0.0
        %4571 = vmatpush1.msra.mxu0 0.0
        %4572 = vmatprep.subr.mxu0 0.0
        %4573 = vmatpush1.msra.mxu0 0.0
        %4574 = vmatprep.subr.mxu0 0.0
        %4575 = vmatpush1.msra.mxu0 0.0
        %4576 = vmatprep.subr.mxu0 0.0
        %4577 = vmatpush1.msra.mxu0 0.0
        %4578 = vmatprep.subr.mxu0 0.0
        %4579 = vmatpush1.msra.mxu0 0.0
        %4580 = vmatprep.subr.mxu0 0.0
        %4581 = vmatpush1.msra.mxu0 0.0
        %4582 = vmatprep.subr.mxu0 0.0
        %4583 = vmatpush1.msra.mxu0 0.0
        %4584 = vmatprep.subr.mxu0 0.0
        %4585 = vmatpush1.msra.mxu0 0.0
        %4586 = vmatprep.subr.mxu0 %v4479
        %4587 = vmatpush1.msra.mxu0 %v4476
        %4588 = vmatprep.subr.mxu0 %v4451
        %4589 = vmatpush1.msra.mxu0 %v4450
        %4590 = vmatprep.subr.mxu0 %v4443
        %4591 = vmatpush1.msra.mxu0 %v4442
        %4592 = vmatprep.subr.mxu0 %v4435
        %4593 = vmatpush1.msra.mxu0 %v4434
        %4594 = vmatprep.subr.mxu0 %v4427
        %4595 = vmatpush1.msra.mxu0 %v4426
        %4596 = vmatprep.subr.mxu0 0.0
        %4597 = vmatpush2.msra.mxu0 0.0
        %4598 = vmatprep.subr.mxu0 0.0
        %4599 = vmatpush2.msra.mxu0 0.0
        %4600 = vmatprep.subr.mxu0 0.0
        %4601 = vmatpush2.msra.mxu0 0.0
        %4602 = vmatprep.subr.mxu0 0.0
        %4603 = vmatpush2.msra.mxu0 0.0
        %4604 = vmatprep.subr.mxu0 0.0
        %4605 = vmatpush2.msra.mxu0 0.0
        %4606 = vmatprep.subr.mxu0 0.0
        %4607 = vmatpush2.msra.mxu0 0.0
        %4608 = vmatprep.subr.mxu0 0.0
        %4609 = vmatpush2.msra.mxu0 0.0
        %4610 = vmatprep.subr.mxu0 0.0
        %4611 = vmatpush2.msra.mxu0 0.0
        %4612 = vmatprep.subr.mxu0 0.0
        %4613 = vmatpush2.msra.mxu0 0.0
        %4614 = vmatprep.subr.mxu0 0.0
        %4615 = vmatpush2.msra.mxu0 0.0
        %4616 = vmatprep.subr.mxu0 0.0
        %4617 = vmatpush2.msra.mxu0 0.0
        %4618 = vmatprep.subr.mxu0 0.0
        %4619 = vmatpush2.msra.mxu0 0.0
        %4620 = vmatprep.subr.mxu0 0.0
        %4621 = vmatpush2.msra.mxu0 0.0
        %4622 = vmatprep.subr.mxu0 0.0
        %4623 = vmatpush2.msra.mxu0 0.0
        %4624 = vmatprep.subr.mxu0 0.0
        %4625 = vmatpush2.msra.mxu0 0.0
        %4626 = vmatprep.subr.mxu0 0.0
        %4627 = vmatpush2.msra.mxu0 0.0
        %4628 = vmatprep.mubr.f32.mxu0 0.0
        %4629 = vmatmul.mubr.f32.gmra.mxu0 %v4466
        %v4630 = vpop.f32.mrf.mxu0
        %v4631 = vadd.f32 0.0, %v4630
        %v4632 = vpop.f32.mrf.mxu0
        %v4633 = vadd.f32 0.0, %v4632
        %4634 = vdwg.mxu0
        %4635 = vmatprep.subr.mxu0 0.0
        %4636 = vmatpush1.msra.mxu0 0.0
        %4637 = vmatprep.subr.mxu0 0.0
        %4638 = vmatpush1.msra.mxu0 0.0
        %4639 = vmatprep.subr.mxu0 0.0
        %4640 = vmatpush1.msra.mxu0 0.0
        %4641 = vmatprep.subr.mxu0 0.0
        %4642 = vmatpush1.msra.mxu0 0.0
        %4643 = vmatprep.subr.mxu0 0.0
        %4644 = vmatpush1.msra.mxu0 0.0
        %4645 = vmatprep.subr.mxu0 0.0
        %4646 = vmatpush1.msra.mxu0 0.0
        %4647 = vmatprep.subr.mxu0 0.0
        %4648 = vmatpush1.msra.mxu0 0.0
        %4649 = vmatprep.subr.mxu0 0.0
        %4650 = vmatpush1.msra.mxu0 0.0
        %4651 = vmatprep.subr.mxu0 0.0
        %4652 = vmatpush1.msra.mxu0 0.0
        %4653 = vmatprep.subr.mxu0 0.0
        %4654 = vmatpush1.msra.mxu0 0.0
        %4655 = vmatprep.subr.mxu0 0.0
        %4656 = vmatpush1.msra.mxu0 0.0
        %4657 = vmatprep.subr.mxu0 %v4485
        %4658 = vmatpush1.msra.mxu0 %v4482
        %4659 = vmatprep.subr.mxu0 %v4453
        %4660 = vmatpush1.msra.mxu0 %v4452
        %4661 = vmatprep.subr.mxu0 %v4445
        %4662 = vmatpush1.msra.mxu0 %v4444
        %4663 = vmatprep.subr.mxu0 %v4437
        %4664 = vmatpush1.msra.mxu0 %v4436
        %4665 = vmatprep.subr.mxu0 %v4429
        %4666 = vmatpush1.msra.mxu0 %v4428
        %4667 = vmatprep.subr.mxu0 0.0
        %4668 = vmatpush2.msra.mxu0 0.0
        %4669 = vmatprep.subr.mxu0 0.0
        %4670 = vmatpush2.msra.mxu0 0.0
        %4671 = vmatprep.subr.mxu0 0.0
        %4672 = vmatpush2.msra.mxu0 0.0
        %4673 = vmatprep.subr.mxu0 0.0
        %4674 = vmatpush2.msra.mxu0 0.0
        %4675 = vmatprep.subr.mxu0 0.0
        %4676 = vmatpush2.msra.mxu0 0.0
        %4677 = vmatprep.subr.mxu0 0.0
        %4678 = vmatpush2.msra.mxu0 0.0
        %4679 = vmatprep.subr.mxu0 0.0
        %4680 = vmatpush2.msra.mxu0 0.0
        %4681 = vmatprep.subr.mxu0 0.0
        %4682 = vmatpush2.msra.mxu0 0.0
        %4683 = vmatprep.subr.mxu0 0.0
        %4684 = vmatpush2.msra.mxu0 0.0
        %4685 = vmatprep.subr.mxu0 0.0
        %4686 = vmatpush2.msra.mxu0 0.0
        %4687 = vmatprep.subr.mxu0 0.0
        %4688 = vmatpush2.msra.mxu0 0.0
        %4689 = vmatprep.subr.mxu0 0.0
        %4690 = vmatpush2.msra.mxu0 0.0
        %4691 = vmatprep.subr.mxu0 0.0
        %4692 = vmatpush2.msra.mxu0 0.0
        %4693 = vmatprep.subr.mxu0 0.0
        %4694 = vmatpush2.msra.mxu0 0.0
        %4695 = vmatprep.subr.mxu0 0.0
        %4696 = vmatpush2.msra.mxu0 0.0
        %4697 = vmatprep.subr.mxu0 0.0
        %4698 = vmatpush2.msra.mxu0 0.0
        %4699 = vmatprep.mubr.f32.mxu0 0.0
        %4700 = vmatmul.mubr.f32.gmra.mxu0 %v4466
        %v4701 = vpop.f32.mrf.mxu0
        %v4702 = vadd.f32 0.0, %v4701
        %v4703 = vpop.f32.mrf.mxu0
        %v4704 = vadd.f32 0.0, %v4703
        %4705 = vdwg.mxu0
        %4706 = vmatprep.subr.mxu0 0.0
        %4707 = vmatpush1.msra.mxu0 0.0
        %4708 = vmatprep.subr.mxu0 0.0
        %4709 = vmatpush1.msra.mxu0 0.0
        %4710 = vmatprep.subr.mxu0 0.0
        %4711 = vmatpush1.msra.mxu0 0.0
        %4712 = vmatprep.subr.mxu0 0.0
        %4713 = vmatpush1.msra.mxu0 0.0
        %4714 = vmatprep.subr.mxu0 0.0
        %4715 = vmatpush1.msra.mxu0 0.0
        %4716 = vmatprep.subr.mxu0 0.0
        %4717 = vmatpush1.msra.mxu0 0.0
        %4718 = vmatprep.subr.mxu0 0.0
        %4719 = vmatpush1.msra.mxu0 0.0
        %4720 = vmatprep.subr.mxu0 0.0
        %4721 = vmatpush1.msra.mxu0 0.0
        %4722 = vmatprep.subr.mxu0 0.0
        %4723 = vmatpush1.msra.mxu0 0.0
        %4724 = vmatprep.subr.mxu0 0.0
        %4725 = vmatpush1.msra.mxu0 0.0
        %4726 = vmatprep.subr.mxu0 0.0
        %4727 = vmatpush1.msra.mxu0 0.0
        %4728 = vmatprep.subr.mxu0 %v4491
        %4729 = vmatpush1.msra.mxu0 %v4488
        %4730 = vmatprep.subr.mxu0 %v4455
        %4731 = vmatpush1.msra.mxu0 %v4454
        %4732 = vmatprep.subr.mxu0 %v4447
        %4733 = vmatpush1.msra.mxu0 %v4446
        %4734 = vmatprep.subr.mxu0 %v4439
        %4735 = vmatpush1.msra.mxu0 %v4438
        %4736 = vmatprep.subr.mxu0 %v4431
        %4737 = vmatpush1.msra.mxu0 %v4430
        %4738 = vmatprep.subr.mxu0 0.0
        %4739 = vmatpush2.msra.mxu0 0.0
        %4740 = vmatprep.subr.mxu0 0.0
        %4741 = vmatpush2.msra.mxu0 0.0
        %4742 = vmatprep.subr.mxu0 0.0
        %4743 = vmatpush2.msra.mxu0 0.0
        %4744 = vmatprep.subr.mxu0 0.0
        %4745 = vmatpush2.msra.mxu0 0.0
        %4746 = vmatprep.subr.mxu0 0.0
        %4747 = vmatpush2.msra.mxu0 0.0
        %4748 = vmatprep.subr.mxu0 0.0
        %4749 = vmatpush2.msra.mxu0 0.0
        %4750 = vmatprep.subr.mxu0 0.0
        %4751 = vmatpush2.msra.mxu0 0.0
        %4752 = vmatprep.subr.mxu0 0.0
        %4753 = vmatpush2.msra.mxu0 0.0
        %4754 = vmatprep.subr.mxu0 0.0
        %4755 = vmatpush2.msra.mxu0 0.0
        %4756 = vmatprep.subr.mxu0 0.0
        %4757 = vmatpush2.msra.mxu0 0.0
        %4758 = vmatprep.subr.mxu0 0.0
        %4759 = vmatpush2.msra.mxu0 0.0
        %4760 = vmatprep.subr.mxu0 0.0
        %4761 = vmatpush2.msra.mxu0 0.0
        %4762 = vmatprep.subr.mxu0 0.0
        %4763 = vmatpush2.msra.mxu0 0.0
        %4764 = vmatprep.subr.mxu0 0.0
        %4765 = vmatpush2.msra.mxu0 0.0
        %4766 = vmatprep.subr.mxu0 0.0
        %4767 = vmatpush2.msra.mxu0 0.0
        %4768 = vmatprep.subr.mxu0 0.0
        %4769 = vmatpush2.msra.mxu0 0.0
        %4770 = vmatprep.mubr.f32.mxu0 0.0
        %4771 = vmatmul.mubr.f32.gmra.mxu0 %v4466
        %v4772 = vpop.f32.mrf.mxu0
        %v4773 = vadd.f32 0.0, %v4772
        %v4774 = vpop.f32.mrf.mxu0
        %v4775 = vadd.f32 0.0, %v4774
        %4776 = vdwg.mxu0
        %v4777 = vadd.f32 %v4560, %v4562
        %v4778 = vadd.f32 %v4777, %v4631
        %v4779 = vadd.f32 %v4778, %v4633
        %v4780 = vadd.f32 %v4779, %v4702
        %v4781 = vadd.f32 %v4780, %v4704
        %v4782 = vadd.f32 %v4781, %v4773
        %v4783 = vadd.f32 %v4782, %v4775
        %4784 = vadd.xlane.f32.xlu0 %v4783
        %v4785 = vpop.xlane.xlu0 %4784
        %v4786 = vmul.f32 %v4785, 0.0009765625
        %v4787 = vmul.f32 %v4560, %v4560
        %v4788 = vmul.f32 %v4562, %v4562
        %v4789 = vmul.f32 %v4631, %v4631
        %v4790 = vmul.f32 %v4633, %v4633
        %v4791 = vmul.f32 %v4702, %v4702
        %v4792 = vmul.f32 %v4704, %v4704
        %v4793 = vmul.f32 %v4773, %v4773
        %v4794 = vmul.f32 %v4775, %v4775
        %v4795 = vadd.f32 %v4787, %v4788
        %v4796 = vadd.f32 %v4795, %v4789
        %v4797 = vadd.f32 %v4796, %v4790
        %v4798 = vadd.f32 %v4797, %v4791
        %v4799 = vadd.f32 %v4798, %v4792
        %v4800 = vadd.f32 %v4799, %v4793
        %v4801 = vadd.f32 %v4800, %v4794
        %4802 = vadd.xlane.f32.xlu0 %v4801
        %v4803 = vpop.xlane.xlu0 %4802
        %v4804 = vmul.f32 %v4803, 0.0009765625
        %v4805 = vmul.f32 %v4786, %v4786
        %v4806 = vsub.f32 %v4804, %v4805
        %v4807 = vld [vmem:[%s2] sm:$0xff]
        %v4808 = vadd.f32 %v4806, 1e-05
        %v4809 = vrsqrt.pop %v4808
        %v4810 = vmul.f32 %v4807, %v4809
        %v4811 = vld [vmem:[%s3] sm:$0xff]
        %v4812 = vmul.f32 %v4786, %v4810
        %v4813 = vsub.f32 %v4811, %v4812
        %4815 = vset.pattern.permute.xlu0 0
        %4816 = vperm.xlu0 %4815, %v4810
        %v4817 = vpop.permute.xlu0 %4816
        %v4819 = vmul.f32 %v4560, %v4817
        %v4820 = vmul.f32 %v4562, %v4817
        %v4821 = vmul.f32 %v4631, %v4817
        %v4822 = vmul.f32 %v4633, %v4817
        %v4823 = vmul.f32 %v4702, %v4817
        %v4824 = vmul.f32 %v4704, %v4817
        %v4825 = vmul.f32 %v4773, %v4817
        %v4826 = vmul.f32 %v4775, %v4817
        %4828 = vset.pattern.permute.xlu0 0
        %4829 = vperm.xlu0 %4828, %v4813
        %v4830 = vpop.permute.xlu0 %4829
        %v4832 = vadd.f32 %v4819, %v4830
        %v4833 = vadd.f32 %v4820, %v4830
        %v4834 = vadd.f32 %v4821, %v4830
        %v4835 = vadd.f32 %v4822, %v4830
        %v4836 = vadd.f32 %v4823, %v4830
        %v4837 = vadd.f32 %v4824, %v4830
        %v4838 = vadd.f32 %v4825, %v4830
        %v4839 = vadd.f32 %v4826, %v4830
        %4840 = vst [vmem:[%s190] sm:$0xff] %v4832
        %4841 = vst [vmem:[%s190 + $0x8] sm:$0xff] %v4833
        %4842 = vst [vmem:[%s190 + $0x10] sm:$0xff] %v4834
        %4843 = vst [vmem:[%s190 + $0x18] sm:$0xff] %v4835
        %4844 = vst [vmem:[%s190 + $0x20] sm:$0xff] %v4836
        %4845 = vst [vmem:[%s190 + $0x28] sm:$0xff] %v4837
        %4846 = vst [vmem:[%s190 + $0x30] sm:$0xff] %v4838
        %4847 = vst [vmem:[%s190 + $0x38] sm:$0xff] %v4839
        %s4848 = sand.u32 %s115, 1
        %s4849 = scalar_lea.sflag [#allocation4], %s4848
        %s4850 = sand.u32 %s115, 1
        %s4851 = smul.addr %s4850, 64
        %s4852 = scalar_lea.vmem [#allocation3], %s4851
        // Predicated region
        $region37: #{tpu_custom_call.1} parent=35 // pred_check
          %p4853 = pneg %p125
        $region38: #{tpu_custom_call.1} parent=35 // pred_check_branch
          %4855 = sbr.rel (%p4853) target = $region40
        $region39: #{tpu_custom_call.1} parent=35 // pred_region
          %s4857 = ssub.s32 1024, 1024
          %4858 = vsyncadd %s4849, %s4857
          %s4859 = smul.addr %s18, 8
          %s4860 = smul.addr %s4859, 128
          %s4861 = scalar_lea.hbm %s4, %s4860
          %s4863 = sshll.u32 %s4852, 4
          %s4864 = int_to_ptr.vmem [resolvable:$true] %s4863
          %4866 = dma.vmem_to_hbm [thread:$0]  %s4864, 1024, %s4861, %s4849
        $region40: #{tpu_custom_call.1} parent=35 // pred_fallthru
          _
      $region36: #{tpu_custom_call.1} parent=5 // pred_fallthru
        _
      %p4867 = scmp.le.s32.totalorder 2, %s13
      // Predicated region
      $region41: #{tpu_custom_call.1} parent=5 // pred_check
        %p4868 = pneg %p4867
      $region42: #{tpu_custom_call.1} parent=5 // pred_check_branch
        %4870 = sbr.rel (%p4868) target = $region44
      $region43: #{tpu_custom_call.1} parent=5 // pred_region
        %s4871 = ssub.s32 %s13, 2
        // Predicated region
        $region45: #{tpu_custom_call.1} parent=43 // pred_check
          %p4872 = pneg %p131
        $region46: #{tpu_custom_call.1} parent=43 // pred_check_branch
          %4874 = sbr.rel (%p4872) target = $region48
        $region47: #{tpu_custom_call.1} parent=43 // pred_region
          %s4875 = sand.u32 %s116, 1
          %s4876 = scalar_lea.sflag [#allocation4], %s4875
          %s4877 = sand.u32 %s116, 1
          %s4878 = smul.addr %s4877, 64
          %s4879 = scalar_lea.vmem [#allocation3], %s4878
          %4880 = dma.done %s4876, 1024
        $region48: #{tpu_custom_call.1} parent=43 // pred_fallthru
          _
      $region44: #{tpu_custom_call.1} parent=5 // pred_fallthru
        _
    $region6: #{tpu_custom_call.1} parent=1 // loop_footer
      %s17 = sadd.s32 1, %s13
    $region7: #{tpu_custom_call.1} parent=1 // loop_footer_branch
      %12 = sbr.rel target = $region3
    $region8: #{tpu_custom_call.1} parent=1 // loop_exit
      _
    %4881 = vsyncpa [#allocation4], 1
    %s4882 = scalar_lea.sflag [#allocation4], 1
    %4883 = vsyncpa %s4882, 1

</llo_original>
